<compile_context>
chip_gen: v7x
topology: tpu7x:2x2x1
jax: 0.10.0
libtpu: 0.0.40
codegen_flags: <defaults>
</compile_context>

<pallas_src>
import functools

import jax
import jax.numpy as jnp
from jax import lax
from jax.experimental import pallas as pl
from jax.experimental.pallas import tpu as pltpu

N_FEATURES = 784
N_FEAT_PAD = 896            # 7 * 128, zero-padded contraction dim for layer 0
H0, H1, H2 = 1024, 512, 256
N_OUT = 1


def _round_up(x, m):
    return ((x + m - 1) // m) * m


def _epilogue_dtype():
    """bf16 bias/LeakyReLU epilogue on chips with a bf16 VPU (v6e/v7x); f32 otherwise."""
    kind = jax.devices()[0].device_kind.lower()
    return jnp.bfloat16 if any(t in kind for t in ("v6", "v7", "7x")) else jnp.float32


def discriminator_kernel(
    x_ref,                       # (TB, 896)   bf16  (features zero-padded 784->896)
    w0_ref, b0_ref,              # (896, 1024) bf16, (1, 1024) f32
    w1_ref, b1_ref,              # (1024, 512) bf16, (1, 512)  f32
    w2_ref, b2_ref,              # (512, 256)  bf16, (1, 256)  f32
    w3_ref,                      # (1, 256)    bf16  (row vector of the 256->1 layer)
    b3_ref,                      # (1, 1)      f32   in SMEM
    o_ref,                       # (1, TB)     f32   lane-dense output row
    *,
    ep_dtype,
):
    def layer(x_bf16, w_ref, b_ref):
        # MXU matmul, f32 accumulation; epilogue (bias + LeakyReLU 0.2) in ep_dtype.
        acc = jnp.dot(x_bf16, w_ref[...], preferred_element_type=jnp.float32)
        h = acc.astype(ep_dtype) + b_ref[...].astype(ep_dtype)
        h = jnp.where(h > 0, h, 0.2 * h)
        return h.astype(jnp.bfloat16)      # next matmul always consumes bf16

    # hidden0/1/2: Linear + LeakyReLU(0.2)   (Dropout(0.3) is identity at eval)
    h = layer(x_ref[...], w0_ref, b0_ref)
    h = layer(h, w1_ref, b1_ref)
    h = layer(h, w2_ref, b2_ref)

    # out: Linear(256 -> 1) + Sigmoid, computed as (1,256) . (TB,256)^T -> (1,TB) so the
    # result is already a lane-dense row (unmasked stores, wide writeback DMA).  The extra
    # ceil(TB/256) MXU passes are ~2% of the total MXU work of the three hidden layers.
    logits = lax.dot_general(
        w3_ref[...], h, (((1,), (1,)), ((), ())), preferred_element_type=jnp.float32
    )                                                       # (1, TB) f32
    o_ref[...] = jax.nn.sigmoid(logits + b3_ref[0, 0])


def discriminator_forward(x, params, *, max_tb=1024, ep_dtype=None):
    """x: [B, 784] float32 -> [B, 1] float32."""
    B = x.shape[0]
    w0, b0, w1, b1, w2, b2, w3_row, b3 = params
    if ep_dtype is None:
        ep_dtype = _epilogue_dtype()

    # Tile selection: amortize per-grid-step overhead (big TB), minimize padding waste
    # (TB derived from cdiv(B, num_tiles)), keep bf16 sublane packing (multiple of 16),
    # and keep an even tile count when >1 so v7x's two TensorCores stay balanced.
    num_tiles = pl.cdiv(B, max_tb)
    if num_tiles > 1 and num_tiles % 2 == 1:
        num_tiles += 1
    TB = _round_up(pl.cdiv(B, num_tiles), 16)
    Bp = num_tiles * TB

    # Zero-pad batch to Bp and features to 896 (7*128); zeros contribute nothing.
    xp = jnp.pad(x, ((0, Bp - B), (0, N_FEAT_PAD - x.shape[1]))).astype(jnp.bfloat16)

    # Weights/biases: constant index_map -> VMEM-resident across all grid steps.
    resident = lambda shape: pl.BlockSpec(shape, lambda i: (0, 0))

    out = pl.pallas_call(
        functools.partial(discriminator_kernel, ep_dtype=ep_dtype),
        out_shape=jax.ShapeDtypeStruct((num_tiles, TB), jnp.float32),
        grid_spec=pltpu.PrefetchScalarGridSpec(
            num_scalar_prefetch=0,
            grid=(num_tiles,),
            in_specs=[
                pl.BlockSpec((TB, N_FEAT_PAD), lambda i: (i, 0)),   # x: tiled over batch
                resident((N_FEAT_PAD, H0)), resident((1, H0)),
                resident((H0, H1)), resident((1, H1)),
                resident((H1, H2)), resident((1, H2)),
                resident((1, H2)),                                   # w3 row vector
                pl.BlockSpec(memory_space=pltpu.MemorySpace.SMEM),   # b3 scalar
            ],
            out_specs=pl.BlockSpec((1, TB), lambda i: (i, 0)),       # lane-dense output row
        ),
        compiler_params=pltpu.CompilerParams(
            dimension_semantics=("parallel",),   # batch tiles are independent (v7x: 2 TCs)
            vmem_limit_bytes=32 << 20,           # actual footprint < ~20 MiB at TB=1024
        ),
    )(xp, w0, b0, w1, b1, w2, b2, w3_row, b3)

    # (num_tiles, TB) -> (Bp,) -> drop padded rows -> (B, 1)
    return out.reshape(-1)[:B].reshape(B, N_OUT)


def init_params(key):
    """Deterministic init matching torch.nn.Linear's U(-1/sqrt(fan_in), 1/sqrt(fan_in)),
    laid out for the kernel: bf16 MXU weights (w0 zero-padded to K=896), f32 biases,
    w3 as a bf16 [1, 256] row, b3 as a (1,1) f32 SMEM scalar."""
    dims = [(N_FEATURES, H0), (H0, H1), (H1, H2), (H2, N_OUT)]
    raw = []
    for fan_in, fan_out in dims:
        key, kw, kb = jax.random.split(key, 3)
        bound = 1.0 / (fan_in ** 0.5)
        w = jax.random.uniform(kw, (fan_in, fan_out), jnp.float32, -bound, bound)
        b = jax.random.uniform(kb, (1, fan_out), jnp.float32, -bound, bound)
        raw.append((w, b))
    (w0, b0), (w1, b1), (w2, b2), (w3, b3) = raw
    w0p = jnp.zeros((N_FEAT_PAD, H0), jnp.float32).at[:N_FEATURES].set(w0)
    return (
        w0p.astype(jnp.bfloat16), b0,
        w1.astype(jnp.bfloat16), b1,
        w2.astype(jnp.bfloat16), b2,
        w3.T.astype(jnp.bfloat16),          # [1, 256] row for the lane-dense out layer
        b3.reshape(1, 1).astype(jnp.float32),
    )


def reference_forward(x, params, ep_dtype):
    """Pure-JAX reference mirroring the kernel's dtype handling."""
    w0, b0, w1, b1, w2, b2, w3_row, b3 = params
    h = jnp.pad(x, ((0, 0), (0, N_FEAT_PAD - x.shape[1]))).astype(jnp.bfloat16)
    for w, b in ((w0, b0), (w1, b1), (w2, b2)):
        a = jnp.dot(h, w, preferred_element_type=jnp.float32)
        a = a.astype(ep_dtype) + b.astype(ep_dtype)
        a = jnp.where(a > 0, a, 0.2 * a)
        h = a.astype(jnp.bfloat16)
    logits = jnp.dot(h, w3_row.T, preferred_element_type=jnp.float32) + b3[0, 0]
    return jax.nn.sigmoid(logits)


if __name__ == "__main__":
    key = jax.random.PRNGKey(0)
    kx, kp = jax.random.split(key)

    B = 8
    x = jax.random.normal(kx, (B, N_FEATURES), jnp.float32)
    params = init_params(kp)

    out = discriminator_forward(x, params)
    out = jax.block_until_ready(out)

    ref = reference_forward(x, params, _epilogue_dtype())
    assert out.shape == (B, N_OUT)
    # bf16 matmul path: only accumulation-order / rounding differences vs the XLA
    # reference remain; 2e-3 after the sigmoid is a safe but meaningful bound.
    assert jnp.allclose(out, ref, atol=2e-3, rtol=2e-3), "mismatch vs pure-JAX reference"

    print("KERNEL_OK")
</pallas_src>

<mosaic_0001>
module attributes {stable_mosaic.version = 11 : i64} {
  func.func @discriminator_kernel(%arg0: i32, %arg1: memref<16x896xbf16, #tpu.memory_space<vmem>>, %arg2: memref<896x1024xbf16, #tpu.memory_space<vmem>>, %arg3: memref<1x1024xf32, #tpu.memory_space<vmem>>, %arg4: memref<1024x512xbf16, #tpu.memory_space<vmem>>, %arg5: memref<1x512xf32, #tpu.memory_space<vmem>>, %arg6: memref<512x256xbf16, #tpu.memory_space<vmem>>, %arg7: memref<1x256xf32, #tpu.memory_space<vmem>>, %arg8: memref<1x256xbf16, #tpu.memory_space<vmem>>, %arg9: memref<1x1xf32, #tpu.memory_space<smem>>, %arg10: memref<1x16xf32, #tpu.memory_space<vmem>>) attributes {dimension_semantics = [#tpu.dimension_semantics<parallel>], iteration_bounds = array<i64: 1>, scalar_prefetch = 0 : i64, scratch_operands = 0 : i64, tpu.core_type = #tpu.core_type<tc>, window_params = [{transform_indices = @transform_0, window_bounds = array<i64: 16, 896>}, {pipeline_mode = #tpu.pipeline_mode<synchronous>, transform_indices = @transform_1, window_bounds = array<i64: 896, 1024>}, {pipeline_mode = #tpu.pipeline_mode<synchronous>, transform_indices = @transform_2, window_bounds = array<i64: 1, 1024>}, {pipeline_mode = #tpu.pipeline_mode<synchronous>, transform_indices = @transform_3, window_bounds = array<i64: 1024, 512>}, {pipeline_mode = #tpu.pipeline_mode<synchronous>, transform_indices = @transform_4, window_bounds = array<i64: 1, 512>}, {pipeline_mode = #tpu.pipeline_mode<synchronous>, transform_indices = @transform_5, window_bounds = array<i64: 512, 256>}, {pipeline_mode = #tpu.pipeline_mode<synchronous>, transform_indices = @transform_6, window_bounds = array<i64: 1, 256>}, {pipeline_mode = #tpu.pipeline_mode<synchronous>, transform_indices = @transform_7, window_bounds = array<i64: 1, 256>}, {transform_indices = @transform_8, window_bounds = array<i64: 1, 1>}, {transform_indices = @transform_9, window_bounds = array<i64: 1, 16>}]} {
    %c0 = arith.constant 0 : index
    %c0_0 = arith.constant 0 : index
    %0 = vector.load %arg1[%c0, %c0_0] : memref<16x896xbf16, #tpu.memory_space<vmem>>, vector<16x896xbf16>
    %c0_1 = arith.constant 0 : index
    %c0_2 = arith.constant 0 : index
    %1 = vector.load %arg2[%c0_1, %c0_2] : memref<896x1024xbf16, #tpu.memory_space<vmem>>, vector<896x1024xbf16>
    %cst = arith.constant dense<0.000000e+00> : vector<16x1024xf32>
    %2 = tpu.matmul %0, %1, %cst {dimension_numbers = #tpu.dot_dimension_numbers<[1], [0], [0], [1], [0, 0, 1, 1], [], []>} : vector<16x896xbf16>, vector<896x1024xbf16>, vector<16x1024xf32> -> vector<16x1024xf32>
    %c0_3 = arith.constant 0 : index
    %c0_4 = arith.constant 0 : index
    %3 = vector.load %arg3[%c0_3, %c0_4] : memref<1x1024xf32, #tpu.memory_space<vmem>>, vector<1x1024xf32>
    %4 = vector.broadcast %3 : vector<1x1024xf32> to vector<16x1024xf32>
    %5 = arith.addf %2, %4 : vector<16x1024xf32>
    %cst_5 = arith.constant 0.000000e+00 : f32
    %6 = vector.broadcast %cst_5 : f32 to vector<16x1024xf32>
    %7 = arith.cmpf ogt, %5, %6 : vector<16x1024xf32>
    %cst_6 = arith.constant 2.000000e-01 : f32
    %8 = vector.broadcast %cst_6 : f32 to vector<16x1024xf32>
    %9 = arith.mulf %8, %5 : vector<16x1024xf32>
    %10 = arith.select %7, %5, %9 : vector<16x1024xi1>, vector<16x1024xf32>
    %11 = arith.truncf %10 : vector<16x1024xf32> to vector<16x1024xbf16>
    %c0_7 = arith.constant 0 : index
    %c0_8 = arith.constant 0 : index
    %12 = vector.load %arg4[%c0_7, %c0_8] : memref<1024x512xbf16, #tpu.memory_space<vmem>>, vector<1024x512xbf16>
    %cst_9 = arith.constant dense<0.000000e+00> : vector<16x512xf32>
    %13 = tpu.matmul %11, %12, %cst_9 {dimension_numbers = #tpu.dot_dimension_numbers<[1], [0], [0], [1], [0, 0, 1, 1], [], []>} : vector<16x1024xbf16>, vector<1024x512xbf16>, vector<16x512xf32> -> vector<16x512xf32>
    %c0_10 = arith.constant 0 : index
    %c0_11 = arith.constant 0 : index
    %14 = vector.load %arg5[%c0_10, %c0_11] : memref<1x512xf32, #tpu.memory_space<vmem>>, vector<1x512xf32>
    %15 = vector.broadcast %14 : vector<1x512xf32> to vector<16x512xf32>
    %16 = arith.addf %13, %15 : vector<16x512xf32>
    %cst_12 = arith.constant 0.000000e+00 : f32
    %17 = vector.broadcast %cst_12 : f32 to vector<16x512xf32>
    %18 = arith.cmpf ogt, %16, %17 : vector<16x512xf32>
    %cst_13 = arith.constant 2.000000e-01 : f32
    %19 = vector.broadcast %cst_13 : f32 to vector<16x512xf32>
    %20 = arith.mulf %19, %16 : vector<16x512xf32>
    %21 = arith.select %18, %16, %20 : vector<16x512xi1>, vector<16x512xf32>
    %22 = arith.truncf %21 : vector<16x512xf32> to vector<16x512xbf16>
    %c0_14 = arith.constant 0 : index
    %c0_15 = arith.constant 0 : index
    %23 = vector.load %arg6[%c0_14, %c0_15] : memref<512x256xbf16, #tpu.memory_space<vmem>>, vector<512x256xbf16>
    %cst_16 = arith.constant dense<0.000000e+00> : vector<16x256xf32>
    %24 = tpu.matmul %22, %23, %cst_16 {dimension_numbers = #tpu.dot_dimension_numbers<[1], [0], [0], [1], [0, 0, 1, 1], [], []>} : vector<16x512xbf16>, vector<512x256xbf16>, vector<16x256xf32> -> vector<16x256xf32>
    %c0_17 = arith.constant 0 : index
    %c0_18 = arith.constant 0 : index
    %25 = vector.load %arg7[%c0_17, %c0_18] : memref<1x256xf32, #tpu.memory_space<vmem>>, vector<1x256xf32>
    %26 = vector.broadcast %25 : vector<1x256xf32> to vector<16x256xf32>
    %27 = arith.addf %24, %26 : vector<16x256xf32>
    %cst_19 = arith.constant 0.000000e+00 : f32
    %28 = vector.broadcast %cst_19 : f32 to vector<16x256xf32>
    %29 = arith.cmpf ogt, %27, %28 : vector<16x256xf32>
    %cst_20 = arith.constant 2.000000e-01 : f32
    %30 = vector.broadcast %cst_20 : f32 to vector<16x256xf32>
    %31 = arith.mulf %30, %27 : vector<16x256xf32>
    %32 = arith.select %29, %27, %31 : vector<16x256xi1>, vector<16x256xf32>
    %33 = arith.truncf %32 : vector<16x256xf32> to vector<16x256xbf16>
    %c0_21 = arith.constant 0 : index
    %c0_22 = arith.constant 0 : index
    %34 = vector.load %arg8[%c0_21, %c0_22] : memref<1x256xbf16, #tpu.memory_space<vmem>>, vector<1x256xbf16>
    %cst_23 = arith.constant dense<0.000000e+00> : vector<1x16xf32>
    %35 = tpu.matmul %34, %33, %cst_23 {dimension_numbers = #tpu.dot_dimension_numbers<[1], [1], [0], [0], [0, 0, 1, 0], [], []>} : vector<1x256xbf16>, vector<16x256xbf16>, vector<1x16xf32> -> vector<1x16xf32>
    %c0_24 = arith.constant 0 : index
    %c0_25 = arith.constant 0 : index
    %36 = memref.load %arg9[%c0_24, %c0_25] : memref<1x1xf32, #tpu.memory_space<smem>>
    %37 = vector.broadcast %36 : f32 to vector<1x16xf32>
    %38 = arith.addf %35, %37 : vector<1x16xf32>
    %39 = arith.negf %38 : vector<1x16xf32>
    %40 = math.exp %39 : vector<1x16xf32>
    %cst_26 = arith.constant 1.000000e+00 : f32
    %41 = vector.broadcast %cst_26 : f32 to vector<1x16xf32>
    %42 = arith.addf %41, %40 : vector<1x16xf32>
    %43 = arith.divf %41, %42 : vector<1x16xf32>
    %c0_27 = arith.constant 0 : index
    %c0_28 = arith.constant 0 : index
    %44 = vector.load %arg10[%c0_27, %c0_28] : memref<1x16xf32, #tpu.memory_space<vmem>>, vector<1x16xf32>
    tpu.vector_store %arg10[%c0_27, %c0_28], %43 {strides = array<i32>} : memref<1x16xf32, #tpu.memory_space<vmem>>, vector<1x16xf32>,
    return
  }
  func.func @transform_0(%arg0: i32) -> (i32, i32) {
    %c0_i32 = arith.constant 0 : i32
    %c0_i32_0 = arith.constant 0 : i32
    return %arg0, %c0_i32 : i32, i32
  }
  func.func @transform_1(%arg0: i32) -> (i32, i32) {
    %c0_i32 = arith.constant 0 : i32
    %c0_i32_0 = arith.constant 0 : i32
    %c0_i32_1 = arith.constant 0 : i32
    return %c0_i32, %c0_i32_0 : i32, i32
  }
  func.func @transform_2(%arg0: i32) -> (i32, i32) {
    %c0_i32 = arith.constant 0 : i32
    %c0_i32_0 = arith.constant 0 : i32
    %c0_i32_1 = arith.constant 0 : i32
    return %c0_i32, %c0_i32_0 : i32, i32
  }
  func.func @transform_3(%arg0: i32) -> (i32, i32) {
    %c0_i32 = arith.constant 0 : i32
    %c0_i32_0 = arith.constant 0 : i32
    %c0_i32_1 = arith.constant 0 : i32
    return %c0_i32, %c0_i32_0 : i32, i32
  }
  func.func @transform_4(%arg0: i32) -> (i32, i32) {
    %c0_i32 = arith.constant 0 : i32
    %c0_i32_0 = arith.constant 0 : i32
    %c0_i32_1 = arith.constant 0 : i32
    return %c0_i32, %c0_i32_0 : i32, i32
  }
  func.func @transform_5(%arg0: i32) -> (i32, i32) {
    %c0_i32 = arith.constant 0 : i32
    %c0_i32_0 = arith.constant 0 : i32
    %c0_i32_1 = arith.constant 0 : i32
    return %c0_i32, %c0_i32_0 : i32, i32
  }
  func.func @transform_6(%arg0: i32) -> (i32, i32) {
    %c0_i32 = arith.constant 0 : i32
    %c0_i32_0 = arith.constant 0 : i32
    %c0_i32_1 = arith.constant 0 : i32
    return %c0_i32, %c0_i32_0 : i32, i32
  }
  func.func @transform_7(%arg0: i32) -> (i32, i32) {
    %c0_i32 = arith.constant 0 : i32
    %c0_i32_0 = arith.constant 0 : i32
    %c0_i32_1 = arith.constant 0 : i32
    return %c0_i32, %c0_i32_0 : i32, i32
  }
  func.func @transform_8(%arg0: i32) -> (i32, i32) {
    %c0_i32 = arith.constant 0 : i32
    %c0_i32_0 = arith.constant 0 : i32
    %c0_i32_1 = arith.constant 0 : i32
    return %c0_i32, %c0_i32_0 : i32, i32
  }
  func.func @transform_9(%arg0: i32) -> (i32, i32) {
    %c0_i32 = arith.constant 0 : i32
    %c0_i32_0 = arith.constant 0 : i32
    return %arg0, %c0_i32 : i32, i32
  }
}

</mosaic_0001>

<llo_original>
// kernel: tpu_custom_call.1
$region0: #{tpu_custom_call.1}
  #allocation0 [shape = 'u32[]', space=smem, size = 0x4, offset = 0x4, fixed_abs, tag = 'smem constant byte address 0x4 - core index']
  #allocation1 [shape = 'u32[144,128]{1,0:T(1,128)}', space=vmem, size = 0x12000, scoped, tag = 'internal scratch']
  #allocation2 [shape = 'f32[1,1]{1,0:T(1,128)S(6)}', space=smem, size = 0x200, scoped, tag = 'scoped memory for tpu_custom_call.1']
  %s0 = inlined_call_operand.hbm [shape: bf16[16,896], index: 0, kind: input, shape index: {}]
  %s1 = inlined_call_operand.hbm [shape: bf16[896,1024], index: 1, kind: input, shape index: {}]
  %s2 = inlined_call_operand.hbm [shape: f32[1,1024], index: 2, kind: input, shape index: {}]
  %s3 = inlined_call_operand.hbm [shape: bf16[1024,512], index: 3, kind: input, shape index: {}]
  %s4 = inlined_call_operand.hbm [shape: f32[1,512], index: 4, kind: input, shape index: {}]
  %s5 = inlined_call_operand.hbm [shape: bf16[512,256], index: 5, kind: input, shape index: {}]
  %s6 = inlined_call_operand.hbm [shape: f32[1,256], index: 6, kind: input, shape index: {}]
  %s7 = inlined_call_operand.hbm [shape: bf16[1,256], index: 7, kind: input, shape index: {}]
  %s8 = inlined_call_operand.<no memory space> [shape: f32[1,1], index: 8, kind: input, shape index: {}]
  %s9 = inlined_call_operand.hbm [shape: f32[1,16], index: 9, kind: output, shape index: {}]
  %s10 = sld [smem:[#allocation0]]
  $region78: #{tpu_custom_call.1} parent=0
    _
  %s12 = ssub.s32 1, %s10
  %s13 = scalar_select 0, %s12, %s10
  %14 = sst [smem:[#allocation2]] %s8
  $region1: #{tpu_custom_call.1} parent=0
    #allocation3 [shape = 'u8[28672]{0}', space=vmem, size = 0x7000, scoped, tag = 'input window, operand 0, single buffered']
    #allocation4 [shape = 's32[1]{0}', space=sflag, size = 0x4, scoped, tag = 'scoped memory for tpu_custom_call.1']
    #allocation5 [shape = 's32[1]{0}', space=sflag, size = 0x4, scoped, tag = 'scoped memory for tpu_custom_call.1']
    #allocation6 [shape = 'u8[1835008]{0}', space=vmem, size = 0x1c0000, scoped, tag = 'input window, operand 1, single buffered']
    #allocation7 [shape = 's32[1]{0}', space=sflag, size = 0x4, scoped, tag = 'scoped memory for tpu_custom_call.1']
    #allocation8 [shape = 'u8[4096]{0}', space=vmem, size = 0x1000, scoped, tag = 'input window, operand 2, single buffered']
    #allocation9 [shape = 'u8[1048576]{0}', space=vmem, size = 0x100000, scoped, tag = 'input window, operand 3, single buffered']
    #allocation10 [shape = 's32[1]{0}', space=sflag, size = 0x4, scoped, tag = 'scoped memory for tpu_custom_call.1']
    #allocation11 [shape = 'u8[2048]{0}', space=vmem, size = 0x800, scoped, tag = 'input window, operand 4, single buffered']
    #allocation12 [shape = 'u8[262144]{0}', space=vmem, size = 0x40000, scoped, tag = 'input window, operand 5, single buffered']
    #allocation13 [shape = 's32[1]{0}', space=sflag, size = 0x4, scoped, tag = 'scoped memory for tpu_custom_call.1']
    #allocation14 [shape = 'u8[1024]{0}', space=vmem, size = 0x400, scoped, tag = 'input window, operand 6, single buffered']
    #allocation15 [shape = 'u8[1024]{0}', space=vmem, size = 0x400, scoped, tag = 'input window, operand 7, single buffered']
    #allocation16 [shape = 's32[1]{0}', space=sflag, size = 0x4, scoped, tag = 'scoped memory for tpu_custom_call.1']
    #allocation17 [shape = 'u8[512]{0}', space=vmem, size = 0x400, scoped, tag = 'output window, operand 0, single buffered']
    %15 = vsyncpa [#allocation4], 0
    %16 = vsyncpa [#allocation7], 0
    %17 = vsyncpa [#allocation10], 0
    %18 = vsyncpa [#allocation13], 0
    %19 = vsyncpa [#allocation16], 0
    %20 = vsyncpa [#allocation5], 0
    // Predicated region
    $region2: #{tpu_custom_call.1} parent=1 // pred_check
      _
    $region3: #{tpu_custom_call.1} parent=1 // pred_check_branch
      %22 = sbr.rel (0) target = $region5
    $region4: #{tpu_custom_call.1} parent=1 // pred_region
      %s24 = ssub.s32 896, 896
      %25 = vsyncadd [#allocation4], %s24
      %s26 = sshll.u32 [#allocation3], 4
      %s27 = int_to_ptr.vmem [resolvable:$true] %s26
      %32 = dma.hbm_to_vmem [thread:$0]  %s0, 896, %s27, [#allocation4], 448, 448, 28
    $region5: #{tpu_custom_call.1} parent=1 // pred_fallthru
      _
    // Predicated region
    $region6: #{tpu_custom_call.1} parent=1 // pred_check
      _
    $region7: #{tpu_custom_call.1} parent=1 // pred_check_branch
      %34 = sbr.rel (0) target = $region9
    $region8: #{tpu_custom_call.1} parent=1 // pred_region
      %s36 = ssub.s32 57344, 57344
      %37 = vsyncadd [#allocation7], %s36
      %s38 = sshll.u32 [#allocation6], 4
      %s39 = int_to_ptr.vmem [resolvable:$true] %s38
      %44 = dma.hbm_to_vmem [thread:$0]  %s1, 57344, %s39, [#allocation7], 512, 512, 32
    $region9: #{tpu_custom_call.1} parent=1 // pred_fallthru
      _
    // Predicated region
    $region10: #{tpu_custom_call.1} parent=1 // pred_check
      _
    $region11: #{tpu_custom_call.1} parent=1 // pred_check_branch
      %46 = sbr.rel (0) target = $region13
    $region12: #{tpu_custom_call.1} parent=1 // pred_region
      %s48 = ssub.s32 128, 128
      %49 = vsyncadd [#allocation7], %s48
      %s51 = sshll.u32 [#allocation8], 4
      %s52 = int_to_ptr.vmem [resolvable:$true] %s51
      %54 = dma.hbm_to_vmem [thread:$0]  %s2, 128, %s52, [#allocation7]
    $region13: #{tpu_custom_call.1} parent=1 // pred_fallthru
      _
    // Predicated region
    $region14: #{tpu_custom_call.1} parent=1 // pred_check
      _
    $region15: #{tpu_custom_call.1} parent=1 // pred_check_branch
      %56 = sbr.rel (0) target = $region17
    $region16: #{tpu_custom_call.1} parent=1 // pred_region
      %s58 = ssub.s32 32768, 32768
      %59 = vsyncadd [#allocation10], %s58
      %s60 = sshll.u32 [#allocation9], 4
      %s61 = int_to_ptr.vmem [resolvable:$true] %s60
      %66 = dma.hbm_to_vmem [thread:$0]  %s3, 32768, %s61, [#allocation10], 256, 256, 16
    $region17: #{tpu_custom_call.1} parent=1 // pred_fallthru
      _
    // Predicated region
    $region18: #{tpu_custom_call.1} parent=1 // pred_check
      _
    $region19: #{tpu_custom_call.1} parent=1 // pred_check_branch
      %68 = sbr.rel (0) target = $region21
    $region20: #{tpu_custom_call.1} parent=1 // pred_region
      %s70 = ssub.s32 64, 64
      %71 = vsyncadd [#allocation10], %s70
      %s73 = sshll.u32 [#allocation11], 4
      %s74 = int_to_ptr.vmem [resolvable:$true] %s73
      %76 = dma.hbm_to_vmem [thread:$0]  %s4, 64, %s74, [#allocation10]
    $region21: #{tpu_custom_call.1} parent=1 // pred_fallthru
      _
    // Predicated region
    $region22: #{tpu_custom_call.1} parent=1 // pred_check
      _
    $region23: #{tpu_custom_call.1} parent=1 // pred_check_branch
      %78 = sbr.rel (0) target = $region25
    $region24: #{tpu_custom_call.1} parent=1 // pred_region
      %s80 = ssub.s32 8192, 8192
      %81 = vsyncadd [#allocation13], %s80
      %s82 = sshll.u32 [#allocation12], 4
      %s83 = int_to_ptr.vmem [resolvable:$true] %s82
      %88 = dma.hbm_to_vmem [thread:$0]  %s5, 8192, %s83, [#allocation13], 128, 128, 8
    $region25: #{tpu_custom_call.1} parent=1 // pred_fallthru
      _
    // Predicated region
    $region26: #{tpu_custom_call.1} parent=1 // pred_check
      _
    $region27: #{tpu_custom_call.1} parent=1 // pred_check_branch
      %90 = sbr.rel (0) target = $region29
    $region28: #{tpu_custom_call.1} parent=1 // pred_region
      %s92 = ssub.s32 32, 32
      %93 = vsyncadd [#allocation13], %s92
      %s95 = sshll.u32 [#allocation14], 4
      %s96 = int_to_ptr.vmem [resolvable:$true] %s95
      %98 = dma.hbm_to_vmem [thread:$0]  %s6, 32, %s96, [#allocation13]
    $region29: #{tpu_custom_call.1} parent=1 // pred_fallthru
      _
    // Predicated region
    $region30: #{tpu_custom_call.1} parent=1 // pred_check
      _
    $region31: #{tpu_custom_call.1} parent=1 // pred_check_branch
      %100 = sbr.rel (0) target = $region33
    $region32: #{tpu_custom_call.1} parent=1 // pred_region
      %s102 = ssub.s32 32, 32
      %103 = vsyncadd [#allocation16], %s102
      %s105 = sshll.u32 [#allocation15], 4
      %s106 = int_to_ptr.vmem [resolvable:$true] %s105
      %108 = dma.hbm_to_vmem [thread:$0]  %s7, 32, %s106, [#allocation16]
    $region33: #{tpu_custom_call.1} parent=1 // pred_fallthru
      _
    // Predicated region
    $region34: #{tpu_custom_call.1} parent=1 // pred_check
      _
    $region35: #{tpu_custom_call.1} parent=1 // pred_check_branch
      %110 = sbr.rel (0) target = $region37
    $region36: #{tpu_custom_call.1} parent=1 // pred_region
      _
    $region37: #{tpu_custom_call.1} parent=1 // pred_fallthru
      _
    // Predicated region
    $region38: #{tpu_custom_call.1} parent=1 // pred_check
      _
    $region39: #{tpu_custom_call.1} parent=1 // pred_check_branch
      %112 = sbr.rel (0) target = $region41
    $region40: #{tpu_custom_call.1} parent=1 // pred_region
      %113 = dma.done [#allocation4], 896
    $region41: #{tpu_custom_call.1} parent=1 // pred_fallthru
      _
    // Predicated region
    $region42: #{tpu_custom_call.1} parent=1 // pred_check
      _
    $region43: #{tpu_custom_call.1} parent=1 // pred_check_branch
      %115 = sbr.rel (0) target = $region45
    $region44: #{tpu_custom_call.1} parent=1 // pred_region
      %116 = dma.done [#allocation7], 57344
    $region45: #{tpu_custom_call.1} parent=1 // pred_fallthru
      _
    // Predicated region
    $region46: #{tpu_custom_call.1} parent=1 // pred_check
      _
    $region47: #{tpu_custom_call.1} parent=1 // pred_check_branch
      %118 = sbr.rel (0) target = $region49
    $region48: #{tpu_custom_call.1} parent=1 // pred_region
      %119 = dma.done [#allocation7], 128
    $region49: #{tpu_custom_call.1} parent=1 // pred_fallthru
      _
    // Predicated region
    $region50: #{tpu_custom_call.1} parent=1 // pred_check
      _
    $region51: #{tpu_custom_call.1} parent=1 // pred_check_branch
      %121 = sbr.rel (0) target = $region53
    $region52: #{tpu_custom_call.1} parent=1 // pred_region
      %122 = dma.done [#allocation10], 32768
    $region53: #{tpu_custom_call.1} parent=1 // pred_fallthru
      _
    // Predicated region
    $region54: #{tpu_custom_call.1} parent=1 // pred_check
      _
    $region55: #{tpu_custom_call.1} parent=1 // pred_check_branch
      %124 = sbr.rel (0) target = $region57
    $region56: #{tpu_custom_call.1} parent=1 // pred_region
      %125 = dma.done [#allocation10], 64
    $region57: #{tpu_custom_call.1} parent=1 // pred_fallthru
      _
    // Predicated region
    $region58: #{tpu_custom_call.1} parent=1 // pred_check
      _
    $region59: #{tpu_custom_call.1} parent=1 // pred_check_branch
      %127 = sbr.rel (0) target = $region61
    $region60: #{tpu_custom_call.1} parent=1 // pred_region
      %128 = dma.done [#allocation13], 8192
    $region61: #{tpu_custom_call.1} parent=1 // pred_fallthru
      _
    // Predicated region
    $region62: #{tpu_custom_call.1} parent=1 // pred_check
      _
    $region63: #{tpu_custom_call.1} parent=1 // pred_check_branch
      %130 = sbr.rel (0) target = $region65
    $region64: #{tpu_custom_call.1} parent=1 // pred_region
      %131 = dma.done [#allocation13], 32
    $region65: #{tpu_custom_call.1} parent=1 // pred_fallthru
      _
    // Predicated region
    $region66: #{tpu_custom_call.1} parent=1 // pred_check
      _
    $region67: #{tpu_custom_call.1} parent=1 // pred_check_branch
      %133 = sbr.rel (0) target = $region69
    $region68: #{tpu_custom_call.1} parent=1 // pred_region
      %134 = dma.done [#allocation16], 32
    $region69: #{tpu_custom_call.1} parent=1 // pred_fallthru
      _
    %v136 = vld [vmem:[#allocation3] sm:$0xff]
    %v137 = vld [vmem:[#allocation3 + $0x8] sm:$0xff]
    %v138 = vld [vmem:[#allocation3 + $0x10] sm:$0xff]
    %v139 = vld [vmem:[#allocation3 + $0x18] sm:$0xf]
    %v140 = vld [vmem:[#allocation3 + $0x1c] sm:$0xff]
    %v141 = vld [vmem:[#allocation3 + $0x24] sm:$0xff]
    %v142 = vld [vmem:[#allocation3 + $0x2c] sm:$0xff]
    %v143 = vld [vmem:[#allocation3 + $0x34] sm:$0xf]
    %v144 = vld [vmem:[#allocation6] sm:$0xff]
    %v145 = vld [vmem:[#allocation6 + $0x8] sm:$0xff]
    %v146 = vld [vmem:[#allocation6 + $0x10] sm:$0xff]
    %v147 = vld [vmem:[#allocation6 + $0x18] sm:$0xff]
    %v148 = vld [vmem:[#allocation6 + $0x20] sm:$0xff]
    %v149 = vld [vmem:[#allocation6 + $0x28] sm:$0xff]
    %v150 = vld [vmem:[#allocation6 + $0x30] sm:$0xff]
    %v151 = vld [vmem:[#allocation6 + $0x38] sm:$0xff]
    %v152 = vld [vmem:[#allocation6 + $0x40] sm:$0xff]
    %v153 = vld [vmem:[#allocation6 + $0x48] sm:$0xff]
    %v154 = vld [vmem:[#allocation6 + $0x50] sm:$0xff]
    %v155 = vld [vmem:[#allocation6 + $0x58] sm:$0xff]
    %v156 = vld [vmem:[#allocation6 + $0x60] sm:$0xff]
    %v157 = vld [vmem:[#allocation6 + $0x68] sm:$0xff]
    %v158 = vld [vmem:[#allocation6 + $0x70] sm:$0xff]
    %v159 = vld [vmem:[#allocation6 + $0x78] sm:$0xff]
    %v160 = vld [vmem:[#allocation6 + $0x80] sm:$0xff]
    %v161 = vld [vmem:[#allocation6 + $0x88] sm:$0xff]
    %v162 = vld [vmem:[#allocation6 + $0x90] sm:$0xff]
    %v163 = vld [vmem:[#allocation6 + $0x98] sm:$0xff]
    %v164 = vld [vmem:[#allocation6 + $0xa0] sm:$0xff]
    %v165 = vld [vmem:[#allocation6 + $0xa8] sm:$0xff]
    %v166 = vld [vmem:[#allocation6 + $0xb0] sm:$0xff]
    %v167 = vld [vmem:[#allocation6 + $0xb8] sm:$0xff]
    %v168 = vld [vmem:[#allocation6 + $0xc0] sm:$0xff]
    %v169 = vld [vmem:[#allocation6 + $0xc8] sm:$0xff]
    %v170 = vld [vmem:[#allocation6 + $0xd0] sm:$0xff]
    %v171 = vld [vmem:[#allocation6 + $0xd8] sm:$0xff]
    %v172 = vld [vmem:[#allocation6 + $0xe0] sm:$0xff]
    %v173 = vld [vmem:[#allocation6 + $0xe8] sm:$0xff]
    %v174 = vld [vmem:[#allocation6 + $0xf0] sm:$0xff]
    %v175 = vld [vmem:[#allocation6 + $0xf8] sm:$0xff]
    %v176 = vld [vmem:[#allocation6 + $0x100] sm:$0xff]
    %v177 = vld [vmem:[#allocation6 + $0x108] sm:$0xff]
    %v178 = vld [vmem:[#allocation6 + $0x110] sm:$0xff]
    %v179 = vld [vmem:[#allocation6 + $0x118] sm:$0xff]
    %v180 = vld [vmem:[#allocation6 + $0x120] sm:$0xff]
    %v181 = vld [vmem:[#allocation6 + $0x128] sm:$0xff]
    %v182 = vld [vmem:[#allocation6 + $0x130] sm:$0xff]
    %v183 = vld [vmem:[#allocation6 + $0x138] sm:$0xff]
    %v184 = vld [vmem:[#allocation6 + $0x140] sm:$0xff]
    %v185 = vld [vmem:[#allocation6 + $0x148] sm:$0xff]
    %v186 = vld [vmem:[#allocation6 + $0x150] sm:$0xff]
    %v187 = vld [vmem:[#allocation6 + $0x158] sm:$0xff]
    %v188 = vld [vmem:[#allocation6 + $0x160] sm:$0xff]
    %v189 = vld [vmem:[#allocation6 + $0x168] sm:$0xff]
    %v190 = vld [vmem:[#allocation6 + $0x170] sm:$0xff]
    %v191 = vld [vmem:[#allocation6 + $0x178] sm:$0xff]
    %v192 = vld [vmem:[#allocation6 + $0x180] sm:$0xff]
    %v193 = vld [vmem:[#allocation6 + $0x188] sm:$0xff]
    %v194 = vld [vmem:[#allocation6 + $0x190] sm:$0xff]
    %v195 = vld [vmem:[#allocation6 + $0x198] sm:$0xff]
    %v196 = vld [vmem:[#allocation6 + $0x1a0] sm:$0xff]
    %v197 = vld [vmem:[#allocation6 + $0x1a8] sm:$0xff]
    %v198 = vld [vmem:[#allocation6 + $0x1b0] sm:$0xff]
    %v199 = vld [vmem:[#allocation6 + $0x1b8] sm:$0xff]
    %v200 = vld [vmem:[#allocation6 + $0x1c0] sm:$0xff]
    %v201 = vld [vmem:[#allocation6 + $0x1c8] sm:$0xff]
    %v202 = vld [vmem:[#allocation6 + $0x1d0] sm:$0xff]
    %v203 = vld [vmem:[#allocation6 + $0x1d8] sm:$0xff]
    %v204 = vld [vmem:[#allocation6 + $0x1e0] sm:$0xff]
    %v205 = vld [vmem:[#allocation6 + $0x1e8] sm:$0xff]
    %v206 = vld [vmem:[#allocation6 + $0x1f0] sm:$0xff]
    %v207 = vld [vmem:[#allocation6 + $0x1f8] sm:$0xff]
    %v208 = vld [vmem:[#allocation6 + $0x200] sm:$0xff]
    %v209 = vld [vmem:[#allocation6 + $0x208] sm:$0xff]
    %v210 = vld [vmem:[#allocation6 + $0x210] sm:$0xff]
    %v211 = vld [vmem:[#allocation6 + $0x218] sm:$0xff]
    %v212 = vld [vmem:[#allocation6 + $0x220] sm:$0xff]
    %v213 = vld [vmem:[#allocation6 + $0x228] sm:$0xff]
    %v214 = vld [vmem:[#allocation6 + $0x230] sm:$0xff]
    %v215 = vld [vmem:[#allocation6 + $0x238] sm:$0xff]
    %v216 = vld [vmem:[#allocation6 + $0x240] sm:$0xff]
    %v217 = vld [vmem:[#allocation6 + $0x248] sm:$0xff]
    %v218 = vld [vmem:[#allocation6 + $0x250] sm:$0xff]
    %v219 = vld [vmem:[#allocation6 + $0x258] sm:$0xff]
    %v220 = vld [vmem:[#allocation6 + $0x260] sm:$0xff]
    %v221 = vld [vmem:[#allocation6 + $0x268] sm:$0xff]
    %v222 = vld [vmem:[#allocation6 + $0x270] sm:$0xff]
    %v223 = vld [vmem:[#allocation6 + $0x278] sm:$0xff]
    %v224 = vld [vmem:[#allocation6 + $0x280] sm:$0xff]
    %v225 = vld [vmem:[#allocation6 + $0x288] sm:$0xff]
    %v226 = vld [vmem:[#allocation6 + $0x290] sm:$0xff]
    %v227 = vld [vmem:[#allocation6 + $0x298] sm:$0xff]
    %v228 = vld [vmem:[#allocation6 + $0x2a0] sm:$0xff]
    %v229 = vld [vmem:[#allocation6 + $0x2a8] sm:$0xff]
    %v230 = vld [vmem:[#allocation6 + $0x2b0] sm:$0xff]
    %v231 = vld [vmem:[#allocation6 + $0x2b8] sm:$0xff]
    %v232 = vld [vmem:[#allocation6 + $0x2c0] sm:$0xff]
    %v233 = vld [vmem:[#allocation6 + $0x2c8] sm:$0xff]
    %v234 = vld [vmem:[#allocation6 + $0x2d0] sm:$0xff]
    %v235 = vld [vmem:[#allocation6 + $0x2d8] sm:$0xff]
    %v236 = vld [vmem:[#allocation6 + $0x2e0] sm:$0xff]
    %v237 = vld [vmem:[#allocation6 + $0x2e8] sm:$0xff]
    %v238 = vld [vmem:[#allocation6 + $0x2f0] sm:$0xff]
    %v239 = vld [vmem:[#allocation6 + $0x2f8] sm:$0xff]
    %v240 = vld [vmem:[#allocation6 + $0x300] sm:$0xff]
    %v241 = vld [vmem:[#allocation6 + $0x308] sm:$0xff]
    %v242 = vld [vmem:[#allocation6 + $0x310] sm:$0xff]
    %v243 = vld [vmem:[#allocation6 + $0x318] sm:$0xff]
    %v244 = vld [vmem:[#allocation6 + $0x320] sm:$0xff]
    %v245 = vld [vmem:[#allocation6 + $0x328] sm:$0xff]
    %v246 = vld [vmem:[#allocation6 + $0x330] sm:$0xff]
    %v247 = vld [vmem:[#allocation6 + $0x338] sm:$0xff]
    %v248 = vld [vmem:[#allocation6 + $0x340] sm:$0xff]
    %v249 = vld [vmem:[#allocation6 + $0x348] sm:$0xff]
    %v250 = vld [vmem:[#allocation6 + $0x350] sm:$0xff]
    %v251 = vld [vmem:[#allocation6 + $0x358] sm:$0xff]
    %v252 = vld [vmem:[#allocation6 + $0x360] sm:$0xff]
    %v253 = vld [vmem:[#allocation6 + $0x368] sm:$0xff]
    %v254 = vld [vmem:[#allocation6 + $0x370] sm:$0xff]
    %v255 = vld [vmem:[#allocation6 + $0x378] sm:$0xff]
    %v256 = vld [vmem:[#allocation6 + $0x380] sm:$0xff]
    %v257 = vld [vmem:[#allocation6 + $0x388] sm:$0xff]
    %v258 = vld [vmem:[#allocation6 + $0x390] sm:$0xff]
    %v259 = vld [vmem:[#allocation6 + $0x398] sm:$0xff]
    %v260 = vld [vmem:[#allocation6 + $0x3a0] sm:$0xff]
    %v261 = vld [vmem:[#allocation6 + $0x3a8] sm:$0xff]
    %v262 = vld [vmem:[#allocation6 + $0x3b0] sm:$0xff]
    %v263 = vld [vmem:[#allocation6 + $0x3b8] sm:$0xff]
    %v264 = vld [vmem:[#allocation6 + $0x3c0] sm:$0xff]
    %v265 = vld [vmem:[#allocation6 + $0x3c8] sm:$0xff]
    %v266 = vld [vmem:[#allocation6 + $0x3d0] sm:$0xff]
    %v267 = vld [vmem:[#allocation6 + $0x3d8] sm:$0xff]
    %v268 = vld [vmem:[#allocation6 + $0x3e0] sm:$0xff]
    %v269 = vld [vmem:[#allocation6 + $0x3e8] sm:$0xff]
    %v270 = vld [vmem:[#allocation6 + $0x3f0] sm:$0xff]
    %v271 = vld [vmem:[#allocation6 + $0x3f8] sm:$0xff]
    %v272 = vld [vmem:[#allocation6 + $0x400] sm:$0xff]
    %v273 = vld [vmem:[#allocation6 + $0x408] sm:$0xff]
    %v274 = vld [vmem:[#allocation6 + $0x410] sm:$0xff]
    %v275 = vld [vmem:[#allocation6 + $0x418] sm:$0xff]
    %v276 = vld [vmem:[#allocation6 + $0x420] sm:$0xff]
    %v277 = vld [vmem:[#allocation6 + $0x428] sm:$0xff]
    %v278 = vld [vmem:[#allocation6 + $0x430] sm:$0xff]
    %v279 = vld [vmem:[#allocation6 + $0x438] sm:$0xff]
    %v280 = vld [vmem:[#allocation6 + $0x440] sm:$0xff]
    %v281 = vld [vmem:[#allocation6 + $0x448] sm:$0xff]
    %v282 = vld [vmem:[#allocation6 + $0x450] sm:$0xff]
    %v283 = vld [vmem:[#allocation6 + $0x458] sm:$0xff]
    %v284 = vld [vmem:[#allocation6 + $0x460] sm:$0xff]
    %v285 = vld [vmem:[#allocation6 + $0x468] sm:$0xff]
    %v286 = vld [vmem:[#allocation6 + $0x470] sm:$0xff]
    %v287 = vld [vmem:[#allocation6 + $0x478] sm:$0xff]
    %v288 = vld [vmem:[#allocation6 + $0x480] sm:$0xff]
    %v289 = vld [vmem:[#allocation6 + $0x488] sm:$0xff]
    %v290 = vld [vmem:[#allocation6 + $0x490] sm:$0xff]
    %v291 = vld [vmem:[#allocation6 + $0x498] sm:$0xff]
    %v292 = vld [vmem:[#allocation6 + $0x4a0] sm:$0xff]
    %v293 = vld [vmem:[#allocation6 + $0x4a8] sm:$0xff]
    %v294 = vld [vmem:[#allocation6 + $0x4b0] sm:$0xff]
    %v295 = vld [vmem:[#allocation6 + $0x4b8] sm:$0xff]
    %v296 = vld [vmem:[#allocation6 + $0x4c0] sm:$0xff]
    %v297 = vld [vmem:[#allocation6 + $0x4c8] sm:$0xff]
    %v298 = vld [vmem:[#allocation6 + $0x4d0] sm:$0xff]
    %v299 = vld [vmem:[#allocation6 + $0x4d8] sm:$0xff]
    %v300 = vld [vmem:[#allocation6 + $0x4e0] sm:$0xff]
    %v301 = vld [vmem:[#allocation6 + $0x4e8] sm:$0xff]
    %v302 = vld [vmem:[#allocation6 + $0x4f0] sm:$0xff]
    %v303 = vld [vmem:[#allocation6 + $0x4f8] sm:$0xff]
    %v304 = vld [vmem:[#allocation6 + $0x500] sm:$0xff]
    %v305 = vld [vmem:[#allocation6 + $0x508] sm:$0xff]
    %v306 = vld [vmem:[#allocation6 + $0x510] sm:$0xff]
    %v307 = vld [vmem:[#allocation6 + $0x518] sm:$0xff]
    %v308 = vld [vmem:[#allocation6 + $0x520] sm:$0xff]
    %v309 = vld [vmem:[#allocation6 + $0x528] sm:$0xff]
    %v310 = vld [vmem:[#allocation6 + $0x530] sm:$0xff]
    %v311 = vld [vmem:[#allocation6 + $0x538] sm:$0xff]
    %v312 = vld [vmem:[#allocation6 + $0x540] sm:$0xff]
    %v313 = vld [vmem:[#allocation6 + $0x548] sm:$0xff]
    %v314 = vld [vmem:[#allocation6 + $0x550] sm:$0xff]
    %v315 = vld [vmem:[#allocation6 + $0x558] sm:$0xff]
    %v316 = vld [vmem:[#allocation6 + $0x560] sm:$0xff]
    %v317 = vld [vmem:[#allocation6 + $0x568] sm:$0xff]
    %v318 = vld [vmem:[#allocation6 + $0x570] sm:$0xff]
    %v319 = vld [vmem:[#allocation6 + $0x578] sm:$0xff]
    %v320 = vld [vmem:[#allocation6 + $0x580] sm:$0xff]
    %v321 = vld [vmem:[#allocation6 + $0x588] sm:$0xff]
    %v322 = vld [vmem:[#allocation6 + $0x590] sm:$0xff]
    %v323 = vld [vmem:[#allocation6 + $0x598] sm:$0xff]
    %v324 = vld [vmem:[#allocation6 + $0x5a0] sm:$0xff]
    %v325 = vld [vmem:[#allocation6 + $0x5a8] sm:$0xff]
    %v326 = vld [vmem:[#allocation6 + $0x5b0] sm:$0xff]
    %v327 = vld [vmem:[#allocation6 + $0x5b8] sm:$0xff]
    %v328 = vld [vmem:[#allocation6 + $0x5c0] sm:$0xff]
    %v329 = vld [vmem:[#allocation6 + $0x5c8] sm:$0xff]
    %v330 = vld [vmem:[#allocation6 + $0x5d0] sm:$0xff]
    %v331 = vld [vmem:[#allocation6 + $0x5d8] sm:$0xff]
    %v332 = vld [vmem:[#allocation6 + $0x5e0] sm:$0xff]
    %v333 = vld [vmem:[#allocation6 + $0x5e8] sm:$0xff]
    %v334 = vld [vmem:[#allocation6 + $0x5f0] sm:$0xff]
    %v335 = vld [vmem:[#allocation6 + $0x5f8] sm:$0xff]
    %v336 = vld [vmem:[#allocation6 + $0x600] sm:$0xff]
    %v337 = vld [vmem:[#allocation6 + $0x608] sm:$0xff]
    %v338 = vld [vmem:[#allocation6 + $0x610] sm:$0xff]
    %v339 = vld [vmem:[#allocation6 + $0x618] sm:$0xff]
    %v340 = vld [vmem:[#allocation6 + $0x620] sm:$0xff]
    %v341 = vld [vmem:[#allocation6 + $0x628] sm:$0xff]
    %v342 = vld [vmem:[#allocation6 + $0x630] sm:$0xff]
    %v343 = vld [vmem:[#allocation6 + $0x638] sm:$0xff]
    %v344 = vld [vmem:[#allocation6 + $0x640] sm:$0xff]
    %v345 = vld [vmem:[#allocation6 + $0x648] sm:$0xff]
    %v346 = vld [vmem:[#allocation6 + $0x650] sm:$0xff]
    %v347 = vld [vmem:[#allocation6 + $0x658] sm:$0xff]
    %v348 = vld [vmem:[#allocation6 + $0x660] sm:$0xff]
    %v349 = vld [vmem:[#allocation6 + $0x668] sm:$0xff]
    %v350 = vld [vmem:[#allocation6 + $0x670] sm:$0xff]
    %v351 = vld [vmem:[#allocation6 + $0x678] sm:$0xff]
    %v352 = vld [vmem:[#allocation6 + $0x680] sm:$0xff]
    %v353 = vld [vmem:[#allocation6 + $0x688] sm:$0xff]
    %v354 = vld [vmem:[#allocation6 + $0x690] sm:$0xff]
    %v355 = vld [vmem:[#allocation6 + $0x698] sm:$0xff]
    %v356 = vld [vmem:[#allocation6 + $0x6a0] sm:$0xff]
    %v357 = vld [vmem:[#allocation6 + $0x6a8] sm:$0xff]
    %v358 = vld [vmem:[#allocation6 + $0x6b0] sm:$0xff]
    %v359 = vld [vmem:[#allocation6 + $0x6b8] sm:$0xff]
    %v360 = vld [vmem:[#allocation6 + $0x6c0] sm:$0xff]
    %v361 = vld [vmem:[#allocation6 + $0x6c8] sm:$0xff]
    %v362 = vld [vmem:[#allocation6 + $0x6d0] sm:$0xff]
    %v363 = vld [vmem:[#allocation6 + $0x6d8] sm:$0xff]
    %v364 = vld [vmem:[#allocation6 + $0x6e0] sm:$0xff]
    %v365 = vld [vmem:[#allocation6 + $0x6e8] sm:$0xff]
    %v366 = vld [vmem:[#allocation6 + $0x6f0] sm:$0xff]
    %v367 = vld [vmem:[#allocation6 + $0x6f8] sm:$0xff]
    %v368 = vld [vmem:[#allocation6 + $0x700] sm:$0xff]
    %v369 = vld [vmem:[#allocation6 + $0x708] sm:$0xff]
    %v370 = vld [vmem:[#allocation6 + $0x710] sm:$0xff]
    %v371 = vld [vmem:[#allocation6 + $0x718] sm:$0xff]
    %v372 = vld [vmem:[#allocation6 + $0x720] sm:$0xff]
    %v373 = vld [vmem:[#allocation6 + $0x728] sm:$0xff]
    %v374 = vld [vmem:[#allocation6 + $0x730] sm:$0xff]
    %v375 = vld [vmem:[#allocation6 + $0x738] sm:$0xff]
    %v376 = vld [vmem:[#allocation6 + $0x740] sm:$0xff]
    %v377 = vld [vmem:[#allocation6 + $0x748] sm:$0xff]
    %v378 = vld [vmem:[#allocation6 + $0x750] sm:$0xff]
    %v379 = vld [vmem:[#allocation6 + $0x758] sm:$0xff]
    %v380 = vld [vmem:[#allocation6 + $0x760] sm:$0xff]
    %v381 = vld [vmem:[#allocation6 + $0x768] sm:$0xff]
    %v382 = vld [vmem:[#allocation6 + $0x770] sm:$0xff]
    %v383 = vld [vmem:[#allocation6 + $0x778] sm:$0xff]
    %v384 = vld [vmem:[#allocation6 + $0x780] sm:$0xff]
    %v385 = vld [vmem:[#allocation6 + $0x788] sm:$0xff]
    %v386 = vld [vmem:[#allocation6 + $0x790] sm:$0xff]
    %v387 = vld [vmem:[#allocation6 + $0x798] sm:$0xff]
    %v388 = vld [vmem:[#allocation6 + $0x7a0] sm:$0xff]
    %v389 = vld [vmem:[#allocation6 + $0x7a8] sm:$0xff]
    %v390 = vld [vmem:[#allocation6 + $0x7b0] sm:$0xff]
    %v391 = vld [vmem:[#allocation6 + $0x7b8] sm:$0xff]
    %v392 = vld [vmem:[#allocation6 + $0x7c0] sm:$0xff]
    %v393 = vld [vmem:[#allocation6 + $0x7c8] sm:$0xff]
    %v394 = vld [vmem:[#allocation6 + $0x7d0] sm:$0xff]
    %v395 = vld [vmem:[#allocation6 + $0x7d8] sm:$0xff]
    %v396 = vld [vmem:[#allocation6 + $0x7e0] sm:$0xff]
    %v397 = vld [vmem:[#allocation6 + $0x7e8] sm:$0xff]
    %v398 = vld [vmem:[#allocation6 + $0x7f0] sm:$0xff]
    %v399 = vld [vmem:[#allocation6 + $0x7f8] sm:$0xff]
    %v400 = vld [vmem:[#allocation6 + $0x800] sm:$0xff]
    %v401 = vld [vmem:[#allocation6 + $0x808] sm:$0xff]
    %v402 = vld [vmem:[#allocation6 + $0x810] sm:$0xff]
    %v403 = vld [vmem:[#allocation6 + $0x818] sm:$0xff]
    %v404 = vld [vmem:[#allocation6 + $0x820] sm:$0xff]
    %v405 = vld [vmem:[#allocation6 + $0x828] sm:$0xff]
    %v406 = vld [vmem:[#allocation6 + $0x830] sm:$0xff]
    %v407 = vld [vmem:[#allocation6 + $0x838] sm:$0xff]
    %v408 = vld [vmem:[#allocation6 + $0x840] sm:$0xff]
    %v409 = vld [vmem:[#allocation6 + $0x848] sm:$0xff]
    %v410 = vld [vmem:[#allocation6 + $0x850] sm:$0xff]
    %v411 = vld [vmem:[#allocation6 + $0x858] sm:$0xff]
    %v412 = vld [vmem:[#allocation6 + $0x860] sm:$0xff]
    %v413 = vld [vmem:[#allocation6 + $0x868] sm:$0xff]
    %v414 = vld [vmem:[#allocation6 + $0x870] sm:$0xff]
    %v415 = vld [vmem:[#allocation6 + $0x878] sm:$0xff]
    %v416 = vld [vmem:[#allocation6 + $0x880] sm:$0xff]
    %v417 = vld [vmem:[#allocation6 + $0x888] sm:$0xff]
    %v418 = vld [vmem:[#allocation6 + $0x890] sm:$0xff]
    %v419 = vld [vmem:[#allocation6 + $0x898] sm:$0xff]
    %v420 = vld [vmem:[#allocation6 + $0x8a0] sm:$0xff]
    %v421 = vld [vmem:[#allocation6 + $0x8a8] sm:$0xff]
    %v422 = vld [vmem:[#allocation6 + $0x8b0] sm:$0xff]
    %v423 = vld [vmem:[#allocation6 + $0x8b8] sm:$0xff]
    %v424 = vld [vmem:[#allocation6 + $0x8c0] sm:$0xff]
    %v425 = vld [vmem:[#allocation6 + $0x8c8] sm:$0xff]
    %v426 = vld [vmem:[#allocation6 + $0x8d0] sm:$0xff]
    %v427 = vld [vmem:[#allocation6 + $0x8d8] sm:$0xff]
    %v428 = vld [vmem:[#allocation6 + $0x8e0] sm:$0xff]
    %v429 = vld [vmem:[#allocation6 + $0x8e8] sm:$0xff]
    %v430 = vld [vmem:[#allocation6 + $0x8f0] sm:$0xff]
    %v431 = vld [vmem:[#allocation6 + $0x8f8] sm:$0xff]
    %v432 = vld [vmem:[#allocation6 + $0x900] sm:$0xff]
    %v433 = vld [vmem:[#allocation6 + $0x908] sm:$0xff]
    %v434 = vld [vmem:[#allocation6 + $0x910] sm:$0xff]
    %v435 = vld [vmem:[#allocation6 + $0x918] sm:$0xff]
    %v436 = vld [vmem:[#allocation6 + $0x920] sm:$0xff]
    %v437 = vld [vmem:[#allocation6 + $0x928] sm:$0xff]
    %v438 = vld [vmem:[#allocation6 + $0x930] sm:$0xff]
    %v439 = vld [vmem:[#allocation6 + $0x938] sm:$0xff]
    %v440 = vld [vmem:[#allocation6 + $0x940] sm:$0xff]
    %v441 = vld [vmem:[#allocation6 + $0x948] sm:$0xff]
    %v442 = vld [vmem:[#allocation6 + $0x950] sm:$0xff]
    %v443 = vld [vmem:[#allocation6 + $0x958] sm:$0xff]
    %v444 = vld [vmem:[#allocation6 + $0x960] sm:$0xff]
    %v445 = vld [vmem:[#allocation6 + $0x968] sm:$0xff]
    %v446 = vld [vmem:[#allocation6 + $0x970] sm:$0xff]
    %v447 = vld [vmem:[#allocation6 + $0x978] sm:$0xff]
    %v448 = vld [vmem:[#allocation6 + $0x980] sm:$0xff]
    %v449 = vld [vmem:[#allocation6 + $0x988] sm:$0xff]
    %v450 = vld [vmem:[#allocation6 + $0x990] sm:$0xff]
    %v451 = vld [vmem:[#allocation6 + $0x998] sm:$0xff]
    %v452 = vld [vmem:[#allocation6 + $0x9a0] sm:$0xff]
    %v453 = vld [vmem:[#allocation6 + $0x9a8] sm:$0xff]
    %v454 = vld [vmem:[#allocation6 + $0x9b0] sm:$0xff]
    %v455 = vld [vmem:[#allocation6 + $0x9b8] sm:$0xff]
    %v456 = vld [vmem:[#allocation6 + $0x9c0] sm:$0xff]
    %v457 = vld [vmem:[#allocation6 + $0x9c8] sm:$0xff]
    %v458 = vld [vmem:[#allocation6 + $0x9d0] sm:$0xff]
    %v459 = vld [vmem:[#allocation6 + $0x9d8] sm:$0xff]
    %v460 = vld [vmem:[#allocation6 + $0x9e0] sm:$0xff]
    %v461 = vld [vmem:[#allocation6 + $0x9e8] sm:$0xff]
    %v462 = vld [vmem:[#allocation6 + $0x9f0] sm:$0xff]
    %v463 = vld [vmem:[#allocation6 + $0x9f8] sm:$0xff]
    %v464 = vld [vmem:[#allocation6 + $0xa00] sm:$0xff]
    %v465 = vld [vmem:[#allocation6 + $0xa08] sm:$0xff]
    %v466 = vld [vmem:[#allocation6 + $0xa10] sm:$0xff]
    %v467 = vld [vmem:[#allocation6 + $0xa18] sm:$0xff]
    %v468 = vld [vmem:[#allocation6 + $0xa20] sm:$0xff]
    %v469 = vld [vmem:[#allocation6 + $0xa28] sm:$0xff]
    %v470 = vld [vmem:[#allocation6 + $0xa30] sm:$0xff]
    %v471 = vld [vmem:[#allocation6 + $0xa38] sm:$0xff]
    %v472 = vld [vmem:[#allocation6 + $0xa40] sm:$0xff]
    %v473 = vld [vmem:[#allocation6 + $0xa48] sm:$0xff]
    %v474 = vld [vmem:[#allocation6 + $0xa50] sm:$0xff]
    %v475 = vld [vmem:[#allocation6 + $0xa58] sm:$0xff]
    %v476 = vld [vmem:[#allocation6 + $0xa60] sm:$0xff]
    %v477 = vld [vmem:[#allocation6 + $0xa68] sm:$0xff]
    %v478 = vld [vmem:[#allocation6 + $0xa70] sm:$0xff]
    %v479 = vld [vmem:[#allocation6 + $0xa78] sm:$0xff]
    %v480 = vld [vmem:[#allocation6 + $0xa80] sm:$0xff]
    %v481 = vld [vmem:[#allocation6 + $0xa88] sm:$0xff]
    %v482 = vld [vmem:[#allocation6 + $0xa90] sm:$0xff]
    %v483 = vld [vmem:[#allocation6 + $0xa98] sm:$0xff]
    %v484 = vld [vmem:[#allocation6 + $0xaa0] sm:$0xff]
    %v485 = vld [vmem:[#allocation6 + $0xaa8] sm:$0xff]
    %v486 = vld [vmem:[#allocation6 + $0xab0] sm:$0xff]
    %v487 = vld [vmem:[#allocation6 + $0xab8] sm:$0xff]
    %v488 = vld [vmem:[#allocation6 + $0xac0] sm:$0xff]
    %v489 = vld [vmem:[#allocation6 + $0xac8] sm:$0xff]
    %v490 = vld [vmem:[#allocation6 + $0xad0] sm:$0xff]
    %v491 = vld [vmem:[#allocation6 + $0xad8] sm:$0xff]
    %v492 = vld [vmem:[#allocation6 + $0xae0] sm:$0xff]
    %v493 = vld [vmem:[#allocation6 + $0xae8] sm:$0xff]
    %v494 = vld [vmem:[#allocation6 + $0xaf0] sm:$0xff]
    %v495 = vld [vmem:[#allocation6 + $0xaf8] sm:$0xff]
    %v496 = vld [vmem:[#allocation6 + $0xb00] sm:$0xff]
    %v497 = vld [vmem:[#allocation6 + $0xb08] sm:$0xff]
    %v498 = vld [vmem:[#allocation6 + $0xb10] sm:$0xff]
    %v499 = vld [vmem:[#allocation6 + $0xb18] sm:$0xff]
    %v500 = vld [vmem:[#allocation6 + $0xb20] sm:$0xff]
    %v501 = vld [vmem:[#allocation6 + $0xb28] sm:$0xff]
    %v502 = vld [vmem:[#allocation6 + $0xb30] sm:$0xff]
    %v503 = vld [vmem:[#allocation6 + $0xb38] sm:$0xff]
    %v504 = vld [vmem:[#allocation6 + $0xb40] sm:$0xff]
    %v505 = vld [vmem:[#allocation6 + $0xb48] sm:$0xff]
    %v506 = vld [vmem:[#allocation6 + $0xb50] sm:$0xff]
    %v507 = vld [vmem:[#allocation6 + $0xb58] sm:$0xff]
    %v508 = vld [vmem:[#allocation6 + $0xb60] sm:$0xff]
    %v509 = vld [vmem:[#allocation6 + $0xb68] sm:$0xff]
    %v510 = vld [vmem:[#allocation6 + $0xb70] sm:$0xff]
    %v511 = vld [vmem:[#allocation6 + $0xb78] sm:$0xff]
    %v512 = vld [vmem:[#allocation6 + $0xb80] sm:$0xff]
    %v513 = vld [vmem:[#allocation6 + $0xb88] sm:$0xff]
    %v514 = vld [vmem:[#allocation6 + $0xb90] sm:$0xff]
    %v515 = vld [vmem:[#allocation6 + $0xb98] sm:$0xff]
    %v516 = vld [vmem:[#allocation6 + $0xba0] sm:$0xff]
    %v517 = vld [vmem:[#allocation6 + $0xba8] sm:$0xff]
    %v518 = vld [vmem:[#allocation6 + $0xbb0] sm:$0xff]
    %v519 = vld [vmem:[#allocation6 + $0xbb8] sm:$0xff]
    %v520 = vld [vmem:[#allocation6 + $0xbc0] sm:$0xff]
    %v521 = vld [vmem:[#allocation6 + $0xbc8] sm:$0xff]
    %v522 = vld [vmem:[#allocation6 + $0xbd0] sm:$0xff]
    %v523 = vld [vmem:[#allocation6 + $0xbd8] sm:$0xff]
    %v524 = vld [vmem:[#allocation6 + $0xbe0] sm:$0xff]
    %v525 = vld [vmem:[#allocation6 + $0xbe8] sm:$0xff]
    %v526 = vld [vmem:[#allocation6 + $0xbf0] sm:$0xff]
    %v527 = vld [vmem:[#allocation6 + $0xbf8] sm:$0xff]
    %v528 = vld [vmem:[#allocation6 + $0xc00] sm:$0xff]
    %v529 = vld [vmem:[#allocation6 + $0xc08] sm:$0xff]
    %v530 = vld [vmem:[#allocation6 + $0xc10] sm:$0xff]
    %v531 = vld [vmem:[#allocation6 + $0xc18] sm:$0xff]
    %v532 = vld [vmem:[#allocation6 + $0xc20] sm:$0xff]
    %v533 = vld [vmem:[#allocation6 + $0xc28] sm:$0xff]
    %v534 = vld [vmem:[#allocation6 + $0xc30] sm:$0xff]
    %v535 = vld [vmem:[#allocation6 + $0xc38] sm:$0xff]
    %v536 = vld [vmem:[#allocation6 + $0xc40] sm:$0xff]
    %v537 = vld [vmem:[#allocation6 + $0xc48] sm:$0xff]
    %v538 = vld [vmem:[#allocation6 + $0xc50] sm:$0xff]
    %v539 = vld [vmem:[#allocation6 + $0xc58] sm:$0xff]
    %v540 = vld [vmem:[#allocation6 + $0xc60] sm:$0xff]
    %v541 = vld [vmem:[#allocation6 + $0xc68] sm:$0xff]
    %v542 = vld [vmem:[#allocation6 + $0xc70] sm:$0xff]
    %v543 = vld [vmem:[#allocation6 + $0xc78] sm:$0xff]
    %v544 = vld [vmem:[#allocation6 + $0xc80] sm:$0xff]
    %v545 = vld [vmem:[#allocation6 + $0xc88] sm:$0xff]
    %v546 = vld [vmem:[#allocation6 + $0xc90] sm:$0xff]
    %v547 = vld [vmem:[#allocation6 + $0xc98] sm:$0xff]
    %v548 = vld [vmem:[#allocation6 + $0xca0] sm:$0xff]
    %v549 = vld [vmem:[#allocation6 + $0xca8] sm:$0xff]
    %v550 = vld [vmem:[#allocation6 + $0xcb0] sm:$0xff]
    %v551 = vld [vmem:[#allocation6 + $0xcb8] sm:$0xff]
    %v552 = vld [vmem:[#allocation6 + $0xcc0] sm:$0xff]
    %v553 = vld [vmem:[#allocation6 + $0xcc8] sm:$0xff]
    %v554 = vld [vmem:[#allocation6 + $0xcd0] sm:$0xff]
    %v555 = vld [vmem:[#allocation6 + $0xcd8] sm:$0xff]
    %v556 = vld [vmem:[#allocation6 + $0xce0] sm:$0xff]
    %v557 = vld [vmem:[#allocation6 + $0xce8] sm:$0xff]
    %v558 = vld [vmem:[#allocation6 + $0xcf0] sm:$0xff]
    %v559 = vld [vmem:[#allocation6 + $0xcf8] sm:$0xff]
    %v560 = vld [vmem:[#allocation6 + $0xd00] sm:$0xff]
    %v561 = vld [vmem:[#allocation6 + $0xd08] sm:$0xff]
    %v562 = vld [vmem:[#allocation6 + $0xd10] sm:$0xff]
    %v563 = vld [vmem:[#allocation6 + $0xd18] sm:$0xff]
    %v564 = vld [vmem:[#allocation6 + $0xd20] sm:$0xff]
    %v565 = vld [vmem:[#allocation6 + $0xd28] sm:$0xff]
    %v566 = vld [vmem:[#allocation6 + $0xd30] sm:$0xff]
    %v567 = vld [vmem:[#allocation6 + $0xd38] sm:$0xff]
    %v568 = vld [vmem:[#allocation6 + $0xd40] sm:$0xff]
    %v569 = vld [vmem:[#allocation6 + $0xd48] sm:$0xff]
    %v570 = vld [vmem:[#allocation6 + $0xd50] sm:$0xff]
    %v571 = vld [vmem:[#allocation6 + $0xd58] sm:$0xff]
    %v572 = vld [vmem:[#allocation6 + $0xd60] sm:$0xff]
    %v573 = vld [vmem:[#allocation6 + $0xd68] sm:$0xff]
    %v574 = vld [vmem:[#allocation6 + $0xd70] sm:$0xff]
    %v575 = vld [vmem:[#allocation6 + $0xd78] sm:$0xff]
    %v576 = vld [vmem:[#allocation6 + $0xd80] sm:$0xff]
    %v577 = vld [vmem:[#allocation6 + $0xd88] sm:$0xff]
    %v578 = vld [vmem:[#allocation6 + $0xd90] sm:$0xff]
    %v579 = vld [vmem:[#allocation6 + $0xd98] sm:$0xff]
    %v580 = vld [vmem:[#allocation6 + $0xda0] sm:$0xff]
    %v581 = vld [vmem:[#allocation6 + $0xda8] sm:$0xff]
    %v582 = vld [vmem:[#allocation6 + $0xdb0] sm:$0xff]
    %v583 = vld [vmem:[#allocation6 + $0xdb8] sm:$0xff]
    %v584 = vld [vmem:[#allocation6 + $0xdc0] sm:$0xff]
    %v585 = vld [vmem:[#allocation6 + $0xdc8] sm:$0xff]
    %v586 = vld [vmem:[#allocation6 + $0xdd0] sm:$0xff]
    %v587 = vld [vmem:[#allocation6 + $0xdd8] sm:$0xff]
    %v588 = vld [vmem:[#allocation6 + $0xde0] sm:$0xff]
    %v589 = vld [vmem:[#allocation6 + $0xde8] sm:$0xff]
    %v590 = vld [vmem:[#allocation6 + $0xdf0] sm:$0xff]
    %v591 = vld [vmem:[#allocation6 + $0xdf8] sm:$0xff]
    %v592 = vld [vmem:[#allocation8] sm:$0xff]
    %v594 = vlaneseq
    %v595 = vshrl.u32 %v594, 7
    %v596 = vsub.s32 0, %v595
    %v597 = vrot.slane %v592, %v596
    %v598 = vlaneseq
    %v599 = vshrl.u32 %v598, 7
    %v600 = vsub.s32 1, %v599
    %v601 = vrot.slane %v592, %v600
    %v602 = vlaneseq
    %v603 = vshrl.u32 %v602, 7
    %v604 = vsub.s32 2, %v603
    %v605 = vrot.slane %v592, %v604
    %v606 = vlaneseq
    %v607 = vshrl.u32 %v606, 7
    %v608 = vsub.s32 3, %v607
    %v609 = vrot.slane %v592, %v608
    %v610 = vlaneseq
    %v611 = vshrl.u32 %v610, 7
    %v612 = vsub.s32 4, %v611
    %v613 = vrot.slane %v592, %v612
    %v614 = vlaneseq
    %v615 = vshrl.u32 %v614, 7
    %v616 = vsub.s32 5, %v615
    %v617 = vrot.slane %v592, %v616
    %v618 = vlaneseq
    %v619 = vshrl.u32 %v618, 7
    %v620 = vsub.s32 6, %v619
    %v621 = vrot.slane %v592, %v620
    %v622 = vlaneseq
    %v623 = vshrl.u32 %v622, 7
    %v624 = vsub.s32 7, %v623
    %v625 = vrot.slane %v592, %v624
    %v642 = vunpack.c.l.b16 %v136
    %v643 = vunpack.c.h.b16 %v136
    %v644 = vunpack.c.l.b16 %v137
    %v645 = vunpack.c.h.b16 %v137
    %v646 = vunpack.c.l.b16 %v138
    %v647 = vunpack.c.h.b16 %v138
    %v648 = vunpack.c.l.b16 %v139
    %v649 = vunpack.c.l.b16 %v140
    %v650 = vunpack.c.h.b16 %v140
    %v651 = vunpack.c.l.b16 %v141
    %v652 = vunpack.c.h.b16 %v141
    %v653 = vunpack.c.l.b16 %v142
    %v654 = vunpack.c.h.b16 %v142
    %v655 = vunpack.c.l.b16 %v143
    %v656 = vpack.c.b16 %v649, %v642
    %v657 = vpack.c.b16 %v650, %v643
    %v658 = vpack.c.b16 %v651, %v644
    %v659 = vpack.c.b16 %v652, %v645
    %v660 = vpack.c.b16 %v653, %v646
    %v661 = vpack.c.b16 %v654, %v647
    %v662 = vpack.c.b16 %v655, %v648
    %v1118 = vunpack.c.l.b16 %v144
    %v1119 = vunpack.c.h.b16 %v144
    %v1120 = vunpack.c.l.b16 %v145
    %v1121 = vunpack.c.h.b16 %v145
    %v1122 = vunpack.c.l.b16 %v146
    %v1123 = vunpack.c.h.b16 %v146
    %v1124 = vunpack.c.l.b16 %v147
    %v1125 = vunpack.c.h.b16 %v147
    %v1126 = vunpack.c.l.b16 %v148
    %v1127 = vunpack.c.h.b16 %v148
    %v1128 = vunpack.c.l.b16 %v149
    %v1129 = vunpack.c.h.b16 %v149
    %v1130 = vunpack.c.l.b16 %v150
    %v1131 = vunpack.c.h.b16 %v150
    %v1132 = vunpack.c.l.b16 %v151
    %v1133 = vunpack.c.h.b16 %v151
    %v1134 = vunpack.c.l.b16 %v152
    %v1135 = vunpack.c.h.b16 %v152
    %v1136 = vunpack.c.l.b16 %v153
    %v1137 = vunpack.c.h.b16 %v153
    %v1138 = vunpack.c.l.b16 %v154
    %v1139 = vunpack.c.h.b16 %v154
    %v1140 = vunpack.c.l.b16 %v155
    %v1141 = vunpack.c.h.b16 %v155
    %v1142 = vunpack.c.l.b16 %v156
    %v1143 = vunpack.c.h.b16 %v156
    %v1144 = vunpack.c.l.b16 %v157
    %v1145 = vunpack.c.h.b16 %v157
    %v1146 = vunpack.c.l.b16 %v158
    %v1147 = vunpack.c.h.b16 %v158
    %v1148 = vunpack.c.l.b16 %v159
    %v1149 = vunpack.c.h.b16 %v159
    %v1150 = vunpack.c.l.b16 %v160
    %v1151 = vunpack.c.h.b16 %v160
    %v1152 = vunpack.c.l.b16 %v161
    %v1153 = vunpack.c.h.b16 %v161
    %v1154 = vunpack.c.l.b16 %v162
    %v1155 = vunpack.c.h.b16 %v162
    %v1156 = vunpack.c.l.b16 %v163
    %v1157 = vunpack.c.h.b16 %v163
    %v1158 = vunpack.c.l.b16 %v164
    %v1159 = vunpack.c.h.b16 %v164
    %v1160 = vunpack.c.l.b16 %v165
    %v1161 = vunpack.c.h.b16 %v165
    %v1162 = vunpack.c.l.b16 %v166
    %v1163 = vunpack.c.h.b16 %v166
    %v1164 = vunpack.c.l.b16 %v167
    %v1165 = vunpack.c.h.b16 %v167
    %v1166 = vunpack.c.l.b16 %v168
    %v1167 = vunpack.c.h.b16 %v168
    %v1168 = vunpack.c.l.b16 %v169
    %v1169 = vunpack.c.h.b16 %v169
    %v1170 = vunpack.c.l.b16 %v170
    %v1171 = vunpack.c.h.b16 %v170
    %v1172 = vunpack.c.l.b16 %v171
    %v1173 = vunpack.c.h.b16 %v171
    %v1174 = vunpack.c.l.b16 %v172
    %v1175 = vunpack.c.h.b16 %v172
    %v1176 = vunpack.c.l.b16 %v173
    %v1177 = vunpack.c.h.b16 %v173
    %v1178 = vunpack.c.l.b16 %v174
    %v1179 = vunpack.c.h.b16 %v174
    %v1180 = vunpack.c.l.b16 %v175
    %v1181 = vunpack.c.h.b16 %v175
    %v1182 = vunpack.c.l.b16 %v176
    %v1183 = vunpack.c.h.b16 %v176
    %v1184 = vunpack.c.l.b16 %v177
    %v1185 = vunpack.c.h.b16 %v177
    %v1186 = vunpack.c.l.b16 %v178
    %v1187 = vunpack.c.h.b16 %v178
    %v1188 = vunpack.c.l.b16 %v179
    %v1189 = vunpack.c.h.b16 %v179
    %v1190 = vunpack.c.l.b16 %v180
    %v1191 = vunpack.c.h.b16 %v180
    %v1192 = vunpack.c.l.b16 %v181
    %v1193 = vunpack.c.h.b16 %v181
    %v1194 = vunpack.c.l.b16 %v182
    %v1195 = vunpack.c.h.b16 %v182
    %v1196 = vunpack.c.l.b16 %v183
    %v1197 = vunpack.c.h.b16 %v183
    %v1198 = vunpack.c.l.b16 %v184
    %v1199 = vunpack.c.h.b16 %v184
    %v1200 = vunpack.c.l.b16 %v185
    %v1201 = vunpack.c.h.b16 %v185
    %v1202 = vunpack.c.l.b16 %v186
    %v1203 = vunpack.c.h.b16 %v186
    %v1204 = vunpack.c.l.b16 %v187
    %v1205 = vunpack.c.h.b16 %v187
    %v1206 = vunpack.c.l.b16 %v188
    %v1207 = vunpack.c.h.b16 %v188
    %v1208 = vunpack.c.l.b16 %v189
    %v1209 = vunpack.c.h.b16 %v189
    %v1210 = vunpack.c.l.b16 %v190
    %v1211 = vunpack.c.h.b16 %v190
    %v1212 = vunpack.c.l.b16 %v191
    %v1213 = vunpack.c.h.b16 %v191
    %v1214 = vunpack.c.l.b16 %v192
    %v1215 = vunpack.c.h.b16 %v192
    %v1216 = vunpack.c.l.b16 %v193
    %v1217 = vunpack.c.h.b16 %v193
    %v1218 = vunpack.c.l.b16 %v194
    %v1219 = vunpack.c.h.b16 %v194
    %v1220 = vunpack.c.l.b16 %v195
    %v1221 = vunpack.c.h.b16 %v195
    %v1222 = vunpack.c.l.b16 %v196
    %v1223 = vunpack.c.h.b16 %v196
    %v1224 = vunpack.c.l.b16 %v197
    %v1225 = vunpack.c.h.b16 %v197
    %v1226 = vunpack.c.l.b16 %v198
    %v1227 = vunpack.c.h.b16 %v198
    %v1228 = vunpack.c.l.b16 %v199
    %v1229 = vunpack.c.h.b16 %v199
    %v1230 = vunpack.c.l.b16 %v200
    %v1231 = vunpack.c.h.b16 %v200
    %v1232 = vunpack.c.l.b16 %v201
    %v1233 = vunpack.c.h.b16 %v201
    %v1234 = vunpack.c.l.b16 %v202
    %v1235 = vunpack.c.h.b16 %v202
    %v1236 = vunpack.c.l.b16 %v203
    %v1237 = vunpack.c.h.b16 %v203
    %v1238 = vunpack.c.l.b16 %v204
    %v1239 = vunpack.c.h.b16 %v204
    %v1240 = vunpack.c.l.b16 %v205
    %v1241 = vunpack.c.h.b16 %v205
    %v1242 = vunpack.c.l.b16 %v206
    %v1243 = vunpack.c.h.b16 %v206
    %v1244 = vunpack.c.l.b16 %v207
    %v1245 = vunpack.c.h.b16 %v207
    %v1246 = vunpack.c.l.b16 %v208
    %v1247 = vunpack.c.h.b16 %v208
    %v1248 = vunpack.c.l.b16 %v209
    %v1249 = vunpack.c.h.b16 %v209
    %v1250 = vunpack.c.l.b16 %v210
    %v1251 = vunpack.c.h.b16 %v210
    %v1252 = vunpack.c.l.b16 %v211
    %v1253 = vunpack.c.h.b16 %v211
    %v1254 = vunpack.c.l.b16 %v212
    %v1255 = vunpack.c.h.b16 %v212
    %v1256 = vunpack.c.l.b16 %v213
    %v1257 = vunpack.c.h.b16 %v213
    %v1258 = vunpack.c.l.b16 %v214
    %v1259 = vunpack.c.h.b16 %v214
    %v1260 = vunpack.c.l.b16 %v215
    %v1261 = vunpack.c.h.b16 %v215
    %v1262 = vunpack.c.l.b16 %v216
    %v1263 = vunpack.c.h.b16 %v216
    %v1264 = vunpack.c.l.b16 %v217
    %v1265 = vunpack.c.h.b16 %v217
    %v1266 = vunpack.c.l.b16 %v218
    %v1267 = vunpack.c.h.b16 %v218
    %v1268 = vunpack.c.l.b16 %v219
    %v1269 = vunpack.c.h.b16 %v219
    %v1270 = vunpack.c.l.b16 %v220
    %v1271 = vunpack.c.h.b16 %v220
    %v1272 = vunpack.c.l.b16 %v221
    %v1273 = vunpack.c.h.b16 %v221
    %v1274 = vunpack.c.l.b16 %v222
    %v1275 = vunpack.c.h.b16 %v222
    %v1276 = vunpack.c.l.b16 %v223
    %v1277 = vunpack.c.h.b16 %v223
    %v1278 = vunpack.c.l.b16 %v224
    %v1279 = vunpack.c.h.b16 %v224
    %v1280 = vunpack.c.l.b16 %v225
    %v1281 = vunpack.c.h.b16 %v225
    %v1282 = vunpack.c.l.b16 %v226
    %v1283 = vunpack.c.h.b16 %v226
    %v1284 = vunpack.c.l.b16 %v227
    %v1285 = vunpack.c.h.b16 %v227
    %v1286 = vunpack.c.l.b16 %v228
    %v1287 = vunpack.c.h.b16 %v228
    %v1288 = vunpack.c.l.b16 %v229
    %v1289 = vunpack.c.h.b16 %v229
    %v1290 = vunpack.c.l.b16 %v230
    %v1291 = vunpack.c.h.b16 %v230
    %v1292 = vunpack.c.l.b16 %v231
    %v1293 = vunpack.c.h.b16 %v231
    %v1294 = vunpack.c.l.b16 %v232
    %v1295 = vunpack.c.h.b16 %v232
    %v1296 = vunpack.c.l.b16 %v233
    %v1297 = vunpack.c.h.b16 %v233
    %v1298 = vunpack.c.l.b16 %v234
    %v1299 = vunpack.c.h.b16 %v234
    %v1300 = vunpack.c.l.b16 %v235
    %v1301 = vunpack.c.h.b16 %v235
    %v1302 = vunpack.c.l.b16 %v236
    %v1303 = vunpack.c.h.b16 %v236
    %v1304 = vunpack.c.l.b16 %v237
    %v1305 = vunpack.c.h.b16 %v237
    %v1306 = vunpack.c.l.b16 %v238
    %v1307 = vunpack.c.h.b16 %v238
    %v1308 = vunpack.c.l.b16 %v239
    %v1309 = vunpack.c.h.b16 %v239
    %v1310 = vunpack.c.l.b16 %v240
    %v1311 = vunpack.c.h.b16 %v240
    %v1312 = vunpack.c.l.b16 %v241
    %v1313 = vunpack.c.h.b16 %v241
    %v1314 = vunpack.c.l.b16 %v242
    %v1315 = vunpack.c.h.b16 %v242
    %v1316 = vunpack.c.l.b16 %v243
    %v1317 = vunpack.c.h.b16 %v243
    %v1318 = vunpack.c.l.b16 %v244
    %v1319 = vunpack.c.h.b16 %v244
    %v1320 = vunpack.c.l.b16 %v245
    %v1321 = vunpack.c.h.b16 %v245
    %v1322 = vunpack.c.l.b16 %v246
    %v1323 = vunpack.c.h.b16 %v246
    %v1324 = vunpack.c.l.b16 %v247
    %v1325 = vunpack.c.h.b16 %v247
    %v1326 = vunpack.c.l.b16 %v248
    %v1327 = vunpack.c.h.b16 %v248
    %v1328 = vunpack.c.l.b16 %v249
    %v1329 = vunpack.c.h.b16 %v249
    %v1330 = vunpack.c.l.b16 %v250
    %v1331 = vunpack.c.h.b16 %v250
    %v1332 = vunpack.c.l.b16 %v251
    %v1333 = vunpack.c.h.b16 %v251
    %v1334 = vunpack.c.l.b16 %v252
    %v1335 = vunpack.c.h.b16 %v252
    %v1336 = vunpack.c.l.b16 %v253
    %v1337 = vunpack.c.h.b16 %v253
    %v1338 = vunpack.c.l.b16 %v254
    %v1339 = vunpack.c.h.b16 %v254
    %v1340 = vunpack.c.l.b16 %v255
    %v1341 = vunpack.c.h.b16 %v255
    %v1342 = vunpack.c.l.b16 %v256
    %v1343 = vunpack.c.h.b16 %v256
    %v1344 = vunpack.c.l.b16 %v257
    %v1345 = vunpack.c.h.b16 %v257
    %v1346 = vunpack.c.l.b16 %v258
    %v1347 = vunpack.c.h.b16 %v258
    %v1348 = vunpack.c.l.b16 %v259
    %v1349 = vunpack.c.h.b16 %v259
    %v1350 = vunpack.c.l.b16 %v260
    %v1351 = vunpack.c.h.b16 %v260
    %v1352 = vunpack.c.l.b16 %v261
    %v1353 = vunpack.c.h.b16 %v261
    %v1354 = vunpack.c.l.b16 %v262
    %v1355 = vunpack.c.h.b16 %v262
    %v1356 = vunpack.c.l.b16 %v263
    %v1357 = vunpack.c.h.b16 %v263
    %v1358 = vunpack.c.l.b16 %v264
    %v1359 = vunpack.c.h.b16 %v264
    %v1360 = vunpack.c.l.b16 %v265
    %v1361 = vunpack.c.h.b16 %v265
    %v1362 = vunpack.c.l.b16 %v266
    %v1363 = vunpack.c.h.b16 %v266
    %v1364 = vunpack.c.l.b16 %v267
    %v1365 = vunpack.c.h.b16 %v267
    %v1366 = vunpack.c.l.b16 %v268
    %v1367 = vunpack.c.h.b16 %v268
    %v1368 = vunpack.c.l.b16 %v269
    %v1369 = vunpack.c.h.b16 %v269
    %v1370 = vunpack.c.l.b16 %v270
    %v1371 = vunpack.c.h.b16 %v270
    %v1372 = vunpack.c.l.b16 %v271
    %v1373 = vunpack.c.h.b16 %v271
    %v1374 = vunpack.c.l.b16 %v272
    %v1375 = vunpack.c.h.b16 %v272
    %v1376 = vunpack.c.l.b16 %v273
    %v1377 = vunpack.c.h.b16 %v273
    %v1378 = vunpack.c.l.b16 %v274
    %v1379 = vunpack.c.h.b16 %v274
    %v1380 = vunpack.c.l.b16 %v275
    %v1381 = vunpack.c.h.b16 %v275
    %v1382 = vunpack.c.l.b16 %v276
    %v1383 = vunpack.c.h.b16 %v276
    %v1384 = vunpack.c.l.b16 %v277
    %v1385 = vunpack.c.h.b16 %v277
    %v1386 = vunpack.c.l.b16 %v278
    %v1387 = vunpack.c.h.b16 %v278
    %v1388 = vunpack.c.l.b16 %v279
    %v1389 = vunpack.c.h.b16 %v279
    %v1390 = vunpack.c.l.b16 %v280
    %v1391 = vunpack.c.h.b16 %v280
    %v1392 = vunpack.c.l.b16 %v281
    %v1393 = vunpack.c.h.b16 %v281
    %v1394 = vunpack.c.l.b16 %v282
    %v1395 = vunpack.c.h.b16 %v282
    %v1396 = vunpack.c.l.b16 %v283
    %v1397 = vunpack.c.h.b16 %v283
    %v1398 = vunpack.c.l.b16 %v284
    %v1399 = vunpack.c.h.b16 %v284
    %v1400 = vunpack.c.l.b16 %v285
    %v1401 = vunpack.c.h.b16 %v285
    %v1402 = vunpack.c.l.b16 %v286
    %v1403 = vunpack.c.h.b16 %v286
    %v1404 = vunpack.c.l.b16 %v287
    %v1405 = vunpack.c.h.b16 %v287
    %v1406 = vunpack.c.l.b16 %v288
    %v1407 = vunpack.c.h.b16 %v288
    %v1408 = vunpack.c.l.b16 %v289
    %v1409 = vunpack.c.h.b16 %v289
    %v1410 = vunpack.c.l.b16 %v290
    %v1411 = vunpack.c.h.b16 %v290
    %v1412 = vunpack.c.l.b16 %v291
    %v1413 = vunpack.c.h.b16 %v291
    %v1414 = vunpack.c.l.b16 %v292
    %v1415 = vunpack.c.h.b16 %v292
    %v1416 = vunpack.c.l.b16 %v293
    %v1417 = vunpack.c.h.b16 %v293
    %v1418 = vunpack.c.l.b16 %v294
    %v1419 = vunpack.c.h.b16 %v294
    %v1420 = vunpack.c.l.b16 %v295
    %v1421 = vunpack.c.h.b16 %v295
    %v1422 = vunpack.c.l.b16 %v296
    %v1423 = vunpack.c.h.b16 %v296
    %v1424 = vunpack.c.l.b16 %v297
    %v1425 = vunpack.c.h.b16 %v297
    %v1426 = vunpack.c.l.b16 %v298
    %v1427 = vunpack.c.h.b16 %v298
    %v1428 = vunpack.c.l.b16 %v299
    %v1429 = vunpack.c.h.b16 %v299
    %v1430 = vunpack.c.l.b16 %v300
    %v1431 = vunpack.c.h.b16 %v300
    %v1432 = vunpack.c.l.b16 %v301
    %v1433 = vunpack.c.h.b16 %v301
    %v1434 = vunpack.c.l.b16 %v302
    %v1435 = vunpack.c.h.b16 %v302
    %v1436 = vunpack.c.l.b16 %v303
    %v1437 = vunpack.c.h.b16 %v303
    %v1438 = vunpack.c.l.b16 %v304
    %v1439 = vunpack.c.h.b16 %v304
    %v1440 = vunpack.c.l.b16 %v305
    %v1441 = vunpack.c.h.b16 %v305
    %v1442 = vunpack.c.l.b16 %v306
    %v1443 = vunpack.c.h.b16 %v306
    %v1444 = vunpack.c.l.b16 %v307
    %v1445 = vunpack.c.h.b16 %v307
    %v1446 = vunpack.c.l.b16 %v308
    %v1447 = vunpack.c.h.b16 %v308
    %v1448 = vunpack.c.l.b16 %v309
    %v1449 = vunpack.c.h.b16 %v309
    %v1450 = vunpack.c.l.b16 %v310
    %v1451 = vunpack.c.h.b16 %v310
    %v1452 = vunpack.c.l.b16 %v311
    %v1453 = vunpack.c.h.b16 %v311
    %v1454 = vunpack.c.l.b16 %v312
    %v1455 = vunpack.c.h.b16 %v312
    %v1456 = vunpack.c.l.b16 %v313
    %v1457 = vunpack.c.h.b16 %v313
    %v1458 = vunpack.c.l.b16 %v314
    %v1459 = vunpack.c.h.b16 %v314
    %v1460 = vunpack.c.l.b16 %v315
    %v1461 = vunpack.c.h.b16 %v315
    %v1462 = vunpack.c.l.b16 %v316
    %v1463 = vunpack.c.h.b16 %v316
    %v1464 = vunpack.c.l.b16 %v317
    %v1465 = vunpack.c.h.b16 %v317
    %v1466 = vunpack.c.l.b16 %v318
    %v1467 = vunpack.c.h.b16 %v318
    %v1468 = vunpack.c.l.b16 %v319
    %v1469 = vunpack.c.h.b16 %v319
    %v1470 = vunpack.c.l.b16 %v320
    %v1471 = vunpack.c.h.b16 %v320
    %v1472 = vunpack.c.l.b16 %v321
    %v1473 = vunpack.c.h.b16 %v321
    %v1474 = vunpack.c.l.b16 %v322
    %v1475 = vunpack.c.h.b16 %v322
    %v1476 = vunpack.c.l.b16 %v323
    %v1477 = vunpack.c.h.b16 %v323
    %v1478 = vunpack.c.l.b16 %v324
    %v1479 = vunpack.c.h.b16 %v324
    %v1480 = vunpack.c.l.b16 %v325
    %v1481 = vunpack.c.h.b16 %v325
    %v1482 = vunpack.c.l.b16 %v326
    %v1483 = vunpack.c.h.b16 %v326
    %v1484 = vunpack.c.l.b16 %v327
    %v1485 = vunpack.c.h.b16 %v327
    %v1486 = vunpack.c.l.b16 %v328
    %v1487 = vunpack.c.h.b16 %v328
    %v1488 = vunpack.c.l.b16 %v329
    %v1489 = vunpack.c.h.b16 %v329
    %v1490 = vunpack.c.l.b16 %v330
    %v1491 = vunpack.c.h.b16 %v330
    %v1492 = vunpack.c.l.b16 %v331
    %v1493 = vunpack.c.h.b16 %v331
    %v1494 = vunpack.c.l.b16 %v332
    %v1495 = vunpack.c.h.b16 %v332
    %v1496 = vunpack.c.l.b16 %v333
    %v1497 = vunpack.c.h.b16 %v333
    %v1498 = vunpack.c.l.b16 %v334
    %v1499 = vunpack.c.h.b16 %v334
    %v1500 = vunpack.c.l.b16 %v335
    %v1501 = vunpack.c.h.b16 %v335
    %v1502 = vunpack.c.l.b16 %v336
    %v1503 = vunpack.c.h.b16 %v336
    %v1504 = vunpack.c.l.b16 %v337
    %v1505 = vunpack.c.h.b16 %v337
    %v1506 = vunpack.c.l.b16 %v338
    %v1507 = vunpack.c.h.b16 %v338
    %v1508 = vunpack.c.l.b16 %v339
    %v1509 = vunpack.c.h.b16 %v339
    %v1510 = vunpack.c.l.b16 %v340
    %v1511 = vunpack.c.h.b16 %v340
    %v1512 = vunpack.c.l.b16 %v341
    %v1513 = vunpack.c.h.b16 %v341
    %v1514 = vunpack.c.l.b16 %v342
    %v1515 = vunpack.c.h.b16 %v342
    %v1516 = vunpack.c.l.b16 %v343
    %v1517 = vunpack.c.h.b16 %v343
    %v1518 = vunpack.c.l.b16 %v344
    %v1519 = vunpack.c.h.b16 %v344
    %v1520 = vunpack.c.l.b16 %v345
    %v1521 = vunpack.c.h.b16 %v345
    %v1522 = vunpack.c.l.b16 %v346
    %v1523 = vunpack.c.h.b16 %v346
    %v1524 = vunpack.c.l.b16 %v347
    %v1525 = vunpack.c.h.b16 %v347
    %v1526 = vunpack.c.l.b16 %v348
    %v1527 = vunpack.c.h.b16 %v348
    %v1528 = vunpack.c.l.b16 %v349
    %v1529 = vunpack.c.h.b16 %v349
    %v1530 = vunpack.c.l.b16 %v350
    %v1531 = vunpack.c.h.b16 %v350
    %v1532 = vunpack.c.l.b16 %v351
    %v1533 = vunpack.c.h.b16 %v351
    %v1534 = vunpack.c.l.b16 %v352
    %v1535 = vunpack.c.h.b16 %v352
    %v1536 = vunpack.c.l.b16 %v353
    %v1537 = vunpack.c.h.b16 %v353
    %v1538 = vunpack.c.l.b16 %v354
    %v1539 = vunpack.c.h.b16 %v354
    %v1540 = vunpack.c.l.b16 %v355
    %v1541 = vunpack.c.h.b16 %v355
    %v1542 = vunpack.c.l.b16 %v356
    %v1543 = vunpack.c.h.b16 %v356
    %v1544 = vunpack.c.l.b16 %v357
    %v1545 = vunpack.c.h.b16 %v357
    %v1546 = vunpack.c.l.b16 %v358
    %v1547 = vunpack.c.h.b16 %v358
    %v1548 = vunpack.c.l.b16 %v359
    %v1549 = vunpack.c.h.b16 %v359
    %v1550 = vunpack.c.l.b16 %v360
    %v1551 = vunpack.c.h.b16 %v360
    %v1552 = vunpack.c.l.b16 %v361
    %v1553 = vunpack.c.h.b16 %v361
    %v1554 = vunpack.c.l.b16 %v362
    %v1555 = vunpack.c.h.b16 %v362
    %v1556 = vunpack.c.l.b16 %v363
    %v1557 = vunpack.c.h.b16 %v363
    %v1558 = vunpack.c.l.b16 %v364
    %v1559 = vunpack.c.h.b16 %v364
    %v1560 = vunpack.c.l.b16 %v365
    %v1561 = vunpack.c.h.b16 %v365
    %v1562 = vunpack.c.l.b16 %v366
    %v1563 = vunpack.c.h.b16 %v366
    %v1564 = vunpack.c.l.b16 %v367
    %v1565 = vunpack.c.h.b16 %v367
    %v1566 = vunpack.c.l.b16 %v368
    %v1567 = vunpack.c.h.b16 %v368
    %v1568 = vunpack.c.l.b16 %v369
    %v1569 = vunpack.c.h.b16 %v369
    %v1570 = vunpack.c.l.b16 %v370
    %v1571 = vunpack.c.h.b16 %v370
    %v1572 = vunpack.c.l.b16 %v371
    %v1573 = vunpack.c.h.b16 %v371
    %v1574 = vunpack.c.l.b16 %v372
    %v1575 = vunpack.c.h.b16 %v372
    %v1576 = vunpack.c.l.b16 %v373
    %v1577 = vunpack.c.h.b16 %v373
    %v1578 = vunpack.c.l.b16 %v374
    %v1579 = vunpack.c.h.b16 %v374
    %v1580 = vunpack.c.l.b16 %v375
    %v1581 = vunpack.c.h.b16 %v375
    %v1582 = vunpack.c.l.b16 %v376
    %v1583 = vunpack.c.h.b16 %v376
    %v1584 = vunpack.c.l.b16 %v377
    %v1585 = vunpack.c.h.b16 %v377
    %v1586 = vunpack.c.l.b16 %v378
    %v1587 = vunpack.c.h.b16 %v378
    %v1588 = vunpack.c.l.b16 %v379
    %v1589 = vunpack.c.h.b16 %v379
    %v1590 = vunpack.c.l.b16 %v380
    %v1591 = vunpack.c.h.b16 %v380
    %v1592 = vunpack.c.l.b16 %v381
    %v1593 = vunpack.c.h.b16 %v381
    %v1594 = vunpack.c.l.b16 %v382
    %v1595 = vunpack.c.h.b16 %v382
    %v1596 = vunpack.c.l.b16 %v383
    %v1597 = vunpack.c.h.b16 %v383
    %v1598 = vunpack.c.l.b16 %v384
    %v1599 = vunpack.c.h.b16 %v384
    %v1600 = vunpack.c.l.b16 %v385
    %v1601 = vunpack.c.h.b16 %v385
    %v1602 = vunpack.c.l.b16 %v386
    %v1603 = vunpack.c.h.b16 %v386
    %v1604 = vunpack.c.l.b16 %v387
    %v1605 = vunpack.c.h.b16 %v387
    %v1606 = vunpack.c.l.b16 %v388
    %v1607 = vunpack.c.h.b16 %v388
    %v1608 = vunpack.c.l.b16 %v389
    %v1609 = vunpack.c.h.b16 %v389
    %v1610 = vunpack.c.l.b16 %v390
    %v1611 = vunpack.c.h.b16 %v390
    %v1612 = vunpack.c.l.b16 %v391
    %v1613 = vunpack.c.h.b16 %v391
    %v1614 = vunpack.c.l.b16 %v392
    %v1615 = vunpack.c.h.b16 %v392
    %v1616 = vunpack.c.l.b16 %v393
    %v1617 = vunpack.c.h.b16 %v393
    %v1618 = vunpack.c.l.b16 %v394
    %v1619 = vunpack.c.h.b16 %v394
    %v1620 = vunpack.c.l.b16 %v395
    %v1621 = vunpack.c.h.b16 %v395
    %v1622 = vunpack.c.l.b16 %v396
    %v1623 = vunpack.c.h.b16 %v396
    %v1624 = vunpack.c.l.b16 %v397
    %v1625 = vunpack.c.h.b16 %v397
    %v1626 = vunpack.c.l.b16 %v398
    %v1627 = vunpack.c.h.b16 %v398
    %v1628 = vunpack.c.l.b16 %v399
    %v1629 = vunpack.c.h.b16 %v399
    %v1630 = vunpack.c.l.b16 %v400
    %v1631 = vunpack.c.h.b16 %v400
    %v1632 = vunpack.c.l.b16 %v401
    %v1633 = vunpack.c.h.b16 %v401
    %v1634 = vunpack.c.l.b16 %v402
    %v1635 = vunpack.c.h.b16 %v402
    %v1636 = vunpack.c.l.b16 %v403
    %v1637 = vunpack.c.h.b16 %v403
    %v1638 = vunpack.c.l.b16 %v404
    %v1639 = vunpack.c.h.b16 %v404
    %v1640 = vunpack.c.l.b16 %v405
    %v1641 = vunpack.c.h.b16 %v405
    %v1642 = vunpack.c.l.b16 %v406
    %v1643 = vunpack.c.h.b16 %v406
    %v1644 = vunpack.c.l.b16 %v407
    %v1645 = vunpack.c.h.b16 %v407
    %v1646 = vunpack.c.l.b16 %v408
    %v1647 = vunpack.c.h.b16 %v408
    %v1648 = vunpack.c.l.b16 %v409
    %v1649 = vunpack.c.h.b16 %v409
    %v1650 = vunpack.c.l.b16 %v410
    %v1651 = vunpack.c.h.b16 %v410
    %v1652 = vunpack.c.l.b16 %v411
    %v1653 = vunpack.c.h.b16 %v411
    %v1654 = vunpack.c.l.b16 %v412
    %v1655 = vunpack.c.h.b16 %v412
    %v1656 = vunpack.c.l.b16 %v413
    %v1657 = vunpack.c.h.b16 %v413
    %v1658 = vunpack.c.l.b16 %v414
    %v1659 = vunpack.c.h.b16 %v414
    %v1660 = vunpack.c.l.b16 %v415
    %v1661 = vunpack.c.h.b16 %v415
    %v1662 = vunpack.c.l.b16 %v416
    %v1663 = vunpack.c.h.b16 %v416
    %v1664 = vunpack.c.l.b16 %v417
    %v1665 = vunpack.c.h.b16 %v417
    %v1666 = vunpack.c.l.b16 %v418
    %v1667 = vunpack.c.h.b16 %v418
    %v1668 = vunpack.c.l.b16 %v419
    %v1669 = vunpack.c.h.b16 %v419
    %v1670 = vunpack.c.l.b16 %v420
    %v1671 = vunpack.c.h.b16 %v420
    %v1672 = vunpack.c.l.b16 %v421
    %v1673 = vunpack.c.h.b16 %v421
    %v1674 = vunpack.c.l.b16 %v422
    %v1675 = vunpack.c.h.b16 %v422
    %v1676 = vunpack.c.l.b16 %v423
    %v1677 = vunpack.c.h.b16 %v423
    %v1678 = vunpack.c.l.b16 %v424
    %v1679 = vunpack.c.h.b16 %v424
    %v1680 = vunpack.c.l.b16 %v425
    %v1681 = vunpack.c.h.b16 %v425
    %v1682 = vunpack.c.l.b16 %v426
    %v1683 = vunpack.c.h.b16 %v426
    %v1684 = vunpack.c.l.b16 %v427
    %v1685 = vunpack.c.h.b16 %v427
    %v1686 = vunpack.c.l.b16 %v428
    %v1687 = vunpack.c.h.b16 %v428
    %v1688 = vunpack.c.l.b16 %v429
    %v1689 = vunpack.c.h.b16 %v429
    %v1690 = vunpack.c.l.b16 %v430
    %v1691 = vunpack.c.h.b16 %v430
    %v1692 = vunpack.c.l.b16 %v431
    %v1693 = vunpack.c.h.b16 %v431
    %v1694 = vunpack.c.l.b16 %v432
    %v1695 = vunpack.c.h.b16 %v432
    %v1696 = vunpack.c.l.b16 %v433
    %v1697 = vunpack.c.h.b16 %v433
    %v1698 = vunpack.c.l.b16 %v434
    %v1699 = vunpack.c.h.b16 %v434
    %v1700 = vunpack.c.l.b16 %v435
    %v1701 = vunpack.c.h.b16 %v435
    %v1702 = vunpack.c.l.b16 %v436
    %v1703 = vunpack.c.h.b16 %v436
    %v1704 = vunpack.c.l.b16 %v437
    %v1705 = vunpack.c.h.b16 %v437
    %v1706 = vunpack.c.l.b16 %v438
    %v1707 = vunpack.c.h.b16 %v438
    %v1708 = vunpack.c.l.b16 %v439
    %v1709 = vunpack.c.h.b16 %v439
    %v1710 = vunpack.c.l.b16 %v440
    %v1711 = vunpack.c.h.b16 %v440
    %v1712 = vunpack.c.l.b16 %v441
    %v1713 = vunpack.c.h.b16 %v441
    %v1714 = vunpack.c.l.b16 %v442
    %v1715 = vunpack.c.h.b16 %v442
    %v1716 = vunpack.c.l.b16 %v443
    %v1717 = vunpack.c.h.b16 %v443
    %v1718 = vunpack.c.l.b16 %v444
    %v1719 = vunpack.c.h.b16 %v444
    %v1720 = vunpack.c.l.b16 %v445
    %v1721 = vunpack.c.h.b16 %v445
    %v1722 = vunpack.c.l.b16 %v446
    %v1723 = vunpack.c.h.b16 %v446
    %v1724 = vunpack.c.l.b16 %v447
    %v1725 = vunpack.c.h.b16 %v447
    %v1726 = vunpack.c.l.b16 %v448
    %v1727 = vunpack.c.h.b16 %v448
    %v1728 = vunpack.c.l.b16 %v449
    %v1729 = vunpack.c.h.b16 %v449
    %v1730 = vunpack.c.l.b16 %v450
    %v1731 = vunpack.c.h.b16 %v450
    %v1732 = vunpack.c.l.b16 %v451
    %v1733 = vunpack.c.h.b16 %v451
    %v1734 = vunpack.c.l.b16 %v452
    %v1735 = vunpack.c.h.b16 %v452
    %v1736 = vunpack.c.l.b16 %v453
    %v1737 = vunpack.c.h.b16 %v453
    %v1738 = vunpack.c.l.b16 %v454
    %v1739 = vunpack.c.h.b16 %v454
    %v1740 = vunpack.c.l.b16 %v455
    %v1741 = vunpack.c.h.b16 %v455
    %v1742 = vunpack.c.l.b16 %v456
    %v1743 = vunpack.c.h.b16 %v456
    %v1744 = vunpack.c.l.b16 %v457
    %v1745 = vunpack.c.h.b16 %v457
    %v1746 = vunpack.c.l.b16 %v458
    %v1747 = vunpack.c.h.b16 %v458
    %v1748 = vunpack.c.l.b16 %v459
    %v1749 = vunpack.c.h.b16 %v459
    %v1750 = vunpack.c.l.b16 %v460
    %v1751 = vunpack.c.h.b16 %v460
    %v1752 = vunpack.c.l.b16 %v461
    %v1753 = vunpack.c.h.b16 %v461
    %v1754 = vunpack.c.l.b16 %v462
    %v1755 = vunpack.c.h.b16 %v462
    %v1756 = vunpack.c.l.b16 %v463
    %v1757 = vunpack.c.h.b16 %v463
    %v1758 = vunpack.c.l.b16 %v464
    %v1759 = vunpack.c.h.b16 %v464
    %v1760 = vunpack.c.l.b16 %v465
    %v1761 = vunpack.c.h.b16 %v465
    %v1762 = vunpack.c.l.b16 %v466
    %v1763 = vunpack.c.h.b16 %v466
    %v1764 = vunpack.c.l.b16 %v467
    %v1765 = vunpack.c.h.b16 %v467
    %v1766 = vunpack.c.l.b16 %v468
    %v1767 = vunpack.c.h.b16 %v468
    %v1768 = vunpack.c.l.b16 %v469
    %v1769 = vunpack.c.h.b16 %v469
    %v1770 = vunpack.c.l.b16 %v470
    %v1771 = vunpack.c.h.b16 %v470
    %v1772 = vunpack.c.l.b16 %v471
    %v1773 = vunpack.c.h.b16 %v471
    %v1774 = vunpack.c.l.b16 %v472
    %v1775 = vunpack.c.h.b16 %v472
    %v1776 = vunpack.c.l.b16 %v473
    %v1777 = vunpack.c.h.b16 %v473
    %v1778 = vunpack.c.l.b16 %v474
    %v1779 = vunpack.c.h.b16 %v474
    %v1780 = vunpack.c.l.b16 %v475
    %v1781 = vunpack.c.h.b16 %v475
    %v1782 = vunpack.c.l.b16 %v476
    %v1783 = vunpack.c.h.b16 %v476
    %v1784 = vunpack.c.l.b16 %v477
    %v1785 = vunpack.c.h.b16 %v477
    %v1786 = vunpack.c.l.b16 %v478
    %v1787 = vunpack.c.h.b16 %v478
    %v1788 = vunpack.c.l.b16 %v479
    %v1789 = vunpack.c.h.b16 %v479
    %v1790 = vunpack.c.l.b16 %v480
    %v1791 = vunpack.c.h.b16 %v480
    %v1792 = vunpack.c.l.b16 %v481
    %v1793 = vunpack.c.h.b16 %v481
    %v1794 = vunpack.c.l.b16 %v482
    %v1795 = vunpack.c.h.b16 %v482
    %v1796 = vunpack.c.l.b16 %v483
    %v1797 = vunpack.c.h.b16 %v483
    %v1798 = vunpack.c.l.b16 %v484
    %v1799 = vunpack.c.h.b16 %v484
    %v1800 = vunpack.c.l.b16 %v485
    %v1801 = vunpack.c.h.b16 %v485
    %v1802 = vunpack.c.l.b16 %v486
    %v1803 = vunpack.c.h.b16 %v486
    %v1804 = vunpack.c.l.b16 %v487
    %v1805 = vunpack.c.h.b16 %v487
    %v1806 = vunpack.c.l.b16 %v488
    %v1807 = vunpack.c.h.b16 %v488
    %v1808 = vunpack.c.l.b16 %v489
    %v1809 = vunpack.c.h.b16 %v489
    %v1810 = vunpack.c.l.b16 %v490
    %v1811 = vunpack.c.h.b16 %v490
    %v1812 = vunpack.c.l.b16 %v491
    %v1813 = vunpack.c.h.b16 %v491
    %v1814 = vunpack.c.l.b16 %v492
    %v1815 = vunpack.c.h.b16 %v492
    %v1816 = vunpack.c.l.b16 %v493
    %v1817 = vunpack.c.h.b16 %v493
    %v1818 = vunpack.c.l.b16 %v494
    %v1819 = vunpack.c.h.b16 %v494
    %v1820 = vunpack.c.l.b16 %v495
    %v1821 = vunpack.c.h.b16 %v495
    %v1822 = vunpack.c.l.b16 %v496
    %v1823 = vunpack.c.h.b16 %v496
    %v1824 = vunpack.c.l.b16 %v497
    %v1825 = vunpack.c.h.b16 %v497
    %v1826 = vunpack.c.l.b16 %v498
    %v1827 = vunpack.c.h.b16 %v498
    %v1828 = vunpack.c.l.b16 %v499
    %v1829 = vunpack.c.h.b16 %v499
    %v1830 = vunpack.c.l.b16 %v500
    %v1831 = vunpack.c.h.b16 %v500
    %v1832 = vunpack.c.l.b16 %v501
    %v1833 = vunpack.c.h.b16 %v501
    %v1834 = vunpack.c.l.b16 %v502
    %v1835 = vunpack.c.h.b16 %v502
    %v1836 = vunpack.c.l.b16 %v503
    %v1837 = vunpack.c.h.b16 %v503
    %v1838 = vunpack.c.l.b16 %v504
    %v1839 = vunpack.c.h.b16 %v504
    %v1840 = vunpack.c.l.b16 %v505
    %v1841 = vunpack.c.h.b16 %v505
    %v1842 = vunpack.c.l.b16 %v506
    %v1843 = vunpack.c.h.b16 %v506
    %v1844 = vunpack.c.l.b16 %v507
    %v1845 = vunpack.c.h.b16 %v507
    %v1846 = vunpack.c.l.b16 %v508
    %v1847 = vunpack.c.h.b16 %v508
    %v1848 = vunpack.c.l.b16 %v509
    %v1849 = vunpack.c.h.b16 %v509
    %v1850 = vunpack.c.l.b16 %v510
    %v1851 = vunpack.c.h.b16 %v510
    %v1852 = vunpack.c.l.b16 %v511
    %v1853 = vunpack.c.h.b16 %v511
    %v1854 = vunpack.c.l.b16 %v512
    %v1855 = vunpack.c.h.b16 %v512
    %v1856 = vunpack.c.l.b16 %v513
    %v1857 = vunpack.c.h.b16 %v513
    %v1858 = vunpack.c.l.b16 %v514
    %v1859 = vunpack.c.h.b16 %v514
    %v1860 = vunpack.c.l.b16 %v515
    %v1861 = vunpack.c.h.b16 %v515
    %v1862 = vunpack.c.l.b16 %v516
    %v1863 = vunpack.c.h.b16 %v516
    %v1864 = vunpack.c.l.b16 %v517
    %v1865 = vunpack.c.h.b16 %v517
    %v1866 = vunpack.c.l.b16 %v518
    %v1867 = vunpack.c.h.b16 %v518
    %v1868 = vunpack.c.l.b16 %v519
    %v1869 = vunpack.c.h.b16 %v519
    %v1870 = vunpack.c.l.b16 %v520
    %v1871 = vunpack.c.h.b16 %v520
    %v1872 = vunpack.c.l.b16 %v521
    %v1873 = vunpack.c.h.b16 %v521
    %v1874 = vunpack.c.l.b16 %v522
    %v1875 = vunpack.c.h.b16 %v522
    %v1876 = vunpack.c.l.b16 %v523
    %v1877 = vunpack.c.h.b16 %v523
    %v1878 = vunpack.c.l.b16 %v524
    %v1879 = vunpack.c.h.b16 %v524
    %v1880 = vunpack.c.l.b16 %v525
    %v1881 = vunpack.c.h.b16 %v525
    %v1882 = vunpack.c.l.b16 %v526
    %v1883 = vunpack.c.h.b16 %v526
    %v1884 = vunpack.c.l.b16 %v527
    %v1885 = vunpack.c.h.b16 %v527
    %v1886 = vunpack.c.l.b16 %v528
    %v1887 = vunpack.c.h.b16 %v528
    %v1888 = vunpack.c.l.b16 %v529
    %v1889 = vunpack.c.h.b16 %v529
    %v1890 = vunpack.c.l.b16 %v530
    %v1891 = vunpack.c.h.b16 %v530
    %v1892 = vunpack.c.l.b16 %v531
    %v1893 = vunpack.c.h.b16 %v531
    %v1894 = vunpack.c.l.b16 %v532
    %v1895 = vunpack.c.h.b16 %v532
    %v1896 = vunpack.c.l.b16 %v533
    %v1897 = vunpack.c.h.b16 %v533
    %v1898 = vunpack.c.l.b16 %v534
    %v1899 = vunpack.c.h.b16 %v534
    %v1900 = vunpack.c.l.b16 %v535
    %v1901 = vunpack.c.h.b16 %v535
    %v1902 = vunpack.c.l.b16 %v536
    %v1903 = vunpack.c.h.b16 %v536
    %v1904 = vunpack.c.l.b16 %v537
    %v1905 = vunpack.c.h.b16 %v537
    %v1906 = vunpack.c.l.b16 %v538
    %v1907 = vunpack.c.h.b16 %v538
    %v1908 = vunpack.c.l.b16 %v539
    %v1909 = vunpack.c.h.b16 %v539
    %v1910 = vunpack.c.l.b16 %v540
    %v1911 = vunpack.c.h.b16 %v540
    %v1912 = vunpack.c.l.b16 %v541
    %v1913 = vunpack.c.h.b16 %v541
    %v1914 = vunpack.c.l.b16 %v542
    %v1915 = vunpack.c.h.b16 %v542
    %v1916 = vunpack.c.l.b16 %v543
    %v1917 = vunpack.c.h.b16 %v543
    %v1918 = vunpack.c.l.b16 %v544
    %v1919 = vunpack.c.h.b16 %v544
    %v1920 = vunpack.c.l.b16 %v545
    %v1921 = vunpack.c.h.b16 %v545
    %v1922 = vunpack.c.l.b16 %v546
    %v1923 = vunpack.c.h.b16 %v546
    %v1924 = vunpack.c.l.b16 %v547
    %v1925 = vunpack.c.h.b16 %v547
    %v1926 = vunpack.c.l.b16 %v548
    %v1927 = vunpack.c.h.b16 %v548
    %v1928 = vunpack.c.l.b16 %v549
    %v1929 = vunpack.c.h.b16 %v549
    %v1930 = vunpack.c.l.b16 %v550
    %v1931 = vunpack.c.h.b16 %v550
    %v1932 = vunpack.c.l.b16 %v551
    %v1933 = vunpack.c.h.b16 %v551
    %v1934 = vunpack.c.l.b16 %v552
    %v1935 = vunpack.c.h.b16 %v552
    %v1936 = vunpack.c.l.b16 %v553
    %v1937 = vunpack.c.h.b16 %v553
    %v1938 = vunpack.c.l.b16 %v554
    %v1939 = vunpack.c.h.b16 %v554
    %v1940 = vunpack.c.l.b16 %v555
    %v1941 = vunpack.c.h.b16 %v555
    %v1942 = vunpack.c.l.b16 %v556
    %v1943 = vunpack.c.h.b16 %v556
    %v1944 = vunpack.c.l.b16 %v557
    %v1945 = vunpack.c.h.b16 %v557
    %v1946 = vunpack.c.l.b16 %v558
    %v1947 = vunpack.c.h.b16 %v558
    %v1948 = vunpack.c.l.b16 %v559
    %v1949 = vunpack.c.h.b16 %v559
    %v1950 = vunpack.c.l.b16 %v560
    %v1951 = vunpack.c.h.b16 %v560
    %v1952 = vunpack.c.l.b16 %v561
    %v1953 = vunpack.c.h.b16 %v561
    %v1954 = vunpack.c.l.b16 %v562
    %v1955 = vunpack.c.h.b16 %v562
    %v1956 = vunpack.c.l.b16 %v563
    %v1957 = vunpack.c.h.b16 %v563
    %v1958 = vunpack.c.l.b16 %v564
    %v1959 = vunpack.c.h.b16 %v564
    %v1960 = vunpack.c.l.b16 %v565
    %v1961 = vunpack.c.h.b16 %v565
    %v1962 = vunpack.c.l.b16 %v566
    %v1963 = vunpack.c.h.b16 %v566
    %v1964 = vunpack.c.l.b16 %v567
    %v1965 = vunpack.c.h.b16 %v567
    %v1966 = vunpack.c.l.b16 %v568
    %v1967 = vunpack.c.h.b16 %v568
    %v1968 = vunpack.c.l.b16 %v569
    %v1969 = vunpack.c.h.b16 %v569
    %v1970 = vunpack.c.l.b16 %v570
    %v1971 = vunpack.c.h.b16 %v570
    %v1972 = vunpack.c.l.b16 %v571
    %v1973 = vunpack.c.h.b16 %v571
    %v1974 = vunpack.c.l.b16 %v572
    %v1975 = vunpack.c.h.b16 %v572
    %v1976 = vunpack.c.l.b16 %v573
    %v1977 = vunpack.c.h.b16 %v573
    %v1978 = vunpack.c.l.b16 %v574
    %v1979 = vunpack.c.h.b16 %v574
    %v1980 = vunpack.c.l.b16 %v575
    %v1981 = vunpack.c.h.b16 %v575
    %v1982 = vunpack.c.l.b16 %v576
    %v1983 = vunpack.c.h.b16 %v576
    %v1984 = vunpack.c.l.b16 %v577
    %v1985 = vunpack.c.h.b16 %v577
    %v1986 = vunpack.c.l.b16 %v578
    %v1987 = vunpack.c.h.b16 %v578
    %v1988 = vunpack.c.l.b16 %v579
    %v1989 = vunpack.c.h.b16 %v579
    %v1990 = vunpack.c.l.b16 %v580
    %v1991 = vunpack.c.h.b16 %v580
    %v1992 = vunpack.c.l.b16 %v581
    %v1993 = vunpack.c.h.b16 %v581
    %v1994 = vunpack.c.l.b16 %v582
    %v1995 = vunpack.c.h.b16 %v582
    %v1996 = vunpack.c.l.b16 %v583
    %v1997 = vunpack.c.h.b16 %v583
    %v1998 = vunpack.c.l.b16 %v584
    %v1999 = vunpack.c.h.b16 %v584
    %v2000 = vunpack.c.l.b16 %v585
    %v2001 = vunpack.c.h.b16 %v585
    %v2002 = vunpack.c.l.b16 %v586
    %v2003 = vunpack.c.h.b16 %v586
    %v2004 = vunpack.c.l.b16 %v587
    %v2005 = vunpack.c.h.b16 %v587
    %v2006 = vunpack.c.l.b16 %v588
    %v2007 = vunpack.c.h.b16 %v588
    %v2008 = vunpack.c.l.b16 %v589
    %v2009 = vunpack.c.h.b16 %v589
    %v2010 = vunpack.c.l.b16 %v590
    %v2011 = vunpack.c.h.b16 %v590
    %v2012 = vunpack.c.l.b16 %v591
    %v2013 = vunpack.c.h.b16 %v591
    %v2014 = vpack.c.b16 %v1126, %v1118
    %v2015 = vpack.c.b16 %v1127, %v1119
    %v2016 = vpack.c.b16 %v1128, %v1120
    %v2017 = vpack.c.b16 %v1129, %v1121
    %v2018 = vpack.c.b16 %v1130, %v1122
    %v2019 = vpack.c.b16 %v1131, %v1123
    %v2020 = vpack.c.b16 %v1132, %v1124
    %v2021 = vpack.c.b16 %v1133, %v1125
    %v2022 = vpack.c.b16 %v1142, %v1134
    %v2023 = vpack.c.b16 %v1143, %v1135
    %v2024 = vpack.c.b16 %v1144, %v1136
    %v2025 = vpack.c.b16 %v1145, %v1137
    %v2026 = vpack.c.b16 %v1146, %v1138
    %v2027 = vpack.c.b16 %v1147, %v1139
    %v2028 = vpack.c.b16 %v1148, %v1140
    %v2029 = vpack.c.b16 %v1149, %v1141
    %v2030 = vpack.c.b16 %v1158, %v1150
    %v2031 = vpack.c.b16 %v1159, %v1151
    %v2032 = vpack.c.b16 %v1160, %v1152
    %v2033 = vpack.c.b16 %v1161, %v1153
    %v2034 = vpack.c.b16 %v1162, %v1154
    %v2035 = vpack.c.b16 %v1163, %v1155
    %v2036 = vpack.c.b16 %v1164, %v1156
    %v2037 = vpack.c.b16 %v1165, %v1157
    %v2038 = vpack.c.b16 %v1174, %v1166
    %v2039 = vpack.c.b16 %v1175, %v1167
    %v2040 = vpack.c.b16 %v1176, %v1168
    %v2041 = vpack.c.b16 %v1177, %v1169
    %v2042 = vpack.c.b16 %v1178, %v1170
    %v2043 = vpack.c.b16 %v1179, %v1171
    %v2044 = vpack.c.b16 %v1180, %v1172
    %v2045 = vpack.c.b16 %v1181, %v1173
    %v2046 = vpack.c.b16 %v1190, %v1182
    %v2047 = vpack.c.b16 %v1191, %v1183
    %v2048 = vpack.c.b16 %v1192, %v1184
    %v2049 = vpack.c.b16 %v1193, %v1185
    %v2050 = vpack.c.b16 %v1194, %v1186
    %v2051 = vpack.c.b16 %v1195, %v1187
    %v2052 = vpack.c.b16 %v1196, %v1188
    %v2053 = vpack.c.b16 %v1197, %v1189
    %v2054 = vpack.c.b16 %v1206, %v1198
    %v2055 = vpack.c.b16 %v1207, %v1199
    %v2056 = vpack.c.b16 %v1208, %v1200
    %v2057 = vpack.c.b16 %v1209, %v1201
    %v2058 = vpack.c.b16 %v1210, %v1202
    %v2059 = vpack.c.b16 %v1211, %v1203
    %v2060 = vpack.c.b16 %v1212, %v1204
    %v2061 = vpack.c.b16 %v1213, %v1205
    %v2062 = vpack.c.b16 %v1222, %v1214
    %v2063 = vpack.c.b16 %v1223, %v1215
    %v2064 = vpack.c.b16 %v1224, %v1216
    %v2065 = vpack.c.b16 %v1225, %v1217
    %v2066 = vpack.c.b16 %v1226, %v1218
    %v2067 = vpack.c.b16 %v1227, %v1219
    %v2068 = vpack.c.b16 %v1228, %v1220
    %v2069 = vpack.c.b16 %v1229, %v1221
    %v2070 = vpack.c.b16 %v1238, %v1230
    %v2071 = vpack.c.b16 %v1239, %v1231
    %v2072 = vpack.c.b16 %v1240, %v1232
    %v2073 = vpack.c.b16 %v1241, %v1233
    %v2074 = vpack.c.b16 %v1242, %v1234
    %v2075 = vpack.c.b16 %v1243, %v1235
    %v2076 = vpack.c.b16 %v1244, %v1236
    %v2077 = vpack.c.b16 %v1245, %v1237
    %v2078 = vpack.c.b16 %v1254, %v1246
    %v2079 = vpack.c.b16 %v1255, %v1247
    %v2080 = vpack.c.b16 %v1256, %v1248
    %v2081 = vpack.c.b16 %v1257, %v1249
    %v2082 = vpack.c.b16 %v1258, %v1250
    %v2083 = vpack.c.b16 %v1259, %v1251
    %v2084 = vpack.c.b16 %v1260, %v1252
    %v2085 = vpack.c.b16 %v1261, %v1253
    %v2086 = vpack.c.b16 %v1270, %v1262
    %v2087 = vpack.c.b16 %v1271, %v1263
    %v2088 = vpack.c.b16 %v1272, %v1264
    %v2089 = vpack.c.b16 %v1273, %v1265
    %v2090 = vpack.c.b16 %v1274, %v1266
    %v2091 = vpack.c.b16 %v1275, %v1267
    %v2092 = vpack.c.b16 %v1276, %v1268
    %v2093 = vpack.c.b16 %v1277, %v1269
    %v2094 = vpack.c.b16 %v1286, %v1278
    %v2095 = vpack.c.b16 %v1287, %v1279
    %v2096 = vpack.c.b16 %v1288, %v1280
    %v2097 = vpack.c.b16 %v1289, %v1281
    %v2098 = vpack.c.b16 %v1290, %v1282
    %v2099 = vpack.c.b16 %v1291, %v1283
    %v2100 = vpack.c.b16 %v1292, %v1284
    %v2101 = vpack.c.b16 %v1293, %v1285
    %v2102 = vpack.c.b16 %v1302, %v1294
    %v2103 = vpack.c.b16 %v1303, %v1295
    %v2104 = vpack.c.b16 %v1304, %v1296
    %v2105 = vpack.c.b16 %v1305, %v1297
    %v2106 = vpack.c.b16 %v1306, %v1298
    %v2107 = vpack.c.b16 %v1307, %v1299
    %v2108 = vpack.c.b16 %v1308, %v1300
    %v2109 = vpack.c.b16 %v1309, %v1301
    %v2110 = vpack.c.b16 %v1318, %v1310
    %v2111 = vpack.c.b16 %v1319, %v1311
    %v2112 = vpack.c.b16 %v1320, %v1312
    %v2113 = vpack.c.b16 %v1321, %v1313
    %v2114 = vpack.c.b16 %v1322, %v1314
    %v2115 = vpack.c.b16 %v1323, %v1315
    %v2116 = vpack.c.b16 %v1324, %v1316
    %v2117 = vpack.c.b16 %v1325, %v1317
    %v2118 = vpack.c.b16 %v1334, %v1326
    %v2119 = vpack.c.b16 %v1335, %v1327
    %v2120 = vpack.c.b16 %v1336, %v1328
    %v2121 = vpack.c.b16 %v1337, %v1329
    %v2122 = vpack.c.b16 %v1338, %v1330
    %v2123 = vpack.c.b16 %v1339, %v1331
    %v2124 = vpack.c.b16 %v1340, %v1332
    %v2125 = vpack.c.b16 %v1341, %v1333
    %v2126 = vpack.c.b16 %v1350, %v1342
    %v2127 = vpack.c.b16 %v1351, %v1343
    %v2128 = vpack.c.b16 %v1352, %v1344
    %v2129 = vpack.c.b16 %v1353, %v1345
    %v2130 = vpack.c.b16 %v1354, %v1346
    %v2131 = vpack.c.b16 %v1355, %v1347
    %v2132 = vpack.c.b16 %v1356, %v1348
    %v2133 = vpack.c.b16 %v1357, %v1349
    %v2134 = vpack.c.b16 %v1366, %v1358
    %v2135 = vpack.c.b16 %v1367, %v1359
    %v2136 = vpack.c.b16 %v1368, %v1360
    %v2137 = vpack.c.b16 %v1369, %v1361
    %v2138 = vpack.c.b16 %v1370, %v1362
    %v2139 = vpack.c.b16 %v1371, %v1363
    %v2140 = vpack.c.b16 %v1372, %v1364
    %v2141 = vpack.c.b16 %v1373, %v1365
    %v2142 = vpack.c.b16 %v1382, %v1374
    %v2143 = vpack.c.b16 %v1383, %v1375
    %v2144 = vpack.c.b16 %v1384, %v1376
    %v2145 = vpack.c.b16 %v1385, %v1377
    %v2146 = vpack.c.b16 %v1386, %v1378
    %v2147 = vpack.c.b16 %v1387, %v1379
    %v2148 = vpack.c.b16 %v1388, %v1380
    %v2149 = vpack.c.b16 %v1389, %v1381
    %v2150 = vpack.c.b16 %v1398, %v1390
    %v2151 = vpack.c.b16 %v1399, %v1391
    %v2152 = vpack.c.b16 %v1400, %v1392
    %v2153 = vpack.c.b16 %v1401, %v1393
    %v2154 = vpack.c.b16 %v1402, %v1394
    %v2155 = vpack.c.b16 %v1403, %v1395
    %v2156 = vpack.c.b16 %v1404, %v1396
    %v2157 = vpack.c.b16 %v1405, %v1397
    %v2158 = vpack.c.b16 %v1414, %v1406
    %v2159 = vpack.c.b16 %v1415, %v1407
    %v2160 = vpack.c.b16 %v1416, %v1408
    %v2161 = vpack.c.b16 %v1417, %v1409
    %v2162 = vpack.c.b16 %v1418, %v1410
    %v2163 = vpack.c.b16 %v1419, %v1411
    %v2164 = vpack.c.b16 %v1420, %v1412
    %v2165 = vpack.c.b16 %v1421, %v1413
    %v2166 = vpack.c.b16 %v1430, %v1422
    %v2167 = vpack.c.b16 %v1431, %v1423
    %v2168 = vpack.c.b16 %v1432, %v1424
    %v2169 = vpack.c.b16 %v1433, %v1425
    %v2170 = vpack.c.b16 %v1434, %v1426
    %v2171 = vpack.c.b16 %v1435, %v1427
    %v2172 = vpack.c.b16 %v1436, %v1428
    %v2173 = vpack.c.b16 %v1437, %v1429
    %v2174 = vpack.c.b16 %v1446, %v1438
    %v2175 = vpack.c.b16 %v1447, %v1439
    %v2176 = vpack.c.b16 %v1448, %v1440
    %v2177 = vpack.c.b16 %v1449, %v1441
    %v2178 = vpack.c.b16 %v1450, %v1442
    %v2179 = vpack.c.b16 %v1451, %v1443
    %v2180 = vpack.c.b16 %v1452, %v1444
    %v2181 = vpack.c.b16 %v1453, %v1445
    %v2182 = vpack.c.b16 %v1462, %v1454
    %v2183 = vpack.c.b16 %v1463, %v1455
    %v2184 = vpack.c.b16 %v1464, %v1456
    %v2185 = vpack.c.b16 %v1465, %v1457
    %v2186 = vpack.c.b16 %v1466, %v1458
    %v2187 = vpack.c.b16 %v1467, %v1459
    %v2188 = vpack.c.b16 %v1468, %v1460
    %v2189 = vpack.c.b16 %v1469, %v1461
    %v2190 = vpack.c.b16 %v1478, %v1470
    %v2191 = vpack.c.b16 %v1479, %v1471
    %v2192 = vpack.c.b16 %v1480, %v1472
    %v2193 = vpack.c.b16 %v1481, %v1473
    %v2194 = vpack.c.b16 %v1482, %v1474
    %v2195 = vpack.c.b16 %v1483, %v1475
    %v2196 = vpack.c.b16 %v1484, %v1476
    %v2197 = vpack.c.b16 %v1485, %v1477
    %v2198 = vpack.c.b16 %v1494, %v1486
    %v2199 = vpack.c.b16 %v1495, %v1487
    %v2200 = vpack.c.b16 %v1496, %v1488
    %v2201 = vpack.c.b16 %v1497, %v1489
    %v2202 = vpack.c.b16 %v1498, %v1490
    %v2203 = vpack.c.b16 %v1499, %v1491
    %v2204 = vpack.c.b16 %v1500, %v1492
    %v2205 = vpack.c.b16 %v1501, %v1493
    %v2206 = vpack.c.b16 %v1510, %v1502
    %v2207 = vpack.c.b16 %v1511, %v1503
    %v2208 = vpack.c.b16 %v1512, %v1504
    %v2209 = vpack.c.b16 %v1513, %v1505
    %v2210 = vpack.c.b16 %v1514, %v1506
    %v2211 = vpack.c.b16 %v1515, %v1507
    %v2212 = vpack.c.b16 %v1516, %v1508
    %v2213 = vpack.c.b16 %v1517, %v1509
    %v2214 = vpack.c.b16 %v1526, %v1518
    %v2215 = vpack.c.b16 %v1527, %v1519
    %v2216 = vpack.c.b16 %v1528, %v1520
    %v2217 = vpack.c.b16 %v1529, %v1521
    %v2218 = vpack.c.b16 %v1530, %v1522
    %v2219 = vpack.c.b16 %v1531, %v1523
    %v2220 = vpack.c.b16 %v1532, %v1524
    %v2221 = vpack.c.b16 %v1533, %v1525
    %v2222 = vpack.c.b16 %v1542, %v1534
    %v2223 = vpack.c.b16 %v1543, %v1535
    %v2224 = vpack.c.b16 %v1544, %v1536
    %v2225 = vpack.c.b16 %v1545, %v1537
    %v2226 = vpack.c.b16 %v1546, %v1538
    %v2227 = vpack.c.b16 %v1547, %v1539
    %v2228 = vpack.c.b16 %v1548, %v1540
    %v2229 = vpack.c.b16 %v1549, %v1541
    %v2230 = vpack.c.b16 %v1558, %v1550
    %v2231 = vpack.c.b16 %v1559, %v1551
    %v2232 = vpack.c.b16 %v1560, %v1552
    %v2233 = vpack.c.b16 %v1561, %v1553
    %v2234 = vpack.c.b16 %v1562, %v1554
    %v2235 = vpack.c.b16 %v1563, %v1555
    %v2236 = vpack.c.b16 %v1564, %v1556
    %v2237 = vpack.c.b16 %v1565, %v1557
    %v2238 = vpack.c.b16 %v1574, %v1566
    %v2239 = vpack.c.b16 %v1575, %v1567
    %v2240 = vpack.c.b16 %v1576, %v1568
    %v2241 = vpack.c.b16 %v1577, %v1569
    %v2242 = vpack.c.b16 %v1578, %v1570
    %v2243 = vpack.c.b16 %v1579, %v1571
    %v2244 = vpack.c.b16 %v1580, %v1572
    %v2245 = vpack.c.b16 %v1581, %v1573
    %v2246 = vpack.c.b16 %v1590, %v1582
    %v2247 = vpack.c.b16 %v1591, %v1583
    %v2248 = vpack.c.b16 %v1592, %v1584
    %v2249 = vpack.c.b16 %v1593, %v1585
    %v2250 = vpack.c.b16 %v1594, %v1586
    %v2251 = vpack.c.b16 %v1595, %v1587
    %v2252 = vpack.c.b16 %v1596, %v1588
    %v2253 = vpack.c.b16 %v1597, %v1589
    %v2254 = vpack.c.b16 %v1606, %v1598
    %v2255 = vpack.c.b16 %v1607, %v1599
    %v2256 = vpack.c.b16 %v1608, %v1600
    %v2257 = vpack.c.b16 %v1609, %v1601
    %v2258 = vpack.c.b16 %v1610, %v1602
    %v2259 = vpack.c.b16 %v1611, %v1603
    %v2260 = vpack.c.b16 %v1612, %v1604
    %v2261 = vpack.c.b16 %v1613, %v1605
    %v2262 = vpack.c.b16 %v1622, %v1614
    %v2263 = vpack.c.b16 %v1623, %v1615
    %v2264 = vpack.c.b16 %v1624, %v1616
    %v2265 = vpack.c.b16 %v1625, %v1617
    %v2266 = vpack.c.b16 %v1626, %v1618
    %v2267 = vpack.c.b16 %v1627, %v1619
    %v2268 = vpack.c.b16 %v1628, %v1620
    %v2269 = vpack.c.b16 %v1629, %v1621
    %v2270 = vpack.c.b16 %v1638, %v1630
    %v2271 = vpack.c.b16 %v1639, %v1631
    %v2272 = vpack.c.b16 %v1640, %v1632
    %v2273 = vpack.c.b16 %v1641, %v1633
    %v2274 = vpack.c.b16 %v1642, %v1634
    %v2275 = vpack.c.b16 %v1643, %v1635
    %v2276 = vpack.c.b16 %v1644, %v1636
    %v2277 = vpack.c.b16 %v1645, %v1637
    %v2278 = vpack.c.b16 %v1654, %v1646
    %v2279 = vpack.c.b16 %v1655, %v1647
    %v2280 = vpack.c.b16 %v1656, %v1648
    %v2281 = vpack.c.b16 %v1657, %v1649
    %v2282 = vpack.c.b16 %v1658, %v1650
    %v2283 = vpack.c.b16 %v1659, %v1651
    %v2284 = vpack.c.b16 %v1660, %v1652
    %v2285 = vpack.c.b16 %v1661, %v1653
    %v2286 = vpack.c.b16 %v1670, %v1662
    %v2287 = vpack.c.b16 %v1671, %v1663
    %v2288 = vpack.c.b16 %v1672, %v1664
    %v2289 = vpack.c.b16 %v1673, %v1665
    %v2290 = vpack.c.b16 %v1674, %v1666
    %v2291 = vpack.c.b16 %v1675, %v1667
    %v2292 = vpack.c.b16 %v1676, %v1668
    %v2293 = vpack.c.b16 %v1677, %v1669
    %v2294 = vpack.c.b16 %v1686, %v1678
    %v2295 = vpack.c.b16 %v1687, %v1679
    %v2296 = vpack.c.b16 %v1688, %v1680
    %v2297 = vpack.c.b16 %v1689, %v1681
    %v2298 = vpack.c.b16 %v1690, %v1682
    %v2299 = vpack.c.b16 %v1691, %v1683
    %v2300 = vpack.c.b16 %v1692, %v1684
    %v2301 = vpack.c.b16 %v1693, %v1685
    %v2302 = vpack.c.b16 %v1702, %v1694
    %v2303 = vpack.c.b16 %v1703, %v1695
    %v2304 = vpack.c.b16 %v1704, %v1696
    %v2305 = vpack.c.b16 %v1705, %v1697
    %v2306 = vpack.c.b16 %v1706, %v1698
    %v2307 = vpack.c.b16 %v1707, %v1699
    %v2308 = vpack.c.b16 %v1708, %v1700
    %v2309 = vpack.c.b16 %v1709, %v1701
    %v2310 = vpack.c.b16 %v1718, %v1710
    %v2311 = vpack.c.b16 %v1719, %v1711
    %v2312 = vpack.c.b16 %v1720, %v1712
    %v2313 = vpack.c.b16 %v1721, %v1713
    %v2314 = vpack.c.b16 %v1722, %v1714
    %v2315 = vpack.c.b16 %v1723, %v1715
    %v2316 = vpack.c.b16 %v1724, %v1716
    %v2317 = vpack.c.b16 %v1725, %v1717
    %v2318 = vpack.c.b16 %v1734, %v1726
    %v2319 = vpack.c.b16 %v1735, %v1727
    %v2320 = vpack.c.b16 %v1736, %v1728
    %v2321 = vpack.c.b16 %v1737, %v1729
    %v2322 = vpack.c.b16 %v1738, %v1730
    %v2323 = vpack.c.b16 %v1739, %v1731
    %v2324 = vpack.c.b16 %v1740, %v1732
    %v2325 = vpack.c.b16 %v1741, %v1733
    %v2326 = vpack.c.b16 %v1750, %v1742
    %v2327 = vpack.c.b16 %v1751, %v1743
    %v2328 = vpack.c.b16 %v1752, %v1744
    %v2329 = vpack.c.b16 %v1753, %v1745
    %v2330 = vpack.c.b16 %v1754, %v1746
    %v2331 = vpack.c.b16 %v1755, %v1747
    %v2332 = vpack.c.b16 %v1756, %v1748
    %v2333 = vpack.c.b16 %v1757, %v1749
    %v2334 = vpack.c.b16 %v1766, %v1758
    %v2335 = vpack.c.b16 %v1767, %v1759
    %v2336 = vpack.c.b16 %v1768, %v1760
    %v2337 = vpack.c.b16 %v1769, %v1761
    %v2338 = vpack.c.b16 %v1770, %v1762
    %v2339 = vpack.c.b16 %v1771, %v1763
    %v2340 = vpack.c.b16 %v1772, %v1764
    %v2341 = vpack.c.b16 %v1773, %v1765
    %v2342 = vpack.c.b16 %v1782, %v1774
    %v2343 = vpack.c.b16 %v1783, %v1775
    %v2344 = vpack.c.b16 %v1784, %v1776
    %v2345 = vpack.c.b16 %v1785, %v1777
    %v2346 = vpack.c.b16 %v1786, %v1778
    %v2347 = vpack.c.b16 %v1787, %v1779
    %v2348 = vpack.c.b16 %v1788, %v1780
    %v2349 = vpack.c.b16 %v1789, %v1781
    %v2350 = vpack.c.b16 %v1798, %v1790
    %v2351 = vpack.c.b16 %v1799, %v1791
    %v2352 = vpack.c.b16 %v1800, %v1792
    %v2353 = vpack.c.b16 %v1801, %v1793
    %v2354 = vpack.c.b16 %v1802, %v1794
    %v2355 = vpack.c.b16 %v1803, %v1795
    %v2356 = vpack.c.b16 %v1804, %v1796
    %v2357 = vpack.c.b16 %v1805, %v1797
    %v2358 = vpack.c.b16 %v1814, %v1806
    %v2359 = vpack.c.b16 %v1815, %v1807
    %v2360 = vpack.c.b16 %v1816, %v1808
    %v2361 = vpack.c.b16 %v1817, %v1809
    %v2362 = vpack.c.b16 %v1818, %v1810
    %v2363 = vpack.c.b16 %v1819, %v1811
    %v2364 = vpack.c.b16 %v1820, %v1812
    %v2365 = vpack.c.b16 %v1821, %v1813
    %v2366 = vpack.c.b16 %v1830, %v1822
    %v2367 = vpack.c.b16 %v1831, %v1823
    %v2368 = vpack.c.b16 %v1832, %v1824
    %v2369 = vpack.c.b16 %v1833, %v1825
    %v2370 = vpack.c.b16 %v1834, %v1826
    %v2371 = vpack.c.b16 %v1835, %v1827
    %v2372 = vpack.c.b16 %v1836, %v1828
    %v2373 = vpack.c.b16 %v1837, %v1829
    %v2374 = vpack.c.b16 %v1846, %v1838
    %v2375 = vpack.c.b16 %v1847, %v1839
    %v2376 = vpack.c.b16 %v1848, %v1840
    %v2377 = vpack.c.b16 %v1849, %v1841
    %v2378 = vpack.c.b16 %v1850, %v1842
    %v2379 = vpack.c.b16 %v1851, %v1843
    %v2380 = vpack.c.b16 %v1852, %v1844
    %v2381 = vpack.c.b16 %v1853, %v1845
    %v2382 = vpack.c.b16 %v1862, %v1854
    %v2383 = vpack.c.b16 %v1863, %v1855
    %v2384 = vpack.c.b16 %v1864, %v1856
    %v2385 = vpack.c.b16 %v1865, %v1857
    %v2386 = vpack.c.b16 %v1866, %v1858
    %v2387 = vpack.c.b16 %v1867, %v1859
    %v2388 = vpack.c.b16 %v1868, %v1860
    %v2389 = vpack.c.b16 %v1869, %v1861
    %v2390 = vpack.c.b16 %v1878, %v1870
    %v2391 = vpack.c.b16 %v1879, %v1871
    %v2392 = vpack.c.b16 %v1880, %v1872
    %v2393 = vpack.c.b16 %v1881, %v1873
    %v2394 = vpack.c.b16 %v1882, %v1874
    %v2395 = vpack.c.b16 %v1883, %v1875
    %v2396 = vpack.c.b16 %v1884, %v1876
    %v2397 = vpack.c.b16 %v1885, %v1877
    %v2398 = vpack.c.b16 %v1894, %v1886
    %v2399 = vpack.c.b16 %v1895, %v1887
    %v2400 = vpack.c.b16 %v1896, %v1888
    %v2401 = vpack.c.b16 %v1897, %v1889
    %v2402 = vpack.c.b16 %v1898, %v1890
    %v2403 = vpack.c.b16 %v1899, %v1891
    %v2404 = vpack.c.b16 %v1900, %v1892
    %v2405 = vpack.c.b16 %v1901, %v1893
    %v2406 = vpack.c.b16 %v1910, %v1902
    %v2407 = vpack.c.b16 %v1911, %v1903
    %v2408 = vpack.c.b16 %v1912, %v1904
    %v2409 = vpack.c.b16 %v1913, %v1905
    %v2410 = vpack.c.b16 %v1914, %v1906
    %v2411 = vpack.c.b16 %v1915, %v1907
    %v2412 = vpack.c.b16 %v1916, %v1908
    %v2413 = vpack.c.b16 %v1917, %v1909
    %v2414 = vpack.c.b16 %v1926, %v1918
    %v2415 = vpack.c.b16 %v1927, %v1919
    %v2416 = vpack.c.b16 %v1928, %v1920
    %v2417 = vpack.c.b16 %v1929, %v1921
    %v2418 = vpack.c.b16 %v1930, %v1922
    %v2419 = vpack.c.b16 %v1931, %v1923
    %v2420 = vpack.c.b16 %v1932, %v1924
    %v2421 = vpack.c.b16 %v1933, %v1925
    %v2422 = vpack.c.b16 %v1942, %v1934
    %v2423 = vpack.c.b16 %v1943, %v1935
    %v2424 = vpack.c.b16 %v1944, %v1936
    %v2425 = vpack.c.b16 %v1945, %v1937
    %v2426 = vpack.c.b16 %v1946, %v1938
    %v2427 = vpack.c.b16 %v1947, %v1939
    %v2428 = vpack.c.b16 %v1948, %v1940
    %v2429 = vpack.c.b16 %v1949, %v1941
    %v2430 = vpack.c.b16 %v1958, %v1950
    %v2431 = vpack.c.b16 %v1959, %v1951
    %v2432 = vpack.c.b16 %v1960, %v1952
    %v2433 = vpack.c.b16 %v1961, %v1953
    %v2434 = vpack.c.b16 %v1962, %v1954
    %v2435 = vpack.c.b16 %v1963, %v1955
    %v2436 = vpack.c.b16 %v1964, %v1956
    %v2437 = vpack.c.b16 %v1965, %v1957
    %v2438 = vpack.c.b16 %v1974, %v1966
    %v2439 = vpack.c.b16 %v1975, %v1967
    %v2440 = vpack.c.b16 %v1976, %v1968
    %v2441 = vpack.c.b16 %v1977, %v1969
    %v2442 = vpack.c.b16 %v1978, %v1970
    %v2443 = vpack.c.b16 %v1979, %v1971
    %v2444 = vpack.c.b16 %v1980, %v1972
    %v2445 = vpack.c.b16 %v1981, %v1973
    %v2446 = vpack.c.b16 %v1990, %v1982
    %v2447 = vpack.c.b16 %v1991, %v1983
    %v2448 = vpack.c.b16 %v1992, %v1984
    %v2449 = vpack.c.b16 %v1993, %v1985
    %v2450 = vpack.c.b16 %v1994, %v1986
    %v2451 = vpack.c.b16 %v1995, %v1987
    %v2452 = vpack.c.b16 %v1996, %v1988
    %v2453 = vpack.c.b16 %v1997, %v1989
    %v2454 = vpack.c.b16 %v2006, %v1998
    %v2455 = vpack.c.b16 %v2007, %v1999
    %v2456 = vpack.c.b16 %v2008, %v2000
    %v2457 = vpack.c.b16 %v2009, %v2001
    %v2458 = vpack.c.b16 %v2010, %v2002
    %v2459 = vpack.c.b16 %v2011, %v2003
    %v2460 = vpack.c.b16 %v2012, %v2004
    %v2461 = vpack.c.b16 %v2013, %v2005
    %2910 = vmatprep.subr.bf16.mxu0 %v2015
    %2911 = vmatpush1.bf16.msra.mxu0 %v2014
    %2912 = vmatprep.subr.bf16.mxu0 %v2023
    %2913 = vmatpush1.bf16.msra.mxu0 %v2022
    %2914 = vmatprep.subr.bf16.mxu0 %v2031
    %2915 = vmatpush1.bf16.msra.mxu0 %v2030
    %2916 = vmatprep.subr.bf16.mxu0 %v2039
    %2917 = vmatpush1.bf16.msra.mxu0 %v2038
    %2918 = vmatprep.subr.bf16.mxu0 %v2047
    %2919 = vmatpush1.bf16.msra.mxu0 %v2046
    %2920 = vmatprep.subr.bf16.mxu0 %v2055
    %2921 = vmatpush1.bf16.msra.mxu0 %v2054
    %2922 = vmatprep.subr.bf16.mxu0 %v2063
    %2923 = vmatpush1.bf16.msra.mxu0 %v2062
    %2924 = vmatprep.subr.bf16.mxu0 %v2071
    %2925 = vmatpush1.bf16.msra.mxu0 %v2070
    %2926 = vmatprep.subr.bf16.mxu0 %v2079
    %2927 = vmatpush1.bf16.msra.mxu0 %v2078
    %2928 = vmatprep.subr.bf16.mxu0 %v2087
    %2929 = vmatpush1.bf16.msra.mxu0 %v2086
    %2930 = vmatprep.subr.bf16.mxu0 %v2095
    %2931 = vmatpush1.bf16.msra.mxu0 %v2094
    %2932 = vmatprep.subr.bf16.mxu0 %v2103
    %2933 = vmatpush1.bf16.msra.mxu0 %v2102
    %2934 = vmatprep.subr.bf16.mxu0 %v2111
    %2935 = vmatpush1.bf16.msra.mxu0 %v2110
    %2936 = vmatprep.subr.bf16.mxu0 %v2119
    %2937 = vmatpush1.bf16.msra.mxu0 %v2118
    %2938 = vmatprep.subr.bf16.mxu0 %v2127
    %2939 = vmatpush1.bf16.msra.mxu0 %v2126
    %2940 = vmatprep.subr.bf16.mxu0 %v2135
    %2941 = vmatpush1.bf16.msra.mxu0 %v2134
    %2942 = vmatprep.mubr.bf16.mxu0 %v657
    %2943 = vmatmul.mubr.bf16.gmra.mrb[0].mxu0 %v656
    %v2944 = vpop.f32.mrb[0].mxu0
    %v2945 = vadd.f32 %v597, %v2944
    %v2946 = vpop.f32.mrb[0].mxu0
    %v2947 = vadd.f32 %v601, %v2946
    %v2948 = vpop.f32.mrb[0].mxu0
    %v2949 = vadd.f32 %v597, %v2948
    %v2950 = vpop.f32.mrb[0].mxu0
    %v2951 = vadd.f32 %v601, %v2950
    %2952 = vdwg.mxu0
    %2953 = vmatprep.subr.bf16.mxu0 %v2143
    %2954 = vmatpush1.bf16.msra.mxu0 %v2142
    %2955 = vmatprep.subr.bf16.mxu0 %v2151
    %2956 = vmatpush1.bf16.msra.mxu0 %v2150
    %2957 = vmatprep.subr.bf16.mxu0 %v2159
    %2958 = vmatpush1.bf16.msra.mxu0 %v2158
    %2959 = vmatprep.subr.bf16.mxu0 %v2167
    %2960 = vmatpush1.bf16.msra.mxu0 %v2166
    %2961 = vmatprep.subr.bf16.mxu0 %v2175
    %2962 = vmatpush1.bf16.msra.mxu0 %v2174
    %2963 = vmatprep.subr.bf16.mxu0 %v2183
    %2964 = vmatpush1.bf16.msra.mxu0 %v2182
    %2965 = vmatprep.subr.bf16.mxu0 %v2191
    %2966 = vmatpush1.bf16.msra.mxu0 %v2190
    %2967 = vmatprep.subr.bf16.mxu0 %v2199
    %2968 = vmatpush1.bf16.msra.mxu0 %v2198
    %2969 = vmatprep.subr.bf16.mxu0 %v2207
    %2970 = vmatpush1.bf16.msra.mxu0 %v2206
    %2971 = vmatprep.subr.bf16.mxu0 %v2215
    %2972 = vmatpush1.bf16.msra.mxu0 %v2214
    %2973 = vmatprep.subr.bf16.mxu0 %v2223
    %2974 = vmatpush1.bf16.msra.mxu0 %v2222
    %2975 = vmatprep.subr.bf16.mxu0 %v2231
    %2976 = vmatpush1.bf16.msra.mxu0 %v2230
    %2977 = vmatprep.subr.bf16.mxu0 %v2239
    %2978 = vmatpush1.bf16.msra.mxu0 %v2238
    %2979 = vmatprep.subr.bf16.mxu0 %v2247
    %2980 = vmatpush1.bf16.msra.mxu0 %v2246
    %2981 = vmatprep.subr.bf16.mxu0 %v2255
    %2982 = vmatpush1.bf16.msra.mxu0 %v2254
    %2983 = vmatprep.subr.bf16.mxu0 %v2263
    %2984 = vmatpush1.bf16.msra.mxu0 %v2262
    %2985 = vmatprep.mubr.bf16.mxu0 %v659
    %2986 = vmatmul.mubr.bf16.gmra.mrb[0].mxu0 %v658
    %v2987 = vpop.f32.mrb[0].mxu0
    %v2988 = vadd.f32 %v2945, %v2987
    %v2989 = vpop.f32.mrb[0].mxu0
    %v2990 = vadd.f32 %v2947, %v2989
    %v2991 = vpop.f32.mrb[0].mxu0
    %v2992 = vadd.f32 %v2949, %v2991
    %v2993 = vpop.f32.mrb[0].mxu0
    %v2994 = vadd.f32 %v2951, %v2993
    %2995 = vdwg.mxu0
    %2996 = vmatprep.subr.bf16.mxu0 %v2271
    %2997 = vmatpush1.bf16.msra.mxu0 %v2270
    %2998 = vmatprep.subr.bf16.mxu0 %v2279
    %2999 = vmatpush1.bf16.msra.mxu0 %v2278
    %3000 = vmatprep.subr.bf16.mxu0 %v2287
    %3001 = vmatpush1.bf16.msra.mxu0 %v2286
    %3002 = vmatprep.subr.bf16.mxu0 %v2295
    %3003 = vmatpush1.bf16.msra.mxu0 %v2294
    %3004 = vmatprep.subr.bf16.mxu0 %v2303
    %3005 = vmatpush1.bf16.msra.mxu0 %v2302
    %3006 = vmatprep.subr.bf16.mxu0 %v2311
    %3007 = vmatpush1.bf16.msra.mxu0 %v2310
    %3008 = vmatprep.subr.bf16.mxu0 %v2319
    %3009 = vmatpush1.bf16.msra.mxu0 %v2318
    %3010 = vmatprep.subr.bf16.mxu0 %v2327
    %3011 = vmatpush1.bf16.msra.mxu0 %v2326
    %3012 = vmatprep.subr.bf16.mxu0 %v2335
    %3013 = vmatpush1.bf16.msra.mxu0 %v2334
    %3014 = vmatprep.subr.bf16.mxu0 %v2343
    %3015 = vmatpush1.bf16.msra.mxu0 %v2342
    %3016 = vmatprep.subr.bf16.mxu0 %v2351
    %3017 = vmatpush1.bf16.msra.mxu0 %v2350
    %3018 = vmatprep.subr.bf16.mxu0 %v2359
    %3019 = vmatpush1.bf16.msra.mxu0 %v2358
    %3020 = vmatprep.subr.bf16.mxu0 %v2367
    %3021 = vmatpush1.bf16.msra.mxu0 %v2366
    %3022 = vmatprep.subr.bf16.mxu0 %v2375
    %3023 = vmatpush1.bf16.msra.mxu0 %v2374
    %3024 = vmatprep.subr.bf16.mxu0 %v2383
    %3025 = vmatpush1.bf16.msra.mxu0 %v2382
    %3026 = vmatprep.subr.bf16.mxu0 %v2391
    %3027 = vmatpush1.bf16.msra.mxu0 %v2390
    %3028 = vmatprep.mubr.bf16.mxu0 %v661
    %3029 = vmatmul.mubr.bf16.gmra.mrb[0].mxu0 %v660
    %v3030 = vpop.f32.mrb[0].mxu0
    %v3031 = vadd.f32 %v2988, %v3030
    %v3032 = vpop.f32.mrb[0].mxu0
    %v3033 = vadd.f32 %v2990, %v3032
    %v3034 = vpop.f32.mrb[0].mxu0
    %v3035 = vadd.f32 %v2992, %v3034
    %v3036 = vpop.f32.mrb[0].mxu0
    %v3037 = vadd.f32 %v2994, %v3036
    %3038 = vdwg.mxu0
    %3039 = vmatprep.subr.bf16.mxu0 %v2399
    %3040 = vmatpush1.bf16.msra.mxu0 %v2398
    %3041 = vmatprep.subr.bf16.mxu0 %v2407
    %3042 = vmatpush1.bf16.msra.mxu0 %v2406
    %3043 = vmatprep.subr.bf16.mxu0 %v2415
    %3044 = vmatpush1.bf16.msra.mxu0 %v2414
    %3045 = vmatprep.subr.bf16.mxu0 %v2423
    %3046 = vmatpush1.bf16.msra.mxu0 %v2422
    %3047 = vmatprep.subr.bf16.mxu0 %v2431
    %3048 = vmatpush1.bf16.msra.mxu0 %v2430
    %3049 = vmatprep.subr.bf16.mxu0 %v2439
    %3050 = vmatpush1.bf16.msra.mxu0 %v2438
    %3051 = vmatprep.subr.bf16.mxu0 %v2447
    %3052 = vmatpush1.bf16.msra.mxu0 %v2446
    %3053 = vmatprep.subr.bf16.mxu0 %v2455
    %3054 = vmatpush1.bf16.msra.mxu0 %v2454
    %3055 = vmatprep.subr.bf16.mxu0 0
    %3056 = vmatpush1.bf16.msra.mxu0 0
    %3057 = vmatprep.subr.bf16.mxu0 0
    %3058 = vmatpush1.bf16.msra.mxu0 0
    %3059 = vmatprep.subr.bf16.mxu0 0
    %3060 = vmatpush1.bf16.msra.mxu0 0
    %3061 = vmatprep.subr.bf16.mxu0 0
    %3062 = vmatpush1.bf16.msra.mxu0 0
    %3063 = vmatprep.subr.bf16.mxu0 0
    %3064 = vmatpush1.bf16.msra.mxu0 0
    %3065 = vmatprep.subr.bf16.mxu0 0
    %3066 = vmatpush1.bf16.msra.mxu0 0
    %3067 = vmatprep.subr.bf16.mxu0 0
    %3068 = vmatpush1.bf16.msra.mxu0 0
    %3069 = vmatprep.subr.bf16.mxu0 0
    %3070 = vmatpush1.bf16.msra.mxu0 0
    %3071 = vmatprep.mubr.bf16.mxu0 0
    %3072 = vmatmul.mubr.bf16.gmra.mrb[0].mxu0 %v662
    %v3073 = vpop.f32.mrb[0].mxu0
    %v3074 = vadd.f32 %v3031, %v3073
    %v3075 = vpop.f32.mrb[0].mxu0
    %v3076 = vadd.f32 %v3033, %v3075
    %v3077 = vpop.f32.mrb[0].mxu0
    %v3078 = vadd.f32 %v3035, %v3077
    %v3079 = vpop.f32.mrb[0].mxu0
    %v3080 = vadd.f32 %v3037, %v3079
    %3081 = vdwg.mxu0
    %3082 = vmatprep.subr.bf16.mxu0 %v2017
    %3083 = vmatpush1.bf16.msra.mxu0 %v2016
    %3084 = vmatprep.subr.bf16.mxu0 %v2025
    %3085 = vmatpush1.bf16.msra.mxu0 %v2024
    %3086 = vmatprep.subr.bf16.mxu0 %v2033
    %3087 = vmatpush1.bf16.msra.mxu0 %v2032
    %3088 = vmatprep.subr.bf16.mxu0 %v2041
    %3089 = vmatpush1.bf16.msra.mxu0 %v2040
    %3090 = vmatprep.subr.bf16.mxu0 %v2049
    %3091 = vmatpush1.bf16.msra.mxu0 %v2048
    %3092 = vmatprep.subr.bf16.mxu0 %v2057
    %3093 = vmatpush1.bf16.msra.mxu0 %v2056
    %3094 = vmatprep.subr.bf16.mxu0 %v2065
    %3095 = vmatpush1.bf16.msra.mxu0 %v2064
    %3096 = vmatprep.subr.bf16.mxu0 %v2073
    %3097 = vmatpush1.bf16.msra.mxu0 %v2072
    %3098 = vmatprep.subr.bf16.mxu0 %v2081
    %3099 = vmatpush1.bf16.msra.mxu0 %v2080
    %3100 = vmatprep.subr.bf16.mxu0 %v2089
    %3101 = vmatpush1.bf16.msra.mxu0 %v2088
    %3102 = vmatprep.subr.bf16.mxu0 %v2097
    %3103 = vmatpush1.bf16.msra.mxu0 %v2096
    %3104 = vmatprep.subr.bf16.mxu0 %v2105
    %3105 = vmatpush1.bf16.msra.mxu0 %v2104
    %3106 = vmatprep.subr.bf16.mxu0 %v2113
    %3107 = vmatpush1.bf16.msra.mxu0 %v2112
    %3108 = vmatprep.subr.bf16.mxu0 %v2121
    %3109 = vmatpush1.bf16.msra.mxu0 %v2120
    %3110 = vmatprep.subr.bf16.mxu0 %v2129
    %3111 = vmatpush1.bf16.msra.mxu0 %v2128
    %3112 = vmatprep.subr.bf16.mxu0 %v2137
    %3113 = vmatpush1.bf16.msra.mxu0 %v2136
    %3114 = vmatprep.mubr.bf16.mxu0 %v657
    %3115 = vmatmul.mubr.bf16.gmra.mrb[0].mxu0 %v656
    %v3116 = vpop.f32.mrb[0].mxu0
    %v3117 = vadd.f32 %v605, %v3116
    %v3118 = vpop.f32.mrb[0].mxu0
    %v3119 = vadd.f32 %v609, %v3118
    %v3120 = vpop.f32.mrb[0].mxu0
    %v3121 = vadd.f32 %v605, %v3120
    %v3122 = vpop.f32.mrb[0].mxu0
    %v3123 = vadd.f32 %v609, %v3122
    %3124 = vdwg.mxu0
    %3125 = vmatprep.subr.bf16.mxu0 %v2145
    %3126 = vmatpush1.bf16.msra.mxu0 %v2144
    %3127 = vmatprep.subr.bf16.mxu0 %v2153
    %3128 = vmatpush1.bf16.msra.mxu0 %v2152
    %3129 = vmatprep.subr.bf16.mxu0 %v2161
    %3130 = vmatpush1.bf16.msra.mxu0 %v2160
    %3131 = vmatprep.subr.bf16.mxu0 %v2169
    %3132 = vmatpush1.bf16.msra.mxu0 %v2168
    %3133 = vmatprep.subr.bf16.mxu0 %v2177
    %3134 = vmatpush1.bf16.msra.mxu0 %v2176
    %3135 = vmatprep.subr.bf16.mxu0 %v2185
    %3136 = vmatpush1.bf16.msra.mxu0 %v2184
    %3137 = vmatprep.subr.bf16.mxu0 %v2193
    %3138 = vmatpush1.bf16.msra.mxu0 %v2192
    %3139 = vmatprep.subr.bf16.mxu0 %v2201
    %3140 = vmatpush1.bf16.msra.mxu0 %v2200
    %3141 = vmatprep.subr.bf16.mxu0 %v2209
    %3142 = vmatpush1.bf16.msra.mxu0 %v2208
    %3143 = vmatprep.subr.bf16.mxu0 %v2217
    %3144 = vmatpush1.bf16.msra.mxu0 %v2216
    %3145 = vmatprep.subr.bf16.mxu0 %v2225
    %3146 = vmatpush1.bf16.msra.mxu0 %v2224
    %3147 = vmatprep.subr.bf16.mxu0 %v2233
    %3148 = vmatpush1.bf16.msra.mxu0 %v2232
    %3149 = vmatprep.subr.bf16.mxu0 %v2241
    %3150 = vmatpush1.bf16.msra.mxu0 %v2240
    %3151 = vmatprep.subr.bf16.mxu0 %v2249
    %3152 = vmatpush1.bf16.msra.mxu0 %v2248
    %3153 = vmatprep.subr.bf16.mxu0 %v2257
    %3154 = vmatpush1.bf16.msra.mxu0 %v2256
    %3155 = vmatprep.subr.bf16.mxu0 %v2265
    %3156 = vmatpush1.bf16.msra.mxu0 %v2264
    %3157 = vmatprep.mubr.bf16.mxu0 %v659
    %3158 = vmatmul.mubr.bf16.gmra.mrb[0].mxu0 %v658
    %v3159 = vpop.f32.mrb[0].mxu0
    %v3160 = vadd.f32 %v3117, %v3159
    %v3161 = vpop.f32.mrb[0].mxu0
    %v3162 = vadd.f32 %v3119, %v3161
    %v3163 = vpop.f32.mrb[0].mxu0
    %v3164 = vadd.f32 %v3121, %v3163
    %v3165 = vpop.f32.mrb[0].mxu0
    %v3166 = vadd.f32 %v3123, %v3165
    %3167 = vdwg.mxu0
    %3168 = vmatprep.subr.bf16.mxu0 %v2273
    %3169 = vmatpush1.bf16.msra.mxu0 %v2272
    %3170 = vmatprep.subr.bf16.mxu0 %v2281
    %3171 = vmatpush1.bf16.msra.mxu0 %v2280
    %3172 = vmatprep.subr.bf16.mxu0 %v2289
    %3173 = vmatpush1.bf16.msra.mxu0 %v2288
    %3174 = vmatprep.subr.bf16.mxu0 %v2297
    %3175 = vmatpush1.bf16.msra.mxu0 %v2296
    %3176 = vmatprep.subr.bf16.mxu0 %v2305
    %3177 = vmatpush1.bf16.msra.mxu0 %v2304
    %3178 = vmatprep.subr.bf16.mxu0 %v2313
    %3179 = vmatpush1.bf16.msra.mxu0 %v2312
    %3180 = vmatprep.subr.bf16.mxu0 %v2321
    %3181 = vmatpush1.bf16.msra.mxu0 %v2320
    %3182 = vmatprep.subr.bf16.mxu0 %v2329
    %3183 = vmatpush1.bf16.msra.mxu0 %v2328
    %3184 = vmatprep.subr.bf16.mxu0 %v2337
    %3185 = vmatpush1.bf16.msra.mxu0 %v2336
    %3186 = vmatprep.subr.bf16.mxu0 %v2345
    %3187 = vmatpush1.bf16.msra.mxu0 %v2344
    %3188 = vmatprep.subr.bf16.mxu0 %v2353
    %3189 = vmatpush1.bf16.msra.mxu0 %v2352
    %3190 = vmatprep.subr.bf16.mxu0 %v2361
    %3191 = vmatpush1.bf16.msra.mxu0 %v2360
    %3192 = vmatprep.subr.bf16.mxu0 %v2369
    %3193 = vmatpush1.bf16.msra.mxu0 %v2368
    %3194 = vmatprep.subr.bf16.mxu0 %v2377
    %3195 = vmatpush1.bf16.msra.mxu0 %v2376
    %3196 = vmatprep.subr.bf16.mxu0 %v2385
    %3197 = vmatpush1.bf16.msra.mxu0 %v2384
    %3198 = vmatprep.subr.bf16.mxu0 %v2393
    %3199 = vmatpush1.bf16.msra.mxu0 %v2392
    %3200 = vmatprep.mubr.bf16.mxu0 %v661
    %3201 = vmatmul.mubr.bf16.gmra.mrb[0].mxu0 %v660
    %v3202 = vpop.f32.mrb[0].mxu0
    %v3203 = vadd.f32 %v3160, %v3202
    %v3204 = vpop.f32.mrb[0].mxu0
    %v3205 = vadd.f32 %v3162, %v3204
    %v3206 = vpop.f32.mrb[0].mxu0
    %v3207 = vadd.f32 %v3164, %v3206
    %v3208 = vpop.f32.mrb[0].mxu0
    %v3209 = vadd.f32 %v3166, %v3208
    %3210 = vdwg.mxu0
    %3211 = vmatprep.subr.bf16.mxu0 %v2401
    %3212 = vmatpush1.bf16.msra.mxu0 %v2400
    %3213 = vmatprep.subr.bf16.mxu0 %v2409
    %3214 = vmatpush1.bf16.msra.mxu0 %v2408
    %3215 = vmatprep.subr.bf16.mxu0 %v2417
    %3216 = vmatpush1.bf16.msra.mxu0 %v2416
    %3217 = vmatprep.subr.bf16.mxu0 %v2425
    %3218 = vmatpush1.bf16.msra.mxu0 %v2424
    %3219 = vmatprep.subr.bf16.mxu0 %v2433
    %3220 = vmatpush1.bf16.msra.mxu0 %v2432
    %3221 = vmatprep.subr.bf16.mxu0 %v2441
    %3222 = vmatpush1.bf16.msra.mxu0 %v2440
    %3223 = vmatprep.subr.bf16.mxu0 %v2449
    %3224 = vmatpush1.bf16.msra.mxu0 %v2448
    %3225 = vmatprep.subr.bf16.mxu0 %v2457
    %3226 = vmatpush1.bf16.msra.mxu0 %v2456
    %3227 = vmatprep.subr.bf16.mxu0 0
    %3228 = vmatpush1.bf16.msra.mxu0 0
    %3229 = vmatprep.subr.bf16.mxu0 0
    %3230 = vmatpush1.bf16.msra.mxu0 0
    %3231 = vmatprep.subr.bf16.mxu0 0
    %3232 = vmatpush1.bf16.msra.mxu0 0
    %3233 = vmatprep.subr.bf16.mxu0 0
    %3234 = vmatpush1.bf16.msra.mxu0 0
    %3235 = vmatprep.subr.bf16.mxu0 0
    %3236 = vmatpush1.bf16.msra.mxu0 0
    %3237 = vmatprep.subr.bf16.mxu0 0
    %3238 = vmatpush1.bf16.msra.mxu0 0
    %3239 = vmatprep.subr.bf16.mxu0 0
    %3240 = vmatpush1.bf16.msra.mxu0 0
    %3241 = vmatprep.subr.bf16.mxu0 0
    %3242 = vmatpush1.bf16.msra.mxu0 0
    %3243 = vmatprep.mubr.bf16.mxu0 0
    %3244 = vmatmul.mubr.bf16.gmra.mrb[0].mxu0 %v662
    %v3245 = vpop.f32.mrb[0].mxu0
    %v3246 = vadd.f32 %v3203, %v3245
    %v3247 = vpop.f32.mrb[0].mxu0
    %v3248 = vadd.f32 %v3205, %v3247
    %v3249 = vpop.f32.mrb[0].mxu0
    %v3250 = vadd.f32 %v3207, %v3249
    %v3251 = vpop.f32.mrb[0].mxu0
    %v3252 = vadd.f32 %v3209, %v3251
    %3253 = vdwg.mxu0
    %3254 = vmatprep.subr.bf16.mxu0 %v2019
    %3255 = vmatpush1.bf16.msra.mxu0 %v2018
    %3256 = vmatprep.subr.bf16.mxu0 %v2027
    %3257 = vmatpush1.bf16.msra.mxu0 %v2026
    %3258 = vmatprep.subr.bf16.mxu0 %v2035
    %3259 = vmatpush1.bf16.msra.mxu0 %v2034
    %3260 = vmatprep.subr.bf16.mxu0 %v2043
    %3261 = vmatpush1.bf16.msra.mxu0 %v2042
    %3262 = vmatprep.subr.bf16.mxu0 %v2051
    %3263 = vmatpush1.bf16.msra.mxu0 %v2050
    %3264 = vmatprep.subr.bf16.mxu0 %v2059
    %3265 = vmatpush1.bf16.msra.mxu0 %v2058
    %3266 = vmatprep.subr.bf16.mxu0 %v2067
    %3267 = vmatpush1.bf16.msra.mxu0 %v2066
    %3268 = vmatprep.subr.bf16.mxu0 %v2075
    %3269 = vmatpush1.bf16.msra.mxu0 %v2074
    %3270 = vmatprep.subr.bf16.mxu0 %v2083
    %3271 = vmatpush1.bf16.msra.mxu0 %v2082
    %3272 = vmatprep.subr.bf16.mxu0 %v2091
    %3273 = vmatpush1.bf16.msra.mxu0 %v2090
    %3274 = vmatprep.subr.bf16.mxu0 %v2099
    %3275 = vmatpush1.bf16.msra.mxu0 %v2098
    %3276 = vmatprep.subr.bf16.mxu0 %v2107
    %3277 = vmatpush1.bf16.msra.mxu0 %v2106
    %3278 = vmatprep.subr.bf16.mxu0 %v2115
    %3279 = vmatpush1.bf16.msra.mxu0 %v2114
    %3280 = vmatprep.subr.bf16.mxu0 %v2123
    %3281 = vmatpush1.bf16.msra.mxu0 %v2122
    %3282 = vmatprep.subr.bf16.mxu0 %v2131
    %3283 = vmatpush1.bf16.msra.mxu0 %v2130
    %3284 = vmatprep.subr.bf16.mxu0 %v2139
    %3285 = vmatpush1.bf16.msra.mxu0 %v2138
    %3286 = vmatprep.mubr.bf16.mxu0 %v657
    %3287 = vmatmul.mubr.bf16.gmra.mrb[0].mxu0 %v656
    %v3288 = vpop.f32.mrb[0].mxu0
    %v3289 = vadd.f32 %v613, %v3288
    %v3290 = vpop.f32.mrb[0].mxu0
    %v3291 = vadd.f32 %v617, %v3290
    %v3292 = vpop.f32.mrb[0].mxu0
    %v3293 = vadd.f32 %v613, %v3292
    %v3294 = vpop.f32.mrb[0].mxu0
    %v3295 = vadd.f32 %v617, %v3294
    %3296 = vdwg.mxu0
    %3297 = vmatprep.subr.bf16.mxu0 %v2147
    %3298 = vmatpush1.bf16.msra.mxu0 %v2146
    %3299 = vmatprep.subr.bf16.mxu0 %v2155
    %3300 = vmatpush1.bf16.msra.mxu0 %v2154
    %3301 = vmatprep.subr.bf16.mxu0 %v2163
    %3302 = vmatpush1.bf16.msra.mxu0 %v2162
    %3303 = vmatprep.subr.bf16.mxu0 %v2171
    %3304 = vmatpush1.bf16.msra.mxu0 %v2170
    %3305 = vmatprep.subr.bf16.mxu0 %v2179
    %3306 = vmatpush1.bf16.msra.mxu0 %v2178
    %3307 = vmatprep.subr.bf16.mxu0 %v2187
    %3308 = vmatpush1.bf16.msra.mxu0 %v2186
    %3309 = vmatprep.subr.bf16.mxu0 %v2195
    %3310 = vmatpush1.bf16.msra.mxu0 %v2194
    %3311 = vmatprep.subr.bf16.mxu0 %v2203
    %3312 = vmatpush1.bf16.msra.mxu0 %v2202
    %3313 = vmatprep.subr.bf16.mxu0 %v2211
    %3314 = vmatpush1.bf16.msra.mxu0 %v2210
    %3315 = vmatprep.subr.bf16.mxu0 %v2219
    %3316 = vmatpush1.bf16.msra.mxu0 %v2218
    %3317 = vmatprep.subr.bf16.mxu0 %v2227
    %3318 = vmatpush1.bf16.msra.mxu0 %v2226
    %3319 = vmatprep.subr.bf16.mxu0 %v2235
    %3320 = vmatpush1.bf16.msra.mxu0 %v2234
    %3321 = vmatprep.subr.bf16.mxu0 %v2243
    %3322 = vmatpush1.bf16.msra.mxu0 %v2242
    %3323 = vmatprep.subr.bf16.mxu0 %v2251
    %3324 = vmatpush1.bf16.msra.mxu0 %v2250
    %3325 = vmatprep.subr.bf16.mxu0 %v2259
    %3326 = vmatpush1.bf16.msra.mxu0 %v2258
    %3327 = vmatprep.subr.bf16.mxu0 %v2267
    %3328 = vmatpush1.bf16.msra.mxu0 %v2266
    %3329 = vmatprep.mubr.bf16.mxu0 %v659
    %3330 = vmatmul.mubr.bf16.gmra.mrb[0].mxu0 %v658
    %v3331 = vpop.f32.mrb[0].mxu0
    %v3332 = vadd.f32 %v3289, %v3331
    %v3333 = vpop.f32.mrb[0].mxu0
    %v3334 = vadd.f32 %v3291, %v3333
    %v3335 = vpop.f32.mrb[0].mxu0
    %v3336 = vadd.f32 %v3293, %v3335
    %v3337 = vpop.f32.mrb[0].mxu0
    %v3338 = vadd.f32 %v3295, %v3337
    %3339 = vdwg.mxu0
    %3340 = vmatprep.subr.bf16.mxu0 %v2275
    %3341 = vmatpush1.bf16.msra.mxu0 %v2274
    %3342 = vmatprep.subr.bf16.mxu0 %v2283
    %3343 = vmatpush1.bf16.msra.mxu0 %v2282
    %3344 = vmatprep.subr.bf16.mxu0 %v2291
    %3345 = vmatpush1.bf16.msra.mxu0 %v2290
    %3346 = vmatprep.subr.bf16.mxu0 %v2299
    %3347 = vmatpush1.bf16.msra.mxu0 %v2298
    %3348 = vmatprep.subr.bf16.mxu0 %v2307
    %3349 = vmatpush1.bf16.msra.mxu0 %v2306
    %3350 = vmatprep.subr.bf16.mxu0 %v2315
    %3351 = vmatpush1.bf16.msra.mxu0 %v2314
    %3352 = vmatprep.subr.bf16.mxu0 %v2323
    %3353 = vmatpush1.bf16.msra.mxu0 %v2322
    %3354 = vmatprep.subr.bf16.mxu0 %v2331
    %3355 = vmatpush1.bf16.msra.mxu0 %v2330
    %3356 = vmatprep.subr.bf16.mxu0 %v2339
    %3357 = vmatpush1.bf16.msra.mxu0 %v2338
    %3358 = vmatprep.subr.bf16.mxu0 %v2347
    %3359 = vmatpush1.bf16.msra.mxu0 %v2346
    %3360 = vmatprep.subr.bf16.mxu0 %v2355
    %3361 = vmatpush1.bf16.msra.mxu0 %v2354
    %3362 = vmatprep.subr.bf16.mxu0 %v2363
    %3363 = vmatpush1.bf16.msra.mxu0 %v2362
    %3364 = vmatprep.subr.bf16.mxu0 %v2371
    %3365 = vmatpush1.bf16.msra.mxu0 %v2370
    %3366 = vmatprep.subr.bf16.mxu0 %v2379
    %3367 = vmatpush1.bf16.msra.mxu0 %v2378
    %3368 = vmatprep.subr.bf16.mxu0 %v2387
    %3369 = vmatpush1.bf16.msra.mxu0 %v2386
    %3370 = vmatprep.subr.bf16.mxu0 %v2395
    %3371 = vmatpush1.bf16.msra.mxu0 %v2394
    %3372 = vmatprep.mubr.bf16.mxu0 %v661
    %3373 = vmatmul.mubr.bf16.gmra.mrb[0].mxu0 %v660
    %v3374 = vpop.f32.mrb[0].mxu0
    %v3375 = vadd.f32 %v3332, %v3374
    %v3376 = vpop.f32.mrb[0].mxu0
    %v3377 = vadd.f32 %v3334, %v3376
    %v3378 = vpop.f32.mrb[0].mxu0
    %v3379 = vadd.f32 %v3336, %v3378
    %v3380 = vpop.f32.mrb[0].mxu0
    %v3381 = vadd.f32 %v3338, %v3380
    %3382 = vdwg.mxu0
    %3383 = vmatprep.subr.bf16.mxu0 %v2403
    %3384 = vmatpush1.bf16.msra.mxu0 %v2402
    %3385 = vmatprep.subr.bf16.mxu0 %v2411
    %3386 = vmatpush1.bf16.msra.mxu0 %v2410
    %3387 = vmatprep.subr.bf16.mxu0 %v2419
    %3388 = vmatpush1.bf16.msra.mxu0 %v2418
    %3389 = vmatprep.subr.bf16.mxu0 %v2427
    %3390 = vmatpush1.bf16.msra.mxu0 %v2426
    %3391 = vmatprep.subr.bf16.mxu0 %v2435
    %3392 = vmatpush1.bf16.msra.mxu0 %v2434
    %3393 = vmatprep.subr.bf16.mxu0 %v2443
    %3394 = vmatpush1.bf16.msra.mxu0 %v2442
    %3395 = vmatprep.subr.bf16.mxu0 %v2451
    %3396 = vmatpush1.bf16.msra.mxu0 %v2450
    %3397 = vmatprep.subr.bf16.mxu0 %v2459
    %3398 = vmatpush1.bf16.msra.mxu0 %v2458
    %3399 = vmatprep.subr.bf16.mxu0 0
    %3400 = vmatpush1.bf16.msra.mxu0 0
    %3401 = vmatprep.subr.bf16.mxu0 0
    %3402 = vmatpush1.bf16.msra.mxu0 0
    %3403 = vmatprep.subr.bf16.mxu0 0
    %3404 = vmatpush1.bf16.msra.mxu0 0
    %3405 = vmatprep.subr.bf16.mxu0 0
    %3406 = vmatpush1.bf16.msra.mxu0 0
    %3407 = vmatprep.subr.bf16.mxu0 0
    %3408 = vmatpush1.bf16.msra.mxu0 0
    %3409 = vmatprep.subr.bf16.mxu0 0
    %3410 = vmatpush1.bf16.msra.mxu0 0
    %3411 = vmatprep.subr.bf16.mxu0 0
    %3412 = vmatpush1.bf16.msra.mxu0 0
    %3413 = vmatprep.subr.bf16.mxu0 0
    %3414 = vmatpush1.bf16.msra.mxu0 0
    %3415 = vmatprep.mubr.bf16.mxu0 0
    %3416 = vmatmul.mubr.bf16.gmra.mrb[0].mxu0 %v662
    %v3417 = vpop.f32.mrb[0].mxu0
    %v3418 = vadd.f32 %v3375, %v3417
    %v3419 = vpop.f32.mrb[0].mxu0
    %v3420 = vadd.f32 %v3377, %v3419
    %v3421 = vpop.f32.mrb[0].mxu0
    %v3422 = vadd.f32 %v3379, %v3421
    %v3423 = vpop.f32.mrb[0].mxu0
    %v3424 = vadd.f32 %v3381, %v3423
    %3425 = vdwg.mxu0
    %3426 = vmatprep.subr.bf16.mxu0 %v2021
    %3427 = vmatpush1.bf16.msra.mxu0 %v2020
    %3428 = vmatprep.subr.bf16.mxu0 %v2029
    %3429 = vmatpush1.bf16.msra.mxu0 %v2028
    %3430 = vmatprep.subr.bf16.mxu0 %v2037
    %3431 = vmatpush1.bf16.msra.mxu0 %v2036
    %3432 = vmatprep.subr.bf16.mxu0 %v2045
    %3433 = vmatpush1.bf16.msra.mxu0 %v2044
    %3434 = vmatprep.subr.bf16.mxu0 %v2053
    %3435 = vmatpush1.bf16.msra.mxu0 %v2052
    %3436 = vmatprep.subr.bf16.mxu0 %v2061
    %3437 = vmatpush1.bf16.msra.mxu0 %v2060
    %3438 = vmatprep.subr.bf16.mxu0 %v2069
    %3439 = vmatpush1.bf16.msra.mxu0 %v2068
    %3440 = vmatprep.subr.bf16.mxu0 %v2077
    %3441 = vmatpush1.bf16.msra.mxu0 %v2076
    %3442 = vmatprep.subr.bf16.mxu0 %v2085
    %3443 = vmatpush1.bf16.msra.mxu0 %v2084
    %3444 = vmatprep.subr.bf16.mxu0 %v2093
    %3445 = vmatpush1.bf16.msra.mxu0 %v2092
    %3446 = vmatprep.subr.bf16.mxu0 %v2101
    %3447 = vmatpush1.bf16.msra.mxu0 %v2100
    %3448 = vmatprep.subr.bf16.mxu0 %v2109
    %3449 = vmatpush1.bf16.msra.mxu0 %v2108
    %3450 = vmatprep.subr.bf16.mxu0 %v2117
    %3451 = vmatpush1.bf16.msra.mxu0 %v2116
    %3452 = vmatprep.subr.bf16.mxu0 %v2125
    %3453 = vmatpush1.bf16.msra.mxu0 %v2124
    %3454 = vmatprep.subr.bf16.mxu0 %v2133
    %3455 = vmatpush1.bf16.msra.mxu0 %v2132
    %3456 = vmatprep.subr.bf16.mxu0 %v2141
    %3457 = vmatpush1.bf16.msra.mxu0 %v2140
    %3458 = vmatprep.mubr.bf16.mxu0 %v657
    %3459 = vmatmul.mubr.bf16.gmra.mrb[0].mxu0 %v656
    %v3460 = vpop.f32.mrb[0].mxu0
    %v3461 = vadd.f32 %v621, %v3460
    %v3462 = vpop.f32.mrb[0].mxu0
    %v3463 = vadd.f32 %v625, %v3462
    %v3464 = vpop.f32.mrb[0].mxu0
    %v3465 = vadd.f32 %v621, %v3464
    %v3466 = vpop.f32.mrb[0].mxu0
    %v3467 = vadd.f32 %v625, %v3466
    %3468 = vdwg.mxu0
    %3469 = vmatprep.subr.bf16.mxu0 %v2149
    %3470 = vmatpush1.bf16.msra.mxu0 %v2148
    %3471 = vmatprep.subr.bf16.mxu0 %v2157
    %3472 = vmatpush1.bf16.msra.mxu0 %v2156
    %3473 = vmatprep.subr.bf16.mxu0 %v2165
    %3474 = vmatpush1.bf16.msra.mxu0 %v2164
    %3475 = vmatprep.subr.bf16.mxu0 %v2173
    %3476 = vmatpush1.bf16.msra.mxu0 %v2172
    %3477 = vmatprep.subr.bf16.mxu0 %v2181
    %3478 = vmatpush1.bf16.msra.mxu0 %v2180
    %3479 = vmatprep.subr.bf16.mxu0 %v2189
    %3480 = vmatpush1.bf16.msra.mxu0 %v2188
    %3481 = vmatprep.subr.bf16.mxu0 %v2197
    %3482 = vmatpush1.bf16.msra.mxu0 %v2196
    %3483 = vmatprep.subr.bf16.mxu0 %v2205
    %3484 = vmatpush1.bf16.msra.mxu0 %v2204
    %3485 = vmatprep.subr.bf16.mxu0 %v2213
    %3486 = vmatpush1.bf16.msra.mxu0 %v2212
    %3487 = vmatprep.subr.bf16.mxu0 %v2221
    %3488 = vmatpush1.bf16.msra.mxu0 %v2220
    %3489 = vmatprep.subr.bf16.mxu0 %v2229
    %3490 = vmatpush1.bf16.msra.mxu0 %v2228
    %3491 = vmatprep.subr.bf16.mxu0 %v2237
    %3492 = vmatpush1.bf16.msra.mxu0 %v2236
    %3493 = vmatprep.subr.bf16.mxu0 %v2245
    %3494 = vmatpush1.bf16.msra.mxu0 %v2244
    %3495 = vmatprep.subr.bf16.mxu0 %v2253
    %3496 = vmatpush1.bf16.msra.mxu0 %v2252
    %3497 = vmatprep.subr.bf16.mxu0 %v2261
    %3498 = vmatpush1.bf16.msra.mxu0 %v2260
    %3499 = vmatprep.subr.bf16.mxu0 %v2269
    %3500 = vmatpush1.bf16.msra.mxu0 %v2268
    %3501 = vmatprep.mubr.bf16.mxu0 %v659
    %3502 = vmatmul.mubr.bf16.gmra.mrb[0].mxu0 %v658
    %v3503 = vpop.f32.mrb[0].mxu0
    %v3504 = vadd.f32 %v3461, %v3503
    %v3505 = vpop.f32.mrb[0].mxu0
    %v3506 = vadd.f32 %v3463, %v3505
    %v3507 = vpop.f32.mrb[0].mxu0
    %v3508 = vadd.f32 %v3465, %v3507
    %v3509 = vpop.f32.mrb[0].mxu0
    %v3510 = vadd.f32 %v3467, %v3509
    %3511 = vdwg.mxu0
    %3512 = vmatprep.subr.bf16.mxu0 %v2277
    %3513 = vmatpush1.bf16.msra.mxu0 %v2276
    %3514 = vmatprep.subr.bf16.mxu0 %v2285
    %3515 = vmatpush1.bf16.msra.mxu0 %v2284
    %3516 = vmatprep.subr.bf16.mxu0 %v2293
    %3517 = vmatpush1.bf16.msra.mxu0 %v2292
    %3518 = vmatprep.subr.bf16.mxu0 %v2301
    %3519 = vmatpush1.bf16.msra.mxu0 %v2300
    %3520 = vmatprep.subr.bf16.mxu0 %v2309
    %3521 = vmatpush1.bf16.msra.mxu0 %v2308
    %3522 = vmatprep.subr.bf16.mxu0 %v2317
    %3523 = vmatpush1.bf16.msra.mxu0 %v2316
    %3524 = vmatprep.subr.bf16.mxu0 %v2325
    %3525 = vmatpush1.bf16.msra.mxu0 %v2324
    %3526 = vmatprep.subr.bf16.mxu0 %v2333
    %3527 = vmatpush1.bf16.msra.mxu0 %v2332
    %3528 = vmatprep.subr.bf16.mxu0 %v2341
    %3529 = vmatpush1.bf16.msra.mxu0 %v2340
    %3530 = vmatprep.subr.bf16.mxu0 %v2349
    %3531 = vmatpush1.bf16.msra.mxu0 %v2348
    %3532 = vmatprep.subr.bf16.mxu0 %v2357
    %3533 = vmatpush1.bf16.msra.mxu0 %v2356
    %3534 = vmatprep.subr.bf16.mxu0 %v2365
    %3535 = vmatpush1.bf16.msra.mxu0 %v2364
    %3536 = vmatprep.subr.bf16.mxu0 %v2373
    %3537 = vmatpush1.bf16.msra.mxu0 %v2372
    %3538 = vmatprep.subr.bf16.mxu0 %v2381
    %3539 = vmatpush1.bf16.msra.mxu0 %v2380
    %3540 = vmatprep.subr.bf16.mxu0 %v2389
    %3541 = vmatpush1.bf16.msra.mxu0 %v2388
    %3542 = vmatprep.subr.bf16.mxu0 %v2397
    %3543 = vmatpush1.bf16.msra.mxu0 %v2396
    %3544 = vmatprep.mubr.bf16.mxu0 %v661
    %3545 = vmatmul.mubr.bf16.gmra.mrb[0].mxu0 %v660
    %v3546 = vpop.f32.mrb[0].mxu0
    %v3547 = vadd.f32 %v3504, %v3546
    %v3548 = vpop.f32.mrb[0].mxu0
    %v3549 = vadd.f32 %v3506, %v3548
    %v3550 = vpop.f32.mrb[0].mxu0
    %v3551 = vadd.f32 %v3508, %v3550
    %v3552 = vpop.f32.mrb[0].mxu0
    %v3553 = vadd.f32 %v3510, %v3552
    %3554 = vdwg.mxu0
    %3555 = vmatprep.subr.bf16.mxu0 %v2405
    %3556 = vmatpush1.bf16.msra.mxu0 %v2404
    %3557 = vmatprep.subr.bf16.mxu0 %v2413
    %3558 = vmatpush1.bf16.msra.mxu0 %v2412
    %3559 = vmatprep.subr.bf16.mxu0 %v2421
    %3560 = vmatpush1.bf16.msra.mxu0 %v2420
    %3561 = vmatprep.subr.bf16.mxu0 %v2429
    %3562 = vmatpush1.bf16.msra.mxu0 %v2428
    %3563 = vmatprep.subr.bf16.mxu0 %v2437
    %3564 = vmatpush1.bf16.msra.mxu0 %v2436
    %3565 = vmatprep.subr.bf16.mxu0 %v2445
    %3566 = vmatpush1.bf16.msra.mxu0 %v2444
    %3567 = vmatprep.subr.bf16.mxu0 %v2453
    %3568 = vmatpush1.bf16.msra.mxu0 %v2452
    %3569 = vmatprep.subr.bf16.mxu0 %v2461
    %3570 = vmatpush1.bf16.msra.mxu0 %v2460
    %3571 = vmatprep.subr.bf16.mxu0 0
    %3572 = vmatpush1.bf16.msra.mxu0 0
    %3573 = vmatprep.subr.bf16.mxu0 0
    %3574 = vmatpush1.bf16.msra.mxu0 0
    %3575 = vmatprep.subr.bf16.mxu0 0
    %3576 = vmatpush1.bf16.msra.mxu0 0
    %3577 = vmatprep.subr.bf16.mxu0 0
    %3578 = vmatpush1.bf16.msra.mxu0 0
    %3579 = vmatprep.subr.bf16.mxu0 0
    %3580 = vmatpush1.bf16.msra.mxu0 0
    %3581 = vmatprep.subr.bf16.mxu0 0
    %3582 = vmatpush1.bf16.msra.mxu0 0
    %3583 = vmatprep.subr.bf16.mxu0 0
    %3584 = vmatpush1.bf16.msra.mxu0 0
    %3585 = vmatprep.subr.bf16.mxu0 0
    %3586 = vmatpush1.bf16.msra.mxu0 0
    %3587 = vmatprep.mubr.bf16.mxu0 0
    %3588 = vmatmul.mubr.bf16.gmra.mrb[0].mxu0 %v662
    %v3589 = vpop.f32.mrb[0].mxu0
    %v3590 = vadd.f32 %v3547, %v3589
    %v3591 = vpop.f32.mrb[0].mxu0
    %v3592 = vadd.f32 %v3549, %v3591
    %v3593 = vpop.f32.mrb[0].mxu0
    %v3594 = vadd.f32 %v3551, %v3593
    %v3595 = vpop.f32.mrb[0].mxu0
    %v3596 = vadd.f32 %v3553, %v3595
    %3597 = vdwg.mxu0
    %vm3598 = vcmp.gt.f32.partialorder %v3074, 0.0
    %vm3599 = vcmp.gt.f32.partialorder %v3076, 0.0
    %vm3600 = vcmp.gt.f32.partialorder %v3246, 0.0
    %vm3601 = vcmp.gt.f32.partialorder %v3248, 0.0
    %vm3602 = vcmp.gt.f32.partialorder %v3418, 0.0
    %vm3603 = vcmp.gt.f32.partialorder %v3420, 0.0
    %vm3604 = vcmp.gt.f32.partialorder %v3590, 0.0
    %vm3605 = vcmp.gt.f32.partialorder %v3592, 0.0
    %vm3606 = vcmp.gt.f32.partialorder %v3078, 0.0
    %vm3607 = vcmp.gt.f32.partialorder %v3080, 0.0
    %vm3608 = vcmp.gt.f32.partialorder %v3250, 0.0
    %vm3609 = vcmp.gt.f32.partialorder %v3252, 0.0
    %vm3610 = vcmp.gt.f32.partialorder %v3422, 0.0
    %vm3611 = vcmp.gt.f32.partialorder %v3424, 0.0
    %vm3612 = vcmp.gt.f32.partialorder %v3594, 0.0
    %vm3613 = vcmp.gt.f32.partialorder %v3596, 0.0
    %v3614 = vmul.f32 %v3074, 0.2
    %v3615 = vmul.f32 %v3076, 0.2
    %v3616 = vmul.f32 %v3246, 0.2
    %v3617 = vmul.f32 %v3248, 0.2
    %v3618 = vmul.f32 %v3418, 0.2
    %v3619 = vmul.f32 %v3420, 0.2
    %v3620 = vmul.f32 %v3590, 0.2
    %v3621 = vmul.f32 %v3592, 0.2
    %v3622 = vmul.f32 %v3078, 0.2
    %v3623 = vmul.f32 %v3080, 0.2
    %v3624 = vmul.f32 %v3250, 0.2
    %v3625 = vmul.f32 %v3252, 0.2
    %v3626 = vmul.f32 %v3422, 0.2
    %v3627 = vmul.f32 %v3424, 0.2
    %v3628 = vmul.f32 %v3594, 0.2
    %v3629 = vmul.f32 %v3596, 0.2
    %v3630 = vsel %vm3598, %v3074, %v3614
    %v3631 = vsel %vm3599, %v3076, %v3615
    %v3632 = vsel %vm3600, %v3246, %v3616
    %v3633 = vsel %vm3601, %v3248, %v3617
    %v3634 = vsel %vm3602, %v3418, %v3618
    %v3635 = vsel %vm3603, %v3420, %v3619
    %v3636 = vsel %vm3604, %v3590, %v3620
    %v3637 = vsel %vm3605, %v3592, %v3621
    %v3638 = vsel %vm3606, %v3078, %v3622
    %v3639 = vsel %vm3607, %v3080, %v3623
    %v3640 = vsel %vm3608, %v3250, %v3624
    %v3641 = vsel %vm3609, %v3252, %v3625
    %v3642 = vsel %vm3610, %v3422, %v3626
    %v3643 = vsel %vm3611, %v3424, %v3627
    %v3644 = vsel %vm3612, %v3594, %v3628
    %v3645 = vsel %vm3613, %v3596, %v3629
    %v3646 = vpack.c.bf16 %v3638, %v3630
    %v3647 = vpack.c.bf16 %v3639, %v3631
    %v3648 = vpack.c.bf16 %v3640, %v3632
    %v3649 = vpack.c.bf16 %v3641, %v3633
    %v3650 = vpack.c.bf16 %v3642, %v3634
    %v3651 = vpack.c.bf16 %v3643, %v3635
    %v3652 = vpack.c.bf16 %v3644, %v3636
    %v3653 = vpack.c.bf16 %v3645, %v3637
    %v3654 = vld [vmem:[#allocation9] sm:$0xff]
    %v3655 = vld [vmem:[#allocation9 + $0x8] sm:$0xff]
    %v3656 = vld [vmem:[#allocation9 + $0x10] sm:$0xff]
    %v3657 = vld [vmem:[#allocation9 + $0x18] sm:$0xff]
    %v3658 = vld [vmem:[#allocation9 + $0x20] sm:$0xff]
    %v3659 = vld [vmem:[#allocation9 + $0x28] sm:$0xff]
    %v3660 = vld [vmem:[#allocation9 + $0x30] sm:$0xff]
    %v3661 = vld [vmem:[#allocation9 + $0x38] sm:$0xff]
    %v3662 = vld [vmem:[#allocation9 + $0x40] sm:$0xff]
    %v3663 = vld [vmem:[#allocation9 + $0x48] sm:$0xff]
    %v3664 = vld [vmem:[#allocation9 + $0x50] sm:$0xff]
    %v3665 = vld [vmem:[#allocation9 + $0x58] sm:$0xff]
    %v3666 = vld [vmem:[#allocation9 + $0x60] sm:$0xff]
    %v3667 = vld [vmem:[#allocation9 + $0x68] sm:$0xff]
    %v3668 = vld [vmem:[#allocation9 + $0x70] sm:$0xff]
    %v3669 = vld [vmem:[#allocation9 + $0x78] sm:$0xff]
    %v3670 = vld [vmem:[#allocation9 + $0x80] sm:$0xff]
    %v3671 = vld [vmem:[#allocation9 + $0x88] sm:$0xff]
    %v3672 = vld [vmem:[#allocation9 + $0x90] sm:$0xff]
    %v3673 = vld [vmem:[#allocation9 + $0x98] sm:$0xff]
    %v3674 = vld [vmem:[#allocation9 + $0xa0] sm:$0xff]
    %v3675 = vld [vmem:[#allocation9 + $0xa8] sm:$0xff]
    %v3676 = vld [vmem:[#allocation9 + $0xb0] sm:$0xff]
    %v3677 = vld [vmem:[#allocation9 + $0xb8] sm:$0xff]
    %v3678 = vld [vmem:[#allocation9 + $0xc0] sm:$0xff]
    %v3679 = vld [vmem:[#allocation9 + $0xc8] sm:$0xff]
    %v3680 = vld [vmem:[#allocation9 + $0xd0] sm:$0xff]
    %v3681 = vld [vmem:[#allocation9 + $0xd8] sm:$0xff]
    %v3682 = vld [vmem:[#allocation9 + $0xe0] sm:$0xff]
    %v3683 = vld [vmem:[#allocation9 + $0xe8] sm:$0xff]
    %v3684 = vld [vmem:[#allocation9 + $0xf0] sm:$0xff]
    %v3685 = vld [vmem:[#allocation9 + $0xf8] sm:$0xff]
    %v3686 = vld [vmem:[#allocation9 + $0x100] sm:$0xff]
    %v3687 = vld [vmem:[#allocation9 + $0x108] sm:$0xff]
    %v3688 = vld [vmem:[#allocation9 + $0x110] sm:$0xff]
    %v3689 = vld [vmem:[#allocation9 + $0x118] sm:$0xff]
    %v3690 = vld [vmem:[#allocation9 + $0x120] sm:$0xff]
    %v3691 = vld [vmem:[#allocation9 + $0x128] sm:$0xff]
    %v3692 = vld [vmem:[#allocation9 + $0x130] sm:$0xff]
    %v3693 = vld [vmem:[#allocation9 + $0x138] sm:$0xff]
    %v3694 = vld [vmem:[#allocation9 + $0x140] sm:$0xff]
    %v3695 = vld [vmem:[#allocation9 + $0x148] sm:$0xff]
    %v3696 = vld [vmem:[#allocation9 + $0x150] sm:$0xff]
    %v3697 = vld [vmem:[#allocation9 + $0x158] sm:$0xff]
    %v3698 = vld [vmem:[#allocation9 + $0x160] sm:$0xff]
    %v3699 = vld [vmem:[#allocation9 + $0x168] sm:$0xff]
    %v3700 = vld [vmem:[#allocation9 + $0x170] sm:$0xff]
    %v3701 = vld [vmem:[#allocation9 + $0x178] sm:$0xff]
    %v3702 = vld [vmem:[#allocation9 + $0x180] sm:$0xff]
    %v3703 = vld [vmem:[#allocation9 + $0x188] sm:$0xff]
    %v3704 = vld [vmem:[#allocation9 + $0x190] sm:$0xff]
    %v3705 = vld [vmem:[#allocation9 + $0x198] sm:$0xff]
    %v3706 = vld [vmem:[#allocation9 + $0x1a0] sm:$0xff]
    %v3707 = vld [vmem:[#allocation9 + $0x1a8] sm:$0xff]
    %v3708 = vld [vmem:[#allocation9 + $0x1b0] sm:$0xff]
    %v3709 = vld [vmem:[#allocation9 + $0x1b8] sm:$0xff]
    %v3710 = vld [vmem:[#allocation9 + $0x1c0] sm:$0xff]
    %v3711 = vld [vmem:[#allocation9 + $0x1c8] sm:$0xff]
    %v3712 = vld [vmem:[#allocation9 + $0x1d0] sm:$0xff]
    %v3713 = vld [vmem:[#allocation9 + $0x1d8] sm:$0xff]
    %v3714 = vld [vmem:[#allocation9 + $0x1e0] sm:$0xff]
    %v3715 = vld [vmem:[#allocation9 + $0x1e8] sm:$0xff]
    %v3716 = vld [vmem:[#allocation9 + $0x1f0] sm:$0xff]
    %v3717 = vld [vmem:[#allocation9 + $0x1f8] sm:$0xff]
    %v3718 = vld [vmem:[#allocation9 + $0x200] sm:$0xff]
    %v3719 = vld [vmem:[#allocation9 + $0x208] sm:$0xff]
    %v3720 = vld [vmem:[#allocation9 + $0x210] sm:$0xff]
    %v3721 = vld [vmem:[#allocation9 + $0x218] sm:$0xff]
    %v3722 = vld [vmem:[#allocation9 + $0x220] sm:$0xff]
    %v3723 = vld [vmem:[#allocation9 + $0x228] sm:$0xff]
    %v3724 = vld [vmem:[#allocation9 + $0x230] sm:$0xff]
    %v3725 = vld [vmem:[#allocation9 + $0x238] sm:$0xff]
    %v3726 = vld [vmem:[#allocation9 + $0x240] sm:$0xff]
    %v3727 = vld [vmem:[#allocation9 + $0x248] sm:$0xff]
    %v3728 = vld [vmem:[#allocation9 + $0x250] sm:$0xff]
    %v3729 = vld [vmem:[#allocation9 + $0x258] sm:$0xff]
    %v3730 = vld [vmem:[#allocation9 + $0x260] sm:$0xff]
    %v3731 = vld [vmem:[#allocation9 + $0x268] sm:$0xff]
    %v3732 = vld [vmem:[#allocation9 + $0x270] sm:$0xff]
    %v3733 = vld [vmem:[#allocation9 + $0x278] sm:$0xff]
    %v3734 = vld [vmem:[#allocation9 + $0x280] sm:$0xff]
    %v3735 = vld [vmem:[#allocation9 + $0x288] sm:$0xff]
    %v3736 = vld [vmem:[#allocation9 + $0x290] sm:$0xff]
    %v3737 = vld [vmem:[#allocation9 + $0x298] sm:$0xff]
    %v3738 = vld [vmem:[#allocation9 + $0x2a0] sm:$0xff]
    %v3739 = vld [vmem:[#allocation9 + $0x2a8] sm:$0xff]
    %v3740 = vld [vmem:[#allocation9 + $0x2b0] sm:$0xff]
    %v3741 = vld [vmem:[#allocation9 + $0x2b8] sm:$0xff]
    %v3742 = vld [vmem:[#allocation9 + $0x2c0] sm:$0xff]
    %v3743 = vld [vmem:[#allocation9 + $0x2c8] sm:$0xff]
    %v3744 = vld [vmem:[#allocation9 + $0x2d0] sm:$0xff]
    %v3745 = vld [vmem:[#allocation9 + $0x2d8] sm:$0xff]
    %v3746 = vld [vmem:[#allocation9 + $0x2e0] sm:$0xff]
    %v3747 = vld [vmem:[#allocation9 + $0x2e8] sm:$0xff]
    %v3748 = vld [vmem:[#allocation9 + $0x2f0] sm:$0xff]
    %v3749 = vld [vmem:[#allocation9 + $0x2f8] sm:$0xff]
    %v3750 = vld [vmem:[#allocation9 + $0x300] sm:$0xff]
    %v3751 = vld [vmem:[#allocation9 + $0x308] sm:$0xff]
    %v3752 = vld [vmem:[#allocation9 + $0x310] sm:$0xff]
    %v3753 = vld [vmem:[#allocation9 + $0x318] sm:$0xff]
    %v3754 = vld [vmem:[#allocation9 + $0x320] sm:$0xff]
    %v3755 = vld [vmem:[#allocation9 + $0x328] sm:$0xff]
    %v3756 = vld [vmem:[#allocation9 + $0x330] sm:$0xff]
    %v3757 = vld [vmem:[#allocation9 + $0x338] sm:$0xff]
    %v3758 = vld [vmem:[#allocation9 + $0x340] sm:$0xff]
    %v3759 = vld [vmem:[#allocation9 + $0x348] sm:$0xff]
    %v3760 = vld [vmem:[#allocation9 + $0x350] sm:$0xff]
    %v3761 = vld [vmem:[#allocation9 + $0x358] sm:$0xff]
    %v3762 = vld [vmem:[#allocation9 + $0x360] sm:$0xff]
    %v3763 = vld [vmem:[#allocation9 + $0x368] sm:$0xff]
    %v3764 = vld [vmem:[#allocation9 + $0x370] sm:$0xff]
    %v3765 = vld [vmem:[#allocation9 + $0x378] sm:$0xff]
    %v3766 = vld [vmem:[#allocation9 + $0x380] sm:$0xff]
    %v3767 = vld [vmem:[#allocation9 + $0x388] sm:$0xff]
    %v3768 = vld [vmem:[#allocation9 + $0x390] sm:$0xff]
    %v3769 = vld [vmem:[#allocation9 + $0x398] sm:$0xff]
    %v3770 = vld [vmem:[#allocation9 + $0x3a0] sm:$0xff]
    %v3771 = vld [vmem:[#allocation9 + $0x3a8] sm:$0xff]
    %v3772 = vld [vmem:[#allocation9 + $0x3b0] sm:$0xff]
    %v3773 = vld [vmem:[#allocation9 + $0x3b8] sm:$0xff]
    %v3774 = vld [vmem:[#allocation9 + $0x3c0] sm:$0xff]
    %v3775 = vld [vmem:[#allocation9 + $0x3c8] sm:$0xff]
    %v3776 = vld [vmem:[#allocation9 + $0x3d0] sm:$0xff]
    %v3777 = vld [vmem:[#allocation9 + $0x3d8] sm:$0xff]
    %v3778 = vld [vmem:[#allocation9 + $0x3e0] sm:$0xff]
    %v3779 = vld [vmem:[#allocation9 + $0x3e8] sm:$0xff]
    %v3780 = vld [vmem:[#allocation9 + $0x3f0] sm:$0xff]
    %v3781 = vld [vmem:[#allocation9 + $0x3f8] sm:$0xff]
    %v3782 = vld [vmem:[#allocation9 + $0x400] sm:$0xff]
    %v3783 = vld [vmem:[#allocation9 + $0x408] sm:$0xff]
    %v3784 = vld [vmem:[#allocation9 + $0x410] sm:$0xff]
    %v3785 = vld [vmem:[#allocation9 + $0x418] sm:$0xff]
    %v3786 = vld [vmem:[#allocation9 + $0x420] sm:$0xff]
    %v3787 = vld [vmem:[#allocation9 + $0x428] sm:$0xff]
    %v3788 = vld [vmem:[#allocation9 + $0x430] sm:$0xff]
    %v3789 = vld [vmem:[#allocation9 + $0x438] sm:$0xff]
    %v3790 = vld [vmem:[#allocation9 + $0x440] sm:$0xff]
    %v3791 = vld [vmem:[#allocation9 + $0x448] sm:$0xff]
    %v3792 = vld [vmem:[#allocation9 + $0x450] sm:$0xff]
    %v3793 = vld [vmem:[#allocation9 + $0x458] sm:$0xff]
    %v3794 = vld [vmem:[#allocation9 + $0x460] sm:$0xff]
    %v3795 = vld [vmem:[#allocation9 + $0x468] sm:$0xff]
    %v3796 = vld [vmem:[#allocation9 + $0x470] sm:$0xff]
    %v3797 = vld [vmem:[#allocation9 + $0x478] sm:$0xff]
    %v3798 = vld [vmem:[#allocation9 + $0x480] sm:$0xff]
    %v3799 = vld [vmem:[#allocation9 + $0x488] sm:$0xff]
    %v3800 = vld [vmem:[#allocation9 + $0x490] sm:$0xff]
    %v3801 = vld [vmem:[#allocation9 + $0x498] sm:$0xff]
    %v3802 = vld [vmem:[#allocation9 + $0x4a0] sm:$0xff]
    %v3803 = vld [vmem:[#allocation9 + $0x4a8] sm:$0xff]
    %v3804 = vld [vmem:[#allocation9 + $0x4b0] sm:$0xff]
    %v3805 = vld [vmem:[#allocation9 + $0x4b8] sm:$0xff]
    %v3806 = vld [vmem:[#allocation9 + $0x4c0] sm:$0xff]
    %v3807 = vld [vmem:[#allocation9 + $0x4c8] sm:$0xff]
    %v3808 = vld [vmem:[#allocation9 + $0x4d0] sm:$0xff]
    %v3809 = vld [vmem:[#allocation9 + $0x4d8] sm:$0xff]
    %v3810 = vld [vmem:[#allocation9 + $0x4e0] sm:$0xff]
    %v3811 = vld [vmem:[#allocation9 + $0x4e8] sm:$0xff]
    %v3812 = vld [vmem:[#allocation9 + $0x4f0] sm:$0xff]
    %v3813 = vld [vmem:[#allocation9 + $0x4f8] sm:$0xff]
    %v3814 = vld [vmem:[#allocation9 + $0x500] sm:$0xff]
    %v3815 = vld [vmem:[#allocation9 + $0x508] sm:$0xff]
    %v3816 = vld [vmem:[#allocation9 + $0x510] sm:$0xff]
    %v3817 = vld [vmem:[#allocation9 + $0x518] sm:$0xff]
    %v3818 = vld [vmem:[#allocation9 + $0x520] sm:$0xff]
    %v3819 = vld [vmem:[#allocation9 + $0x528] sm:$0xff]
    %v3820 = vld [vmem:[#allocation9 + $0x530] sm:$0xff]
    %v3821 = vld [vmem:[#allocation9 + $0x538] sm:$0xff]
    %v3822 = vld [vmem:[#allocation9 + $0x540] sm:$0xff]
    %v3823 = vld [vmem:[#allocation9 + $0x548] sm:$0xff]
    %v3824 = vld [vmem:[#allocation9 + $0x550] sm:$0xff]
    %v3825 = vld [vmem:[#allocation9 + $0x558] sm:$0xff]
    %v3826 = vld [vmem:[#allocation9 + $0x560] sm:$0xff]
    %v3827 = vld [vmem:[#allocation9 + $0x568] sm:$0xff]
    %v3828 = vld [vmem:[#allocation9 + $0x570] sm:$0xff]
    %v3829 = vld [vmem:[#allocation9 + $0x578] sm:$0xff]
    %v3830 = vld [vmem:[#allocation9 + $0x580] sm:$0xff]
    %v3831 = vld [vmem:[#allocation9 + $0x588] sm:$0xff]
    %v3832 = vld [vmem:[#allocation9 + $0x590] sm:$0xff]
    %v3833 = vld [vmem:[#allocation9 + $0x598] sm:$0xff]
    %v3834 = vld [vmem:[#allocation9 + $0x5a0] sm:$0xff]
    %v3835 = vld [vmem:[#allocation9 + $0x5a8] sm:$0xff]
    %v3836 = vld [vmem:[#allocation9 + $0x5b0] sm:$0xff]
    %v3837 = vld [vmem:[#allocation9 + $0x5b8] sm:$0xff]
    %v3838 = vld [vmem:[#allocation9 + $0x5c0] sm:$0xff]
    %v3839 = vld [vmem:[#allocation9 + $0x5c8] sm:$0xff]
    %v3840 = vld [vmem:[#allocation9 + $0x5d0] sm:$0xff]
    %v3841 = vld [vmem:[#allocation9 + $0x5d8] sm:$0xff]
    %v3842 = vld [vmem:[#allocation9 + $0x5e0] sm:$0xff]
    %v3843 = vld [vmem:[#allocation9 + $0x5e8] sm:$0xff]
    %v3844 = vld [vmem:[#allocation9 + $0x5f0] sm:$0xff]
    %v3845 = vld [vmem:[#allocation9 + $0x5f8] sm:$0xff]
    %v3846 = vld [vmem:[#allocation9 + $0x600] sm:$0xff]
    %v3847 = vld [vmem:[#allocation9 + $0x608] sm:$0xff]
    %v3848 = vld [vmem:[#allocation9 + $0x610] sm:$0xff]
    %v3849 = vld [vmem:[#allocation9 + $0x618] sm:$0xff]
    %v3850 = vld [vmem:[#allocation9 + $0x620] sm:$0xff]
    %v3851 = vld [vmem:[#allocation9 + $0x628] sm:$0xff]
    %v3852 = vld [vmem:[#allocation9 + $0x630] sm:$0xff]
    %v3853 = vld [vmem:[#allocation9 + $0x638] sm:$0xff]
    %v3854 = vld [vmem:[#allocation9 + $0x640] sm:$0xff]
    %v3855 = vld [vmem:[#allocation9 + $0x648] sm:$0xff]
    %v3856 = vld [vmem:[#allocation9 + $0x650] sm:$0xff]
    %v3857 = vld [vmem:[#allocation9 + $0x658] sm:$0xff]
    %v3858 = vld [vmem:[#allocation9 + $0x660] sm:$0xff]
    %v3859 = vld [vmem:[#allocation9 + $0x668] sm:$0xff]
    %v3860 = vld [vmem:[#allocation9 + $0x670] sm:$0xff]
    %v3861 = vld [vmem:[#allocation9 + $0x678] sm:$0xff]
    %v3862 = vld [vmem:[#allocation9 + $0x680] sm:$0xff]
    %v3863 = vld [vmem:[#allocation9 + $0x688] sm:$0xff]
    %v3864 = vld [vmem:[#allocation9 + $0x690] sm:$0xff]
    %v3865 = vld [vmem:[#allocation9 + $0x698] sm:$0xff]
    %v3866 = vld [vmem:[#allocation9 + $0x6a0] sm:$0xff]
    %v3867 = vld [vmem:[#allocation9 + $0x6a8] sm:$0xff]
    %v3868 = vld [vmem:[#allocation9 + $0x6b0] sm:$0xff]
    %v3869 = vld [vmem:[#allocation9 + $0x6b8] sm:$0xff]
    %v3870 = vld [vmem:[#allocation9 + $0x6c0] sm:$0xff]
    %v3871 = vld [vmem:[#allocation9 + $0x6c8] sm:$0xff]
    %v3872 = vld [vmem:[#allocation9 + $0x6d0] sm:$0xff]
    %v3873 = vld [vmem:[#allocation9 + $0x6d8] sm:$0xff]
    %v3874 = vld [vmem:[#allocation9 + $0x6e0] sm:$0xff]
    %v3875 = vld [vmem:[#allocation9 + $0x6e8] sm:$0xff]
    %v3876 = vld [vmem:[#allocation9 + $0x6f0] sm:$0xff]
    %v3877 = vld [vmem:[#allocation9 + $0x6f8] sm:$0xff]
    %v3878 = vld [vmem:[#allocation9 + $0x700] sm:$0xff]
    %v3879 = vld [vmem:[#allocation9 + $0x708] sm:$0xff]
    %v3880 = vld [vmem:[#allocation9 + $0x710] sm:$0xff]
    %v3881 = vld [vmem:[#allocation9 + $0x718] sm:$0xff]
    %v3882 = vld [vmem:[#allocation9 + $0x720] sm:$0xff]
    %v3883 = vld [vmem:[#allocation9 + $0x728] sm:$0xff]
    %v3884 = vld [vmem:[#allocation9 + $0x730] sm:$0xff]
    %v3885 = vld [vmem:[#allocation9 + $0x738] sm:$0xff]
    %v3886 = vld [vmem:[#allocation9 + $0x740] sm:$0xff]
    %v3887 = vld [vmem:[#allocation9 + $0x748] sm:$0xff]
    %v3888 = vld [vmem:[#allocation9 + $0x750] sm:$0xff]
    %v3889 = vld [vmem:[#allocation9 + $0x758] sm:$0xff]
    %v3890 = vld [vmem:[#allocation9 + $0x760] sm:$0xff]
    %v3891 = vld [vmem:[#allocation9 + $0x768] sm:$0xff]
    %v3892 = vld [vmem:[#allocation9 + $0x770] sm:$0xff]
    %v3893 = vld [vmem:[#allocation9 + $0x778] sm:$0xff]
    %v3894 = vld [vmem:[#allocation9 + $0x780] sm:$0xff]
    %v3895 = vld [vmem:[#allocation9 + $0x788] sm:$0xff]
    %v3896 = vld [vmem:[#allocation9 + $0x790] sm:$0xff]
    %v3897 = vld [vmem:[#allocation9 + $0x798] sm:$0xff]
    %v3898 = vld [vmem:[#allocation9 + $0x7a0] sm:$0xff]
    %v3899 = vld [vmem:[#allocation9 + $0x7a8] sm:$0xff]
    %v3900 = vld [vmem:[#allocation9 + $0x7b0] sm:$0xff]
    %v3901 = vld [vmem:[#allocation9 + $0x7b8] sm:$0xff]
    %v3902 = vld [vmem:[#allocation9 + $0x7c0] sm:$0xff]
    %v3903 = vld [vmem:[#allocation9 + $0x7c8] sm:$0xff]
    %v3904 = vld [vmem:[#allocation9 + $0x7d0] sm:$0xff]
    %v3905 = vld [vmem:[#allocation9 + $0x7d8] sm:$0xff]
    %v3906 = vld [vmem:[#allocation9 + $0x7e0] sm:$0xff]
    %v3907 = vld [vmem:[#allocation9 + $0x7e8] sm:$0xff]
    %v3908 = vld [vmem:[#allocation9 + $0x7f0] sm:$0xff]
    %v3909 = vld [vmem:[#allocation9 + $0x7f8] sm:$0xff]
    %v3910 = vld [vmem:[#allocation11] sm:$0xf]
    %v3912 = vlaneseq
    %v3913 = vshrl.u32 %v3912, 7
    %v3914 = vsub.s32 0, %v3913
    %v3915 = vrot.slane %v3910, %v3914
    %v3916 = vlaneseq
    %v3917 = vshrl.u32 %v3916, 7
    %v3918 = vsub.s32 1, %v3917
    %v3919 = vrot.slane %v3910, %v3918
    %v3920 = vlaneseq
    %v3921 = vshrl.u32 %v3920, 7
    %v3922 = vsub.s32 2, %v3921
    %v3923 = vrot.slane %v3910, %v3922
    %v3924 = vlaneseq
    %v3925 = vshrl.u32 %v3924, 7
    %v3926 = vsub.s32 3, %v3925
    %v3927 = vrot.slane %v3910, %v3926
    %v4188 = vunpack.c.l.b16 %v3654
    %v4189 = vunpack.c.h.b16 %v3654
    %v4190 = vunpack.c.l.b16 %v3655
    %v4191 = vunpack.c.h.b16 %v3655
    %v4192 = vunpack.c.l.b16 %v3656
    %v4193 = vunpack.c.h.b16 %v3656
    %v4194 = vunpack.c.l.b16 %v3657
    %v4195 = vunpack.c.h.b16 %v3657
    %v4196 = vunpack.c.l.b16 %v3658
    %v4197 = vunpack.c.h.b16 %v3658
    %v4198 = vunpack.c.l.b16 %v3659
    %v4199 = vunpack.c.h.b16 %v3659
    %v4200 = vunpack.c.l.b16 %v3660
    %v4201 = vunpack.c.h.b16 %v3660
    %v4202 = vunpack.c.l.b16 %v3661
    %v4203 = vunpack.c.h.b16 %v3661
    %v4204 = vunpack.c.l.b16 %v3662
    %v4205 = vunpack.c.h.b16 %v3662
    %v4206 = vunpack.c.l.b16 %v3663
    %v4207 = vunpack.c.h.b16 %v3663
    %v4208 = vunpack.c.l.b16 %v3664
    %v4209 = vunpack.c.h.b16 %v3664
    %v4210 = vunpack.c.l.b16 %v3665
    %v4211 = vunpack.c.h.b16 %v3665
    %v4212 = vunpack.c.l.b16 %v3666
    %v4213 = vunpack.c.h.b16 %v3666
    %v4214 = vunpack.c.l.b16 %v3667
    %v4215 = vunpack.c.h.b16 %v3667
    %v4216 = vunpack.c.l.b16 %v3668
    %v4217 = vunpack.c.h.b16 %v3668
    %v4218 = vunpack.c.l.b16 %v3669
    %v4219 = vunpack.c.h.b16 %v3669
    %v4220 = vunpack.c.l.b16 %v3670
    %v4221 = vunpack.c.h.b16 %v3670
    %v4222 = vunpack.c.l.b16 %v3671
    %v4223 = vunpack.c.h.b16 %v3671
    %v4224 = vunpack.c.l.b16 %v3672
    %v4225 = vunpack.c.h.b16 %v3672
    %v4226 = vunpack.c.l.b16 %v3673
    %v4227 = vunpack.c.h.b16 %v3673
    %v4228 = vunpack.c.l.b16 %v3674
    %v4229 = vunpack.c.h.b16 %v3674
    %v4230 = vunpack.c.l.b16 %v3675
    %v4231 = vunpack.c.h.b16 %v3675
    %v4232 = vunpack.c.l.b16 %v3676
    %v4233 = vunpack.c.h.b16 %v3676
    %v4234 = vunpack.c.l.b16 %v3677
    %v4235 = vunpack.c.h.b16 %v3677
    %v4236 = vunpack.c.l.b16 %v3678
    %v4237 = vunpack.c.h.b16 %v3678
    %v4238 = vunpack.c.l.b16 %v3679
    %v4239 = vunpack.c.h.b16 %v3679
    %v4240 = vunpack.c.l.b16 %v3680
    %v4241 = vunpack.c.h.b16 %v3680
    %v4242 = vunpack.c.l.b16 %v3681
    %v4243 = vunpack.c.h.b16 %v3681
    %v4244 = vunpack.c.l.b16 %v3682
    %v4245 = vunpack.c.h.b16 %v3682
    %v4246 = vunpack.c.l.b16 %v3683
    %v4247 = vunpack.c.h.b16 %v3683
    %v4248 = vunpack.c.l.b16 %v3684
    %v4249 = vunpack.c.h.b16 %v3684
    %v4250 = vunpack.c.l.b16 %v3685
    %v4251 = vunpack.c.h.b16 %v3685
    %v4252 = vunpack.c.l.b16 %v3686
    %v4253 = vunpack.c.h.b16 %v3686
    %v4254 = vunpack.c.l.b16 %v3687
    %v4255 = vunpack.c.h.b16 %v3687
    %v4256 = vunpack.c.l.b16 %v3688
    %v4257 = vunpack.c.h.b16 %v3688
    %v4258 = vunpack.c.l.b16 %v3689
    %v4259 = vunpack.c.h.b16 %v3689
    %v4260 = vunpack.c.l.b16 %v3690
    %v4261 = vunpack.c.h.b16 %v3690
    %v4262 = vunpack.c.l.b16 %v3691
    %v4263 = vunpack.c.h.b16 %v3691
    %v4264 = vunpack.c.l.b16 %v3692
    %v4265 = vunpack.c.h.b16 %v3692
    %v4266 = vunpack.c.l.b16 %v3693
    %v4267 = vunpack.c.h.b16 %v3693
    %v4268 = vunpack.c.l.b16 %v3694
    %v4269 = vunpack.c.h.b16 %v3694
    %v4270 = vunpack.c.l.b16 %v3695
    %v4271 = vunpack.c.h.b16 %v3695
    %v4272 = vunpack.c.l.b16 %v3696
    %v4273 = vunpack.c.h.b16 %v3696
    %v4274 = vunpack.c.l.b16 %v3697
    %v4275 = vunpack.c.h.b16 %v3697
    %v4276 = vunpack.c.l.b16 %v3698
    %v4277 = vunpack.c.h.b16 %v3698
    %v4278 = vunpack.c.l.b16 %v3699
    %v4279 = vunpack.c.h.b16 %v3699
    %v4280 = vunpack.c.l.b16 %v3700
    %v4281 = vunpack.c.h.b16 %v3700
    %v4282 = vunpack.c.l.b16 %v3701
    %v4283 = vunpack.c.h.b16 %v3701
    %v4284 = vunpack.c.l.b16 %v3702
    %v4285 = vunpack.c.h.b16 %v3702
    %v4286 = vunpack.c.l.b16 %v3703
    %v4287 = vunpack.c.h.b16 %v3703
    %v4288 = vunpack.c.l.b16 %v3704
    %v4289 = vunpack.c.h.b16 %v3704
    %v4290 = vunpack.c.l.b16 %v3705
    %v4291 = vunpack.c.h.b16 %v3705
    %v4292 = vunpack.c.l.b16 %v3706
    %v4293 = vunpack.c.h.b16 %v3706
    %v4294 = vunpack.c.l.b16 %v3707
    %v4295 = vunpack.c.h.b16 %v3707
    %v4296 = vunpack.c.l.b16 %v3708
    %v4297 = vunpack.c.h.b16 %v3708
    %v4298 = vunpack.c.l.b16 %v3709
    %v4299 = vunpack.c.h.b16 %v3709
    %v4300 = vunpack.c.l.b16 %v3710
    %v4301 = vunpack.c.h.b16 %v3710
    %v4302 = vunpack.c.l.b16 %v3711
    %v4303 = vunpack.c.h.b16 %v3711
    %v4304 = vunpack.c.l.b16 %v3712
    %v4305 = vunpack.c.h.b16 %v3712
    %v4306 = vunpack.c.l.b16 %v3713
    %v4307 = vunpack.c.h.b16 %v3713
    %v4308 = vunpack.c.l.b16 %v3714
    %v4309 = vunpack.c.h.b16 %v3714
    %v4310 = vunpack.c.l.b16 %v3715
    %v4311 = vunpack.c.h.b16 %v3715
    %v4312 = vunpack.c.l.b16 %v3716
    %v4313 = vunpack.c.h.b16 %v3716
    %v4314 = vunpack.c.l.b16 %v3717
    %v4315 = vunpack.c.h.b16 %v3717
    %v4316 = vunpack.c.l.b16 %v3718
    %v4317 = vunpack.c.h.b16 %v3718
    %v4318 = vunpack.c.l.b16 %v3719
    %v4319 = vunpack.c.h.b16 %v3719
    %v4320 = vunpack.c.l.b16 %v3720
    %v4321 = vunpack.c.h.b16 %v3720
    %v4322 = vunpack.c.l.b16 %v3721
    %v4323 = vunpack.c.h.b16 %v3721
    %v4324 = vunpack.c.l.b16 %v3722
    %v4325 = vunpack.c.h.b16 %v3722
    %v4326 = vunpack.c.l.b16 %v3723
    %v4327 = vunpack.c.h.b16 %v3723
    %v4328 = vunpack.c.l.b16 %v3724
    %v4329 = vunpack.c.h.b16 %v3724
    %v4330 = vunpack.c.l.b16 %v3725
    %v4331 = vunpack.c.h.b16 %v3725
    %v4332 = vunpack.c.l.b16 %v3726
    %v4333 = vunpack.c.h.b16 %v3726
    %v4334 = vunpack.c.l.b16 %v3727
    %v4335 = vunpack.c.h.b16 %v3727
    %v4336 = vunpack.c.l.b16 %v3728
    %v4337 = vunpack.c.h.b16 %v3728
    %v4338 = vunpack.c.l.b16 %v3729
    %v4339 = vunpack.c.h.b16 %v3729
    %v4340 = vunpack.c.l.b16 %v3730
    %v4341 = vunpack.c.h.b16 %v3730
    %v4342 = vunpack.c.l.b16 %v3731
    %v4343 = vunpack.c.h.b16 %v3731
    %v4344 = vunpack.c.l.b16 %v3732
    %v4345 = vunpack.c.h.b16 %v3732
    %v4346 = vunpack.c.l.b16 %v3733
    %v4347 = vunpack.c.h.b16 %v3733
    %v4348 = vunpack.c.l.b16 %v3734
    %v4349 = vunpack.c.h.b16 %v3734
    %v4350 = vunpack.c.l.b16 %v3735
    %v4351 = vunpack.c.h.b16 %v3735
    %v4352 = vunpack.c.l.b16 %v3736
    %v4353 = vunpack.c.h.b16 %v3736
    %v4354 = vunpack.c.l.b16 %v3737
    %v4355 = vunpack.c.h.b16 %v3737
    %v4356 = vunpack.c.l.b16 %v3738
    %v4357 = vunpack.c.h.b16 %v3738
    %v4358 = vunpack.c.l.b16 %v3739
    %v4359 = vunpack.c.h.b16 %v3739
    %v4360 = vunpack.c.l.b16 %v3740
    %v4361 = vunpack.c.h.b16 %v3740
    %v4362 = vunpack.c.l.b16 %v3741
    %v4363 = vunpack.c.h.b16 %v3741
    %v4364 = vunpack.c.l.b16 %v3742
    %v4365 = vunpack.c.h.b16 %v3742
    %v4366 = vunpack.c.l.b16 %v3743
    %v4367 = vunpack.c.h.b16 %v3743
    %v4368 = vunpack.c.l.b16 %v3744
    %v4369 = vunpack.c.h.b16 %v3744
    %v4370 = vunpack.c.l.b16 %v3745
    %v4371 = vunpack.c.h.b16 %v3745
    %v4372 = vunpack.c.l.b16 %v3746
    %v4373 = vunpack.c.h.b16 %v3746
    %v4374 = vunpack.c.l.b16 %v3747
    %v4375 = vunpack.c.h.b16 %v3747
    %v4376 = vunpack.c.l.b16 %v3748
    %v4377 = vunpack.c.h.b16 %v3748
    %v4378 = vunpack.c.l.b16 %v3749
    %v4379 = vunpack.c.h.b16 %v3749
    %v4380 = vunpack.c.l.b16 %v3750
    %v4381 = vunpack.c.h.b16 %v3750
    %v4382 = vunpack.c.l.b16 %v3751
    %v4383 = vunpack.c.h.b16 %v3751
    %v4384 = vunpack.c.l.b16 %v3752
    %v4385 = vunpack.c.h.b16 %v3752
    %v4386 = vunpack.c.l.b16 %v3753
    %v4387 = vunpack.c.h.b16 %v3753
    %v4388 = vunpack.c.l.b16 %v3754
    %v4389 = vunpack.c.h.b16 %v3754
    %v4390 = vunpack.c.l.b16 %v3755
    %v4391 = vunpack.c.h.b16 %v3755
    %v4392 = vunpack.c.l.b16 %v3756
    %v4393 = vunpack.c.h.b16 %v3756
    %v4394 = vunpack.c.l.b16 %v3757
    %v4395 = vunpack.c.h.b16 %v3757
    %v4396 = vunpack.c.l.b16 %v3758
    %v4397 = vunpack.c.h.b16 %v3758
    %v4398 = vunpack.c.l.b16 %v3759
    %v4399 = vunpack.c.h.b16 %v3759
    %v4400 = vunpack.c.l.b16 %v3760
    %v4401 = vunpack.c.h.b16 %v3760
    %v4402 = vunpack.c.l.b16 %v3761
    %v4403 = vunpack.c.h.b16 %v3761
    %v4404 = vunpack.c.l.b16 %v3762
    %v4405 = vunpack.c.h.b16 %v3762
    %v4406 = vunpack.c.l.b16 %v3763
    %v4407 = vunpack.c.h.b16 %v3763
    %v4408 = vunpack.c.l.b16 %v3764
    %v4409 = vunpack.c.h.b16 %v3764
    %v4410 = vunpack.c.l.b16 %v3765
    %v4411 = vunpack.c.h.b16 %v3765
    %v4412 = vunpack.c.l.b16 %v3766
    %v4413 = vunpack.c.h.b16 %v3766
    %v4414 = vunpack.c.l.b16 %v3767
    %v4415 = vunpack.c.h.b16 %v3767
    %v4416 = vunpack.c.l.b16 %v3768
    %v4417 = vunpack.c.h.b16 %v3768
    %v4418 = vunpack.c.l.b16 %v3769
    %v4419 = vunpack.c.h.b16 %v3769
    %v4420 = vunpack.c.l.b16 %v3770
    %v4421 = vunpack.c.h.b16 %v3770
    %v4422 = vunpack.c.l.b16 %v3771
    %v4423 = vunpack.c.h.b16 %v3771
    %v4424 = vunpack.c.l.b16 %v3772
    %v4425 = vunpack.c.h.b16 %v3772
    %v4426 = vunpack.c.l.b16 %v3773
    %v4427 = vunpack.c.h.b16 %v3773
    %v4428 = vunpack.c.l.b16 %v3774
    %v4429 = vunpack.c.h.b16 %v3774
    %v4430 = vunpack.c.l.b16 %v3775
    %v4431 = vunpack.c.h.b16 %v3775
    %v4432 = vunpack.c.l.b16 %v3776
    %v4433 = vunpack.c.h.b16 %v3776
    %v4434 = vunpack.c.l.b16 %v3777
    %v4435 = vunpack.c.h.b16 %v3777
    %v4436 = vunpack.c.l.b16 %v3778
    %v4437 = vunpack.c.h.b16 %v3778
    %v4438 = vunpack.c.l.b16 %v3779
    %v4439 = vunpack.c.h.b16 %v3779
    %v4440 = vunpack.c.l.b16 %v3780
    %v4441 = vunpack.c.h.b16 %v3780
    %v4442 = vunpack.c.l.b16 %v3781
    %v4443 = vunpack.c.h.b16 %v3781
    %v4444 = vunpack.c.l.b16 %v3782
    %v4445 = vunpack.c.h.b16 %v3782
    %v4446 = vunpack.c.l.b16 %v3783
    %v4447 = vunpack.c.h.b16 %v3783
    %v4448 = vunpack.c.l.b16 %v3784
    %v4449 = vunpack.c.h.b16 %v3784
    %v4450 = vunpack.c.l.b16 %v3785
    %v4451 = vunpack.c.h.b16 %v3785
    %v4452 = vunpack.c.l.b16 %v3786
    %v4453 = vunpack.c.h.b16 %v3786
    %v4454 = vunpack.c.l.b16 %v3787
    %v4455 = vunpack.c.h.b16 %v3787
    %v4456 = vunpack.c.l.b16 %v3788
    %v4457 = vunpack.c.h.b16 %v3788
    %v4458 = vunpack.c.l.b16 %v3789
    %v4459 = vunpack.c.h.b16 %v3789
    %v4460 = vunpack.c.l.b16 %v3790
    %v4461 = vunpack.c.h.b16 %v3790
    %v4462 = vunpack.c.l.b16 %v3791
    %v4463 = vunpack.c.h.b16 %v3791
    %v4464 = vunpack.c.l.b16 %v3792
    %v4465 = vunpack.c.h.b16 %v3792
    %v4466 = vunpack.c.l.b16 %v3793
    %v4467 = vunpack.c.h.b16 %v3793
    %v4468 = vunpack.c.l.b16 %v3794
    %v4469 = vunpack.c.h.b16 %v3794
    %v4470 = vunpack.c.l.b16 %v3795
    %v4471 = vunpack.c.h.b16 %v3795
    %v4472 = vunpack.c.l.b16 %v3796
    %v4473 = vunpack.c.h.b16 %v3796
    %v4474 = vunpack.c.l.b16 %v3797
    %v4475 = vunpack.c.h.b16 %v3797
    %v4476 = vunpack.c.l.b16 %v3798
    %v4477 = vunpack.c.h.b16 %v3798
    %v4478 = vunpack.c.l.b16 %v3799
    %v4479 = vunpack.c.h.b16 %v3799
    %v4480 = vunpack.c.l.b16 %v3800
    %v4481 = vunpack.c.h.b16 %v3800
    %v4482 = vunpack.c.l.b16 %v3801
    %v4483 = vunpack.c.h.b16 %v3801
    %v4484 = vunpack.c.l.b16 %v3802
    %v4485 = vunpack.c.h.b16 %v3802
    %v4486 = vunpack.c.l.b16 %v3803
    %v4487 = vunpack.c.h.b16 %v3803
    %v4488 = vunpack.c.l.b16 %v3804
    %v4489 = vunpack.c.h.b16 %v3804
    %v4490 = vunpack.c.l.b16 %v3805
    %v4491 = vunpack.c.h.b16 %v3805
    %v4492 = vunpack.c.l.b16 %v3806
    %v4493 = vunpack.c.h.b16 %v3806
    %v4494 = vunpack.c.l.b16 %v3807
    %v4495 = vunpack.c.h.b16 %v3807
    %v4496 = vunpack.c.l.b16 %v3808
    %v4497 = vunpack.c.h.b16 %v3808
    %v4498 = vunpack.c.l.b16 %v3809
    %v4499 = vunpack.c.h.b16 %v3809
    %v4500 = vunpack.c.l.b16 %v3810
    %v4501 = vunpack.c.h.b16 %v3810
    %v4502 = vunpack.c.l.b16 %v3811
    %v4503 = vunpack.c.h.b16 %v3811
    %v4504 = vunpack.c.l.b16 %v3812
    %v4505 = vunpack.c.h.b16 %v3812
    %v4506 = vunpack.c.l.b16 %v3813
    %v4507 = vunpack.c.h.b16 %v3813
    %v4508 = vunpack.c.l.b16 %v3814
    %v4509 = vunpack.c.h.b16 %v3814
    %v4510 = vunpack.c.l.b16 %v3815
    %v4511 = vunpack.c.h.b16 %v3815
    %v4512 = vunpack.c.l.b16 %v3816
    %v4513 = vunpack.c.h.b16 %v3816
    %v4514 = vunpack.c.l.b16 %v3817
    %v4515 = vunpack.c.h.b16 %v3817
    %v4516 = vunpack.c.l.b16 %v3818
    %v4517 = vunpack.c.h.b16 %v3818
    %v4518 = vunpack.c.l.b16 %v3819
    %v4519 = vunpack.c.h.b16 %v3819
    %v4520 = vunpack.c.l.b16 %v3820
    %v4521 = vunpack.c.h.b16 %v3820
    %v4522 = vunpack.c.l.b16 %v3821
    %v4523 = vunpack.c.h.b16 %v3821
    %v4524 = vunpack.c.l.b16 %v3822
    %v4525 = vunpack.c.h.b16 %v3822
    %v4526 = vunpack.c.l.b16 %v3823
    %v4527 = vunpack.c.h.b16 %v3823
    %v4528 = vunpack.c.l.b16 %v3824
    %v4529 = vunpack.c.h.b16 %v3824
    %v4530 = vunpack.c.l.b16 %v3825
    %v4531 = vunpack.c.h.b16 %v3825
    %v4532 = vunpack.c.l.b16 %v3826
    %v4533 = vunpack.c.h.b16 %v3826
    %v4534 = vunpack.c.l.b16 %v3827
    %v4535 = vunpack.c.h.b16 %v3827
    %v4536 = vunpack.c.l.b16 %v3828
    %v4537 = vunpack.c.h.b16 %v3828
    %v4538 = vunpack.c.l.b16 %v3829
    %v4539 = vunpack.c.h.b16 %v3829
    %v4540 = vunpack.c.l.b16 %v3830
    %v4541 = vunpack.c.h.b16 %v3830
    %v4542 = vunpack.c.l.b16 %v3831
    %v4543 = vunpack.c.h.b16 %v3831
    %v4544 = vunpack.c.l.b16 %v3832
    %v4545 = vunpack.c.h.b16 %v3832
    %v4546 = vunpack.c.l.b16 %v3833
    %v4547 = vunpack.c.h.b16 %v3833
    %v4548 = vunpack.c.l.b16 %v3834
    %v4549 = vunpack.c.h.b16 %v3834
    %v4550 = vunpack.c.l.b16 %v3835
    %v4551 = vunpack.c.h.b16 %v3835
    %v4552 = vunpack.c.l.b16 %v3836
    %v4553 = vunpack.c.h.b16 %v3836
    %v4554 = vunpack.c.l.b16 %v3837
    %v4555 = vunpack.c.h.b16 %v3837
    %v4556 = vunpack.c.l.b16 %v3838
    %v4557 = vunpack.c.h.b16 %v3838
    %v4558 = vunpack.c.l.b16 %v3839
    %v4559 = vunpack.c.h.b16 %v3839
    %v4560 = vunpack.c.l.b16 %v3840
    %v4561 = vunpack.c.h.b16 %v3840
    %v4562 = vunpack.c.l.b16 %v3841
    %v4563 = vunpack.c.h.b16 %v3841
    %v4564 = vunpack.c.l.b16 %v3842
    %v4565 = vunpack.c.h.b16 %v3842
    %v4566 = vunpack.c.l.b16 %v3843
    %v4567 = vunpack.c.h.b16 %v3843
    %v4568 = vunpack.c.l.b16 %v3844
    %v4569 = vunpack.c.h.b16 %v3844
    %v4570 = vunpack.c.l.b16 %v3845
    %v4571 = vunpack.c.h.b16 %v3845
    %v4572 = vunpack.c.l.b16 %v3846
    %v4573 = vunpack.c.h.b16 %v3846
    %v4574 = vunpack.c.l.b16 %v3847
    %v4575 = vunpack.c.h.b16 %v3847
    %v4576 = vunpack.c.l.b16 %v3848
    %v4577 = vunpack.c.h.b16 %v3848
    %v4578 = vunpack.c.l.b16 %v3849
    %v4579 = vunpack.c.h.b16 %v3849
    %v4580 = vunpack.c.l.b16 %v3850
    %v4581 = vunpack.c.h.b16 %v3850
    %v4582 = vunpack.c.l.b16 %v3851
    %v4583 = vunpack.c.h.b16 %v3851
    %v4584 = vunpack.c.l.b16 %v3852
    %v4585 = vunpack.c.h.b16 %v3852
    %v4586 = vunpack.c.l.b16 %v3853
    %v4587 = vunpack.c.h.b16 %v3853
    %v4588 = vunpack.c.l.b16 %v3854
    %v4589 = vunpack.c.h.b16 %v3854
    %v4590 = vunpack.c.l.b16 %v3855
    %v4591 = vunpack.c.h.b16 %v3855
    %v4592 = vunpack.c.l.b16 %v3856
    %v4593 = vunpack.c.h.b16 %v3856
    %v4594 = vunpack.c.l.b16 %v3857
    %v4595 = vunpack.c.h.b16 %v3857
    %v4596 = vunpack.c.l.b16 %v3858
    %v4597 = vunpack.c.h.b16 %v3858
    %v4598 = vunpack.c.l.b16 %v3859
    %v4599 = vunpack.c.h.b16 %v3859
    %v4600 = vunpack.c.l.b16 %v3860
    %v4601 = vunpack.c.h.b16 %v3860
    %v4602 = vunpack.c.l.b16 %v3861
    %v4603 = vunpack.c.h.b16 %v3861
    %v4604 = vunpack.c.l.b16 %v3862
    %v4605 = vunpack.c.h.b16 %v3862
    %v4606 = vunpack.c.l.b16 %v3863
    %v4607 = vunpack.c.h.b16 %v3863
    %v4608 = vunpack.c.l.b16 %v3864
    %v4609 = vunpack.c.h.b16 %v3864
    %v4610 = vunpack.c.l.b16 %v3865
    %v4611 = vunpack.c.h.b16 %v3865
    %v4612 = vunpack.c.l.b16 %v3866
    %v4613 = vunpack.c.h.b16 %v3866
    %v4614 = vunpack.c.l.b16 %v3867
    %v4615 = vunpack.c.h.b16 %v3867
    %v4616 = vunpack.c.l.b16 %v3868
    %v4617 = vunpack.c.h.b16 %v3868
    %v4618 = vunpack.c.l.b16 %v3869
    %v4619 = vunpack.c.h.b16 %v3869
    %v4620 = vunpack.c.l.b16 %v3870
    %v4621 = vunpack.c.h.b16 %v3870
    %v4622 = vunpack.c.l.b16 %v3871
    %v4623 = vunpack.c.h.b16 %v3871
    %v4624 = vunpack.c.l.b16 %v3872
    %v4625 = vunpack.c.h.b16 %v3872
    %v4626 = vunpack.c.l.b16 %v3873
    %v4627 = vunpack.c.h.b16 %v3873
    %v4628 = vunpack.c.l.b16 %v3874
    %v4629 = vunpack.c.h.b16 %v3874
    %v4630 = vunpack.c.l.b16 %v3875
    %v4631 = vunpack.c.h.b16 %v3875
    %v4632 = vunpack.c.l.b16 %v3876
    %v4633 = vunpack.c.h.b16 %v3876
    %v4634 = vunpack.c.l.b16 %v3877
    %v4635 = vunpack.c.h.b16 %v3877
    %v4636 = vunpack.c.l.b16 %v3878
    %v4637 = vunpack.c.h.b16 %v3878
    %v4638 = vunpack.c.l.b16 %v3879
    %v4639 = vunpack.c.h.b16 %v3879
    %v4640 = vunpack.c.l.b16 %v3880
    %v4641 = vunpack.c.h.b16 %v3880
    %v4642 = vunpack.c.l.b16 %v3881
    %v4643 = vunpack.c.h.b16 %v3881
    %v4644 = vunpack.c.l.b16 %v3882
    %v4645 = vunpack.c.h.b16 %v3882
    %v4646 = vunpack.c.l.b16 %v3883
    %v4647 = vunpack.c.h.b16 %v3883
    %v4648 = vunpack.c.l.b16 %v3884
    %v4649 = vunpack.c.h.b16 %v3884
    %v4650 = vunpack.c.l.b16 %v3885
    %v4651 = vunpack.c.h.b16 %v3885
    %v4652 = vunpack.c.l.b16 %v3886
    %v4653 = vunpack.c.h.b16 %v3886
    %v4654 = vunpack.c.l.b16 %v3887
    %v4655 = vunpack.c.h.b16 %v3887
    %v4656 = vunpack.c.l.b16 %v3888
    %v4657 = vunpack.c.h.b16 %v3888
    %v4658 = vunpack.c.l.b16 %v3889
    %v4659 = vunpack.c.h.b16 %v3889
    %v4660 = vunpack.c.l.b16 %v3890
    %v4661 = vunpack.c.h.b16 %v3890
    %v4662 = vunpack.c.l.b16 %v3891
    %v4663 = vunpack.c.h.b16 %v3891
    %v4664 = vunpack.c.l.b16 %v3892
    %v4665 = vunpack.c.h.b16 %v3892
    %v4666 = vunpack.c.l.b16 %v3893
    %v4667 = vunpack.c.h.b16 %v3893
    %v4668 = vunpack.c.l.b16 %v3894
    %v4669 = vunpack.c.h.b16 %v3894
    %v4670 = vunpack.c.l.b16 %v3895
    %v4671 = vunpack.c.h.b16 %v3895
    %v4672 = vunpack.c.l.b16 %v3896
    %v4673 = vunpack.c.h.b16 %v3896
    %v4674 = vunpack.c.l.b16 %v3897
    %v4675 = vunpack.c.h.b16 %v3897
    %v4676 = vunpack.c.l.b16 %v3898
    %v4677 = vunpack.c.h.b16 %v3898
    %v4678 = vunpack.c.l.b16 %v3899
    %v4679 = vunpack.c.h.b16 %v3899
    %v4680 = vunpack.c.l.b16 %v3900
    %v4681 = vunpack.c.h.b16 %v3900
    %v4682 = vunpack.c.l.b16 %v3901
    %v4683 = vunpack.c.h.b16 %v3901
    %v4684 = vunpack.c.l.b16 %v3902
    %v4685 = vunpack.c.h.b16 %v3902
    %v4686 = vunpack.c.l.b16 %v3903
    %v4687 = vunpack.c.h.b16 %v3903
    %v4688 = vunpack.c.l.b16 %v3904
    %v4689 = vunpack.c.h.b16 %v3904
    %v4690 = vunpack.c.l.b16 %v3905
    %v4691 = vunpack.c.h.b16 %v3905
    %v4692 = vunpack.c.l.b16 %v3906
    %v4693 = vunpack.c.h.b16 %v3906
    %v4694 = vunpack.c.l.b16 %v3907
    %v4695 = vunpack.c.h.b16 %v3907
    %v4696 = vunpack.c.l.b16 %v3908
    %v4697 = vunpack.c.h.b16 %v3908
    %v4698 = vunpack.c.l.b16 %v3909
    %v4699 = vunpack.c.h.b16 %v3909
    %v4700 = vpack.c.b16 %v4192, %v4188
    %v4701 = vpack.c.b16 %v4193, %v4189
    %v4702 = vpack.c.b16 %v4194, %v4190
    %v4703 = vpack.c.b16 %v4195, %v4191
    %v4704 = vpack.c.b16 %v4200, %v4196
    %v4705 = vpack.c.b16 %v4201, %v4197
    %v4706 = vpack.c.b16 %v4202, %v4198
    %v4707 = vpack.c.b16 %v4203, %v4199
    %v4708 = vpack.c.b16 %v4208, %v4204
    %v4709 = vpack.c.b16 %v4209, %v4205
    %v4710 = vpack.c.b16 %v4210, %v4206
    %v4711 = vpack.c.b16 %v4211, %v4207
    %v4712 = vpack.c.b16 %v4216, %v4212
    %v4713 = vpack.c.b16 %v4217, %v4213
    %v4714 = vpack.c.b16 %v4218, %v4214
    %v4715 = vpack.c.b16 %v4219, %v4215
    %v4716 = vpack.c.b16 %v4224, %v4220
    %v4717 = vpack.c.b16 %v4225, %v4221
    %v4718 = vpack.c.b16 %v4226, %v4222
    %v4719 = vpack.c.b16 %v4227, %v4223
    %v4720 = vpack.c.b16 %v4232, %v4228
    %v4721 = vpack.c.b16 %v4233, %v4229
    %v4722 = vpack.c.b16 %v4234, %v4230
    %v4723 = vpack.c.b16 %v4235, %v4231
    %v4724 = vpack.c.b16 %v4240, %v4236
    %v4725 = vpack.c.b16 %v4241, %v4237
    %v4726 = vpack.c.b16 %v4242, %v4238
    %v4727 = vpack.c.b16 %v4243, %v4239
    %v4728 = vpack.c.b16 %v4248, %v4244
    %v4729 = vpack.c.b16 %v4249, %v4245
    %v4730 = vpack.c.b16 %v4250, %v4246
    %v4731 = vpack.c.b16 %v4251, %v4247
    %v4732 = vpack.c.b16 %v4256, %v4252
    %v4733 = vpack.c.b16 %v4257, %v4253
    %v4734 = vpack.c.b16 %v4258, %v4254
    %v4735 = vpack.c.b16 %v4259, %v4255
    %v4736 = vpack.c.b16 %v4264, %v4260
    %v4737 = vpack.c.b16 %v4265, %v4261
    %v4738 = vpack.c.b16 %v4266, %v4262
    %v4739 = vpack.c.b16 %v4267, %v4263
    %v4740 = vpack.c.b16 %v4272, %v4268
    %v4741 = vpack.c.b16 %v4273, %v4269
    %v4742 = vpack.c.b16 %v4274, %v4270
    %v4743 = vpack.c.b16 %v4275, %v4271
    %v4744 = vpack.c.b16 %v4280, %v4276
    %v4745 = vpack.c.b16 %v4281, %v4277
    %v4746 = vpack.c.b16 %v4282, %v4278
    %v4747 = vpack.c.b16 %v4283, %v4279
    %v4748 = vpack.c.b16 %v4288, %v4284
    %v4749 = vpack.c.b16 %v4289, %v4285
    %v4750 = vpack.c.b16 %v4290, %v4286
    %v4751 = vpack.c.b16 %v4291, %v4287
    %v4752 = vpack.c.b16 %v4296, %v4292
    %v4753 = vpack.c.b16 %v4297, %v4293
    %v4754 = vpack.c.b16 %v4298, %v4294
    %v4755 = vpack.c.b16 %v4299, %v4295
    %v4756 = vpack.c.b16 %v4304, %v4300
    %v4757 = vpack.c.b16 %v4305, %v4301
    %v4758 = vpack.c.b16 %v4306, %v4302
    %v4759 = vpack.c.b16 %v4307, %v4303
    %v4760 = vpack.c.b16 %v4312, %v4308
    %v4761 = vpack.c.b16 %v4313, %v4309
    %v4762 = vpack.c.b16 %v4314, %v4310
    %v4763 = vpack.c.b16 %v4315, %v4311
    %v4764 = vpack.c.b16 %v4320, %v4316
    %v4765 = vpack.c.b16 %v4321, %v4317
    %v4766 = vpack.c.b16 %v4322, %v4318
    %v4767 = vpack.c.b16 %v4323, %v4319
    %v4768 = vpack.c.b16 %v4328, %v4324
    %v4769 = vpack.c.b16 %v4329, %v4325
    %v4770 = vpack.c.b16 %v4330, %v4326
    %v4771 = vpack.c.b16 %v4331, %v4327
    %v4772 = vpack.c.b16 %v4336, %v4332
    %v4773 = vpack.c.b16 %v4337, %v4333
    %v4774 = vpack.c.b16 %v4338, %v4334
    %v4775 = vpack.c.b16 %v4339, %v4335
    %v4776 = vpack.c.b16 %v4344, %v4340
    %v4777 = vpack.c.b16 %v4345, %v4341
    %v4778 = vpack.c.b16 %v4346, %v4342
    %v4779 = vpack.c.b16 %v4347, %v4343
    %v4780 = vpack.c.b16 %v4352, %v4348
    %v4781 = vpack.c.b16 %v4353, %v4349
    %v4782 = vpack.c.b16 %v4354, %v4350
    %v4783 = vpack.c.b16 %v4355, %v4351
    %v4784 = vpack.c.b16 %v4360, %v4356
    %v4785 = vpack.c.b16 %v4361, %v4357
    %v4786 = vpack.c.b16 %v4362, %v4358
    %v4787 = vpack.c.b16 %v4363, %v4359
    %v4788 = vpack.c.b16 %v4368, %v4364
    %v4789 = vpack.c.b16 %v4369, %v4365
    %v4790 = vpack.c.b16 %v4370, %v4366
    %v4791 = vpack.c.b16 %v4371, %v4367
    %v4792 = vpack.c.b16 %v4376, %v4372
    %v4793 = vpack.c.b16 %v4377, %v4373
    %v4794 = vpack.c.b16 %v4378, %v4374
    %v4795 = vpack.c.b16 %v4379, %v4375
    %v4796 = vpack.c.b16 %v4384, %v4380
    %v4797 = vpack.c.b16 %v4385, %v4381
    %v4798 = vpack.c.b16 %v4386, %v4382
    %v4799 = vpack.c.b16 %v4387, %v4383
    %v4800 = vpack.c.b16 %v4392, %v4388
    %v4801 = vpack.c.b16 %v4393, %v4389
    %v4802 = vpack.c.b16 %v4394, %v4390
    %v4803 = vpack.c.b16 %v4395, %v4391
    %v4804 = vpack.c.b16 %v4400, %v4396
    %v4805 = vpack.c.b16 %v4401, %v4397
    %v4806 = vpack.c.b16 %v4402, %v4398
    %v4807 = vpack.c.b16 %v4403, %v4399
    %v4808 = vpack.c.b16 %v4408, %v4404
    %v4809 = vpack.c.b16 %v4409, %v4405
    %v4810 = vpack.c.b16 %v4410, %v4406
    %v4811 = vpack.c.b16 %v4411, %v4407
    %v4812 = vpack.c.b16 %v4416, %v4412
    %v4813 = vpack.c.b16 %v4417, %v4413
    %v4814 = vpack.c.b16 %v4418, %v4414
    %v4815 = vpack.c.b16 %v4419, %v4415
    %v4816 = vpack.c.b16 %v4424, %v4420
    %v4817 = vpack.c.b16 %v4425, %v4421
    %v4818 = vpack.c.b16 %v4426, %v4422
    %v4819 = vpack.c.b16 %v4427, %v4423
    %v4820 = vpack.c.b16 %v4432, %v4428
    %v4821 = vpack.c.b16 %v4433, %v4429
    %v4822 = vpack.c.b16 %v4434, %v4430
    %v4823 = vpack.c.b16 %v4435, %v4431
    %v4824 = vpack.c.b16 %v4440, %v4436
    %v4825 = vpack.c.b16 %v4441, %v4437
    %v4826 = vpack.c.b16 %v4442, %v4438
    %v4827 = vpack.c.b16 %v4443, %v4439
    %v4828 = vpack.c.b16 %v4448, %v4444
    %v4829 = vpack.c.b16 %v4449, %v4445
    %v4830 = vpack.c.b16 %v4450, %v4446
    %v4831 = vpack.c.b16 %v4451, %v4447
    %v4832 = vpack.c.b16 %v4456, %v4452
    %v4833 = vpack.c.b16 %v4457, %v4453
    %v4834 = vpack.c.b16 %v4458, %v4454
    %v4835 = vpack.c.b16 %v4459, %v4455
    %v4836 = vpack.c.b16 %v4464, %v4460
    %v4837 = vpack.c.b16 %v4465, %v4461
    %v4838 = vpack.c.b16 %v4466, %v4462
    %v4839 = vpack.c.b16 %v4467, %v4463
    %v4840 = vpack.c.b16 %v4472, %v4468
    %v4841 = vpack.c.b16 %v4473, %v4469
    %v4842 = vpack.c.b16 %v4474, %v4470
    %v4843 = vpack.c.b16 %v4475, %v4471
    %v4844 = vpack.c.b16 %v4480, %v4476
    %v4845 = vpack.c.b16 %v4481, %v4477
    %v4846 = vpack.c.b16 %v4482, %v4478
    %v4847 = vpack.c.b16 %v4483, %v4479
    %v4848 = vpack.c.b16 %v4488, %v4484
    %v4849 = vpack.c.b16 %v4489, %v4485
    %v4850 = vpack.c.b16 %v4490, %v4486
    %v4851 = vpack.c.b16 %v4491, %v4487
    %v4852 = vpack.c.b16 %v4496, %v4492
    %v4853 = vpack.c.b16 %v4497, %v4493
    %v4854 = vpack.c.b16 %v4498, %v4494
    %v4855 = vpack.c.b16 %v4499, %v4495
    %v4856 = vpack.c.b16 %v4504, %v4500
    %v4857 = vpack.c.b16 %v4505, %v4501
    %v4858 = vpack.c.b16 %v4506, %v4502
    %v4859 = vpack.c.b16 %v4507, %v4503
    %v4860 = vpack.c.b16 %v4512, %v4508
    %v4861 = vpack.c.b16 %v4513, %v4509
    %v4862 = vpack.c.b16 %v4514, %v4510
    %v4863 = vpack.c.b16 %v4515, %v4511
    %v4864 = vpack.c.b16 %v4520, %v4516
    %v4865 = vpack.c.b16 %v4521, %v4517
    %v4866 = vpack.c.b16 %v4522, %v4518
    %v4867 = vpack.c.b16 %v4523, %v4519
    %v4868 = vpack.c.b16 %v4528, %v4524
    %v4869 = vpack.c.b16 %v4529, %v4525
    %v4870 = vpack.c.b16 %v4530, %v4526
    %v4871 = vpack.c.b16 %v4531, %v4527
    %v4872 = vpack.c.b16 %v4536, %v4532
    %v4873 = vpack.c.b16 %v4537, %v4533
    %v4874 = vpack.c.b16 %v4538, %v4534
    %v4875 = vpack.c.b16 %v4539, %v4535
    %v4876 = vpack.c.b16 %v4544, %v4540
    %v4877 = vpack.c.b16 %v4545, %v4541
    %v4878 = vpack.c.b16 %v4546, %v4542
    %v4879 = vpack.c.b16 %v4547, %v4543
    %v4880 = vpack.c.b16 %v4552, %v4548
    %v4881 = vpack.c.b16 %v4553, %v4549
    %v4882 = vpack.c.b16 %v4554, %v4550
    %v4883 = vpack.c.b16 %v4555, %v4551
    %v4884 = vpack.c.b16 %v4560, %v4556
    %v4885 = vpack.c.b16 %v4561, %v4557
    %v4886 = vpack.c.b16 %v4562, %v4558
    %v4887 = vpack.c.b16 %v4563, %v4559
    %v4888 = vpack.c.b16 %v4568, %v4564
    %v4889 = vpack.c.b16 %v4569, %v4565
    %v4890 = vpack.c.b16 %v4570, %v4566
    %v4891 = vpack.c.b16 %v4571, %v4567
    %v4892 = vpack.c.b16 %v4576, %v4572
    %v4893 = vpack.c.b16 %v4577, %v4573
    %v4894 = vpack.c.b16 %v4578, %v4574
    %v4895 = vpack.c.b16 %v4579, %v4575
    %v4896 = vpack.c.b16 %v4584, %v4580
    %v4897 = vpack.c.b16 %v4585, %v4581
    %v4898 = vpack.c.b16 %v4586, %v4582
    %v4899 = vpack.c.b16 %v4587, %v4583
    %v4900 = vpack.c.b16 %v4592, %v4588
    %v4901 = vpack.c.b16 %v4593, %v4589
    %v4902 = vpack.c.b16 %v4594, %v4590
    %v4903 = vpack.c.b16 %v4595, %v4591
    %v4904 = vpack.c.b16 %v4600, %v4596
    %v4905 = vpack.c.b16 %v4601, %v4597
    %v4906 = vpack.c.b16 %v4602, %v4598
    %v4907 = vpack.c.b16 %v4603, %v4599
    %v4908 = vpack.c.b16 %v4608, %v4604
    %v4909 = vpack.c.b16 %v4609, %v4605
    %v4910 = vpack.c.b16 %v4610, %v4606
    %v4911 = vpack.c.b16 %v4611, %v4607
    %v4912 = vpack.c.b16 %v4616, %v4612
    %v4913 = vpack.c.b16 %v4617, %v4613
    %v4914 = vpack.c.b16 %v4618, %v4614
    %v4915 = vpack.c.b16 %v4619, %v4615
    %v4916 = vpack.c.b16 %v4624, %v4620
    %v4917 = vpack.c.b16 %v4625, %v4621
    %v4918 = vpack.c.b16 %v4626, %v4622
    %v4919 = vpack.c.b16 %v4627, %v4623
    %v4920 = vpack.c.b16 %v4632, %v4628
    %v4921 = vpack.c.b16 %v4633, %v4629
    %v4922 = vpack.c.b16 %v4634, %v4630
    %v4923 = vpack.c.b16 %v4635, %v4631
    %v4924 = vpack.c.b16 %v4640, %v4636
    %v4925 = vpack.c.b16 %v4641, %v4637
    %v4926 = vpack.c.b16 %v4642, %v4638
    %v4927 = vpack.c.b16 %v4643, %v4639
    %v4928 = vpack.c.b16 %v4648, %v4644
    %v4929 = vpack.c.b16 %v4649, %v4645
    %v4930 = vpack.c.b16 %v4650, %v4646
    %v4931 = vpack.c.b16 %v4651, %v4647
    %v4932 = vpack.c.b16 %v4656, %v4652
    %v4933 = vpack.c.b16 %v4657, %v4653
    %v4934 = vpack.c.b16 %v4658, %v4654
    %v4935 = vpack.c.b16 %v4659, %v4655
    %v4936 = vpack.c.b16 %v4664, %v4660
    %v4937 = vpack.c.b16 %v4665, %v4661
    %v4938 = vpack.c.b16 %v4666, %v4662
    %v4939 = vpack.c.b16 %v4667, %v4663
    %v4940 = vpack.c.b16 %v4672, %v4668
    %v4941 = vpack.c.b16 %v4673, %v4669
    %v4942 = vpack.c.b16 %v4674, %v4670
    %v4943 = vpack.c.b16 %v4675, %v4671
    %v4944 = vpack.c.b16 %v4680, %v4676
    %v4945 = vpack.c.b16 %v4681, %v4677
    %v4946 = vpack.c.b16 %v4682, %v4678
    %v4947 = vpack.c.b16 %v4683, %v4679
    %v4948 = vpack.c.b16 %v4688, %v4684
    %v4949 = vpack.c.b16 %v4689, %v4685
    %v4950 = vpack.c.b16 %v4690, %v4686
    %v4951 = vpack.c.b16 %v4691, %v4687
    %v4952 = vpack.c.b16 %v4696, %v4692
    %v4953 = vpack.c.b16 %v4697, %v4693
    %v4954 = vpack.c.b16 %v4698, %v4694
    %v4955 = vpack.c.b16 %v4699, %v4695
    %5212 = vmatprep.subr.bf16.mxu0 %v4701
    %5213 = vmatpush1.bf16.msra.mxu0 %v4700
    %5214 = vmatprep.subr.bf16.mxu0 %v4705
    %5215 = vmatpush1.bf16.msra.mxu0 %v4704
    %5216 = vmatprep.subr.bf16.mxu0 %v4709
    %5217 = vmatpush1.bf16.msra.mxu0 %v4708
    %5218 = vmatprep.subr.bf16.mxu0 %v4713
    %5219 = vmatpush1.bf16.msra.mxu0 %v4712
    %5220 = vmatprep.subr.bf16.mxu0 %v4717
    %5221 = vmatpush1.bf16.msra.mxu0 %v4716
    %5222 = vmatprep.subr.bf16.mxu0 %v4721
    %5223 = vmatpush1.bf16.msra.mxu0 %v4720
    %5224 = vmatprep.subr.bf16.mxu0 %v4725
    %5225 = vmatpush1.bf16.msra.mxu0 %v4724
    %5226 = vmatprep.subr.bf16.mxu0 %v4729
    %5227 = vmatpush1.bf16.msra.mxu0 %v4728
    %5228 = vmatprep.subr.bf16.mxu0 %v4733
    %5229 = vmatpush1.bf16.msra.mxu0 %v4732
    %5230 = vmatprep.subr.bf16.mxu0 %v4737
    %5231 = vmatpush1.bf16.msra.mxu0 %v4736
    %5232 = vmatprep.subr.bf16.mxu0 %v4741
    %5233 = vmatpush1.bf16.msra.mxu0 %v4740
    %5234 = vmatprep.subr.bf16.mxu0 %v4745
    %5235 = vmatpush1.bf16.msra.mxu0 %v4744
    %5236 = vmatprep.subr.bf16.mxu0 %v4749
    %5237 = vmatpush1.bf16.msra.mxu0 %v4748
    %5238 = vmatprep.subr.bf16.mxu0 %v4753
    %5239 = vmatpush1.bf16.msra.mxu0 %v4752
    %5240 = vmatprep.subr.bf16.mxu0 %v4757
    %5241 = vmatpush1.bf16.msra.mxu0 %v4756
    %5242 = vmatprep.subr.bf16.mxu0 %v4761
    %5243 = vmatpush1.bf16.msra.mxu0 %v4760
    %5244 = vmatprep.mubr.bf16.mxu0 %v3647
    %5245 = vmatmul.mubr.bf16.gmra.mrb[0].mxu0 %v3646
    %v5246 = vpop.f32.mrb[0].mxu0
    %v5247 = vadd.f32 %v3915, %v5246
    %v5248 = vpop.f32.mrb[0].mxu0
    %v5249 = vadd.f32 %v3919, %v5248
    %v5250 = vpop.f32.mrb[0].mxu0
    %v5251 = vadd.f32 %v3915, %v5250
    %v5252 = vpop.f32.mrb[0].mxu0
    %v5253 = vadd.f32 %v3919, %v5252
    %5254 = vdwg.mxu0
    %5255 = vmatprep.subr.bf16.mxu0 %v4765
    %5256 = vmatpush1.bf16.msra.mxu0 %v4764
    %5257 = vmatprep.subr.bf16.mxu0 %v4769
    %5258 = vmatpush1.bf16.msra.mxu0 %v4768
    %5259 = vmatprep.subr.bf16.mxu0 %v4773
    %5260 = vmatpush1.bf16.msra.mxu0 %v4772
    %5261 = vmatprep.subr.bf16.mxu0 %v4777
    %5262 = vmatpush1.bf16.msra.mxu0 %v4776
    %5263 = vmatprep.subr.bf16.mxu0 %v4781
    %5264 = vmatpush1.bf16.msra.mxu0 %v4780
    %5265 = vmatprep.subr.bf16.mxu0 %v4785
    %5266 = vmatpush1.bf16.msra.mxu0 %v4784
    %5267 = vmatprep.subr.bf16.mxu0 %v4789
    %5268 = vmatpush1.bf16.msra.mxu0 %v4788
    %5269 = vmatprep.subr.bf16.mxu0 %v4793
    %5270 = vmatpush1.bf16.msra.mxu0 %v4792
    %5271 = vmatprep.subr.bf16.mxu0 %v4797
    %5272 = vmatpush1.bf16.msra.mxu0 %v4796
    %5273 = vmatprep.subr.bf16.mxu0 %v4801
    %5274 = vmatpush1.bf16.msra.mxu0 %v4800
    %5275 = vmatprep.subr.bf16.mxu0 %v4805
    %5276 = vmatpush1.bf16.msra.mxu0 %v4804
    %5277 = vmatprep.subr.bf16.mxu0 %v4809
    %5278 = vmatpush1.bf16.msra.mxu0 %v4808
    %5279 = vmatprep.subr.bf16.mxu0 %v4813
    %5280 = vmatpush1.bf16.msra.mxu0 %v4812
    %5281 = vmatprep.subr.bf16.mxu0 %v4817
    %5282 = vmatpush1.bf16.msra.mxu0 %v4816
    %5283 = vmatprep.subr.bf16.mxu0 %v4821
    %5284 = vmatpush1.bf16.msra.mxu0 %v4820
    %5285 = vmatprep.subr.bf16.mxu0 %v4825
    %5286 = vmatpush1.bf16.msra.mxu0 %v4824
    %5287 = vmatprep.mubr.bf16.mxu0 %v3649
    %5288 = vmatmul.mubr.bf16.gmra.mrb[0].mxu0 %v3648
    %v5289 = vpop.f32.mrb[0].mxu0
    %v5290 = vadd.f32 %v5247, %v5289
    %v5291 = vpop.f32.mrb[0].mxu0
    %v5292 = vadd.f32 %v5249, %v5291
    %v5293 = vpop.f32.mrb[0].mxu0
    %v5294 = vadd.f32 %v5251, %v5293
    %v5295 = vpop.f32.mrb[0].mxu0
    %v5296 = vadd.f32 %v5253, %v5295
    %5297 = vdwg.mxu0
    %5298 = vmatprep.subr.bf16.mxu0 %v4829
    %5299 = vmatpush1.bf16.msra.mxu0 %v4828
    %5300 = vmatprep.subr.bf16.mxu0 %v4833
    %5301 = vmatpush1.bf16.msra.mxu0 %v4832
    %5302 = vmatprep.subr.bf16.mxu0 %v4837
    %5303 = vmatpush1.bf16.msra.mxu0 %v4836
    %5304 = vmatprep.subr.bf16.mxu0 %v4841
    %5305 = vmatpush1.bf16.msra.mxu0 %v4840
    %5306 = vmatprep.subr.bf16.mxu0 %v4845
    %5307 = vmatpush1.bf16.msra.mxu0 %v4844
    %5308 = vmatprep.subr.bf16.mxu0 %v4849
    %5309 = vmatpush1.bf16.msra.mxu0 %v4848
    %5310 = vmatprep.subr.bf16.mxu0 %v4853
    %5311 = vmatpush1.bf16.msra.mxu0 %v4852
    %5312 = vmatprep.subr.bf16.mxu0 %v4857
    %5313 = vmatpush1.bf16.msra.mxu0 %v4856
    %5314 = vmatprep.subr.bf16.mxu0 %v4861
    %5315 = vmatpush1.bf16.msra.mxu0 %v4860
    %5316 = vmatprep.subr.bf16.mxu0 %v4865
    %5317 = vmatpush1.bf16.msra.mxu0 %v4864
    %5318 = vmatprep.subr.bf16.mxu0 %v4869
    %5319 = vmatpush1.bf16.msra.mxu0 %v4868
    %5320 = vmatprep.subr.bf16.mxu0 %v4873
    %5321 = vmatpush1.bf16.msra.mxu0 %v4872
    %5322 = vmatprep.subr.bf16.mxu0 %v4877
    %5323 = vmatpush1.bf16.msra.mxu0 %v4876
    %5324 = vmatprep.subr.bf16.mxu0 %v4881
    %5325 = vmatpush1.bf16.msra.mxu0 %v4880
    %5326 = vmatprep.subr.bf16.mxu0 %v4885
    %5327 = vmatpush1.bf16.msra.mxu0 %v4884
    %5328 = vmatprep.subr.bf16.mxu0 %v4889
    %5329 = vmatpush1.bf16.msra.mxu0 %v4888
    %5330 = vmatprep.mubr.bf16.mxu0 %v3651
    %5331 = vmatmul.mubr.bf16.gmra.mrb[0].mxu0 %v3650
    %v5332 = vpop.f32.mrb[0].mxu0
    %v5333 = vadd.f32 %v5290, %v5332
    %v5334 = vpop.f32.mrb[0].mxu0
    %v5335 = vadd.f32 %v5292, %v5334
    %v5336 = vpop.f32.mrb[0].mxu0
    %v5337 = vadd.f32 %v5294, %v5336
    %v5338 = vpop.f32.mrb[0].mxu0
    %v5339 = vadd.f32 %v5296, %v5338
    %5340 = vdwg.mxu0
    %5341 = vmatprep.subr.bf16.mxu0 %v4893
    %5342 = vmatpush1.bf16.msra.mxu0 %v4892
    %5343 = vmatprep.subr.bf16.mxu0 %v4897
    %5344 = vmatpush1.bf16.msra.mxu0 %v4896
    %5345 = vmatprep.subr.bf16.mxu0 %v4901
    %5346 = vmatpush1.bf16.msra.mxu0 %v4900
    %5347 = vmatprep.subr.bf16.mxu0 %v4905
    %5348 = vmatpush1.bf16.msra.mxu0 %v4904
    %5349 = vmatprep.subr.bf16.mxu0 %v4909
    %5350 = vmatpush1.bf16.msra.mxu0 %v4908
    %5351 = vmatprep.subr.bf16.mxu0 %v4913
    %5352 = vmatpush1.bf16.msra.mxu0 %v4912
    %5353 = vmatprep.subr.bf16.mxu0 %v4917
    %5354 = vmatpush1.bf16.msra.mxu0 %v4916
    %5355 = vmatprep.subr.bf16.mxu0 %v4921
    %5356 = vmatpush1.bf16.msra.mxu0 %v4920
    %5357 = vmatprep.subr.bf16.mxu0 %v4925
    %5358 = vmatpush1.bf16.msra.mxu0 %v4924
    %5359 = vmatprep.subr.bf16.mxu0 %v4929
    %5360 = vmatpush1.bf16.msra.mxu0 %v4928
    %5361 = vmatprep.subr.bf16.mxu0 %v4933
    %5362 = vmatpush1.bf16.msra.mxu0 %v4932
    %5363 = vmatprep.subr.bf16.mxu0 %v4937
    %5364 = vmatpush1.bf16.msra.mxu0 %v4936
    %5365 = vmatprep.subr.bf16.mxu0 %v4941
    %5366 = vmatpush1.bf16.msra.mxu0 %v4940
    %5367 = vmatprep.subr.bf16.mxu0 %v4945
    %5368 = vmatpush1.bf16.msra.mxu0 %v4944
    %5369 = vmatprep.subr.bf16.mxu0 %v4949
    %5370 = vmatpush1.bf16.msra.mxu0 %v4948
    %5371 = vmatprep.subr.bf16.mxu0 %v4953
    %5372 = vmatpush1.bf16.msra.mxu0 %v4952
    %5373 = vmatprep.mubr.bf16.mxu0 %v3653
    %5374 = vmatmul.mubr.bf16.gmra.mrb[0].mxu0 %v3652
    %v5375 = vpop.f32.mrb[0].mxu0
    %v5376 = vadd.f32 %v5333, %v5375
    %v5377 = vpop.f32.mrb[0].mxu0
    %v5378 = vadd.f32 %v5335, %v5377
    %v5379 = vpop.f32.mrb[0].mxu0
    %v5380 = vadd.f32 %v5337, %v5379
    %v5381 = vpop.f32.mrb[0].mxu0
    %v5382 = vadd.f32 %v5339, %v5381
    %5383 = vdwg.mxu0
    %5384 = vmatprep.subr.bf16.mxu0 %v4703
    %5385 = vmatpush1.bf16.msra.mxu0 %v4702
    %5386 = vmatprep.subr.bf16.mxu0 %v4707
    %5387 = vmatpush1.bf16.msra.mxu0 %v4706
    %5388 = vmatprep.subr.bf16.mxu0 %v4711
    %5389 = vmatpush1.bf16.msra.mxu0 %v4710
    %5390 = vmatprep.subr.bf16.mxu0 %v4715
    %5391 = vmatpush1.bf16.msra.mxu0 %v4714
    %5392 = vmatprep.subr.bf16.mxu0 %v4719
    %5393 = vmatpush1.bf16.msra.mxu0 %v4718
    %5394 = vmatprep.subr.bf16.mxu0 %v4723
    %5395 = vmatpush1.bf16.msra.mxu0 %v4722
    %5396 = vmatprep.subr.bf16.mxu0 %v4727
    %5397 = vmatpush1.bf16.msra.mxu0 %v4726
    %5398 = vmatprep.subr.bf16.mxu0 %v4731
    %5399 = vmatpush1.bf16.msra.mxu0 %v4730
    %5400 = vmatprep.subr.bf16.mxu0 %v4735
    %5401 = vmatpush1.bf16.msra.mxu0 %v4734
    %5402 = vmatprep.subr.bf16.mxu0 %v4739
    %5403 = vmatpush1.bf16.msra.mxu0 %v4738
    %5404 = vmatprep.subr.bf16.mxu0 %v4743
    %5405 = vmatpush1.bf16.msra.mxu0 %v4742
    %5406 = vmatprep.subr.bf16.mxu0 %v4747
    %5407 = vmatpush1.bf16.msra.mxu0 %v4746
    %5408 = vmatprep.subr.bf16.mxu0 %v4751
    %5409 = vmatpush1.bf16.msra.mxu0 %v4750
    %5410 = vmatprep.subr.bf16.mxu0 %v4755
    %5411 = vmatpush1.bf16.msra.mxu0 %v4754
    %5412 = vmatprep.subr.bf16.mxu0 %v4759
    %5413 = vmatpush1.bf16.msra.mxu0 %v4758
    %5414 = vmatprep.subr.bf16.mxu0 %v4763
    %5415 = vmatpush1.bf16.msra.mxu0 %v4762
    %5416 = vmatprep.mubr.bf16.mxu0 %v3647
    %5417 = vmatmul.mubr.bf16.gmra.mrb[0].mxu0 %v3646
    %v5418 = vpop.f32.mrb[0].mxu0
    %v5419 = vadd.f32 %v3923, %v5418
    %v5420 = vpop.f32.mrb[0].mxu0
    %v5421 = vadd.f32 %v3927, %v5420
    %v5422 = vpop.f32.mrb[0].mxu0
    %v5423 = vadd.f32 %v3923, %v5422
    %v5424 = vpop.f32.mrb[0].mxu0
    %v5425 = vadd.f32 %v3927, %v5424
    %5426 = vdwg.mxu0
    %5427 = vmatprep.subr.bf16.mxu0 %v4767
    %5428 = vmatpush1.bf16.msra.mxu0 %v4766
    %5429 = vmatprep.subr.bf16.mxu0 %v4771
    %5430 = vmatpush1.bf16.msra.mxu0 %v4770
    %5431 = vmatprep.subr.bf16.mxu0 %v4775
    %5432 = vmatpush1.bf16.msra.mxu0 %v4774
    %5433 = vmatprep.subr.bf16.mxu0 %v4779
    %5434 = vmatpush1.bf16.msra.mxu0 %v4778
    %5435 = vmatprep.subr.bf16.mxu0 %v4783
    %5436 = vmatpush1.bf16.msra.mxu0 %v4782
    %5437 = vmatprep.subr.bf16.mxu0 %v4787
    %5438 = vmatpush1.bf16.msra.mxu0 %v4786
    %5439 = vmatprep.subr.bf16.mxu0 %v4791
    %5440 = vmatpush1.bf16.msra.mxu0 %v4790
    %5441 = vmatprep.subr.bf16.mxu0 %v4795
    %5442 = vmatpush1.bf16.msra.mxu0 %v4794
    %5443 = vmatprep.subr.bf16.mxu0 %v4799
    %5444 = vmatpush1.bf16.msra.mxu0 %v4798
    %5445 = vmatprep.subr.bf16.mxu0 %v4803
    %5446 = vmatpush1.bf16.msra.mxu0 %v4802
    %5447 = vmatprep.subr.bf16.mxu0 %v4807
    %5448 = vmatpush1.bf16.msra.mxu0 %v4806
    %5449 = vmatprep.subr.bf16.mxu0 %v4811
    %5450 = vmatpush1.bf16.msra.mxu0 %v4810
    %5451 = vmatprep.subr.bf16.mxu0 %v4815
    %5452 = vmatpush1.bf16.msra.mxu0 %v4814
    %5453 = vmatprep.subr.bf16.mxu0 %v4819
    %5454 = vmatpush1.bf16.msra.mxu0 %v4818
    %5455 = vmatprep.subr.bf16.mxu0 %v4823
    %5456 = vmatpush1.bf16.msra.mxu0 %v4822
    %5457 = vmatprep.subr.bf16.mxu0 %v4827
    %5458 = vmatpush1.bf16.msra.mxu0 %v4826
    %5459 = vmatprep.mubr.bf16.mxu0 %v3649
    %5460 = vmatmul.mubr.bf16.gmra.mrb[0].mxu0 %v3648
    %v5461 = vpop.f32.mrb[0].mxu0
    %v5462 = vadd.f32 %v5419, %v5461
    %v5463 = vpop.f32.mrb[0].mxu0
    %v5464 = vadd.f32 %v5421, %v5463
    %v5465 = vpop.f32.mrb[0].mxu0
    %v5466 = vadd.f32 %v5423, %v5465
    %v5467 = vpop.f32.mrb[0].mxu0
    %v5468 = vadd.f32 %v5425, %v5467
    %5469 = vdwg.mxu0
    %5470 = vmatprep.subr.bf16.mxu0 %v4831
    %5471 = vmatpush1.bf16.msra.mxu0 %v4830
    %5472 = vmatprep.subr.bf16.mxu0 %v4835
    %5473 = vmatpush1.bf16.msra.mxu0 %v4834
    %5474 = vmatprep.subr.bf16.mxu0 %v4839
    %5475 = vmatpush1.bf16.msra.mxu0 %v4838
    %5476 = vmatprep.subr.bf16.mxu0 %v4843
    %5477 = vmatpush1.bf16.msra.mxu0 %v4842
    %5478 = vmatprep.subr.bf16.mxu0 %v4847
    %5479 = vmatpush1.bf16.msra.mxu0 %v4846
    %5480 = vmatprep.subr.bf16.mxu0 %v4851
    %5481 = vmatpush1.bf16.msra.mxu0 %v4850
    %5482 = vmatprep.subr.bf16.mxu0 %v4855
    %5483 = vmatpush1.bf16.msra.mxu0 %v4854
    %5484 = vmatprep.subr.bf16.mxu0 %v4859
    %5485 = vmatpush1.bf16.msra.mxu0 %v4858
    %5486 = vmatprep.subr.bf16.mxu0 %v4863
    %5487 = vmatpush1.bf16.msra.mxu0 %v4862
    %5488 = vmatprep.subr.bf16.mxu0 %v4867
    %5489 = vmatpush1.bf16.msra.mxu0 %v4866
    %5490 = vmatprep.subr.bf16.mxu0 %v4871
    %5491 = vmatpush1.bf16.msra.mxu0 %v4870
    %5492 = vmatprep.subr.bf16.mxu0 %v4875
    %5493 = vmatpush1.bf16.msra.mxu0 %v4874
    %5494 = vmatprep.subr.bf16.mxu0 %v4879
    %5495 = vmatpush1.bf16.msra.mxu0 %v4878
    %5496 = vmatprep.subr.bf16.mxu0 %v4883
    %5497 = vmatpush1.bf16.msra.mxu0 %v4882
    %5498 = vmatprep.subr.bf16.mxu0 %v4887
    %5499 = vmatpush1.bf16.msra.mxu0 %v4886
    %5500 = vmatprep.subr.bf16.mxu0 %v4891
    %5501 = vmatpush1.bf16.msra.mxu0 %v4890
    %5502 = vmatprep.mubr.bf16.mxu0 %v3651
    %5503 = vmatmul.mubr.bf16.gmra.mrb[0].mxu0 %v3650
    %v5504 = vpop.f32.mrb[0].mxu0
    %v5505 = vadd.f32 %v5462, %v5504
    %v5506 = vpop.f32.mrb[0].mxu0
    %v5507 = vadd.f32 %v5464, %v5506
    %v5508 = vpop.f32.mrb[0].mxu0
    %v5509 = vadd.f32 %v5466, %v5508
    %v5510 = vpop.f32.mrb[0].mxu0
    %v5511 = vadd.f32 %v5468, %v5510
    %5512 = vdwg.mxu0
    %5513 = vmatprep.subr.bf16.mxu0 %v4895
    %5514 = vmatpush1.bf16.msra.mxu0 %v4894
    %5515 = vmatprep.subr.bf16.mxu0 %v4899
    %5516 = vmatpush1.bf16.msra.mxu0 %v4898
    %5517 = vmatprep.subr.bf16.mxu0 %v4903
    %5518 = vmatpush1.bf16.msra.mxu0 %v4902
    %5519 = vmatprep.subr.bf16.mxu0 %v4907
    %5520 = vmatpush1.bf16.msra.mxu0 %v4906
    %5521 = vmatprep.subr.bf16.mxu0 %v4911
    %5522 = vmatpush1.bf16.msra.mxu0 %v4910
    %5523 = vmatprep.subr.bf16.mxu0 %v4915
    %5524 = vmatpush1.bf16.msra.mxu0 %v4914
    %5525 = vmatprep.subr.bf16.mxu0 %v4919
    %5526 = vmatpush1.bf16.msra.mxu0 %v4918
    %5527 = vmatprep.subr.bf16.mxu0 %v4923
    %5528 = vmatpush1.bf16.msra.mxu0 %v4922
    %5529 = vmatprep.subr.bf16.mxu0 %v4927
    %5530 = vmatpush1.bf16.msra.mxu0 %v4926
    %5531 = vmatprep.subr.bf16.mxu0 %v4931
    %5532 = vmatpush1.bf16.msra.mxu0 %v4930
    %5533 = vmatprep.subr.bf16.mxu0 %v4935
    %5534 = vmatpush1.bf16.msra.mxu0 %v4934
    %5535 = vmatprep.subr.bf16.mxu0 %v4939
    %5536 = vmatpush1.bf16.msra.mxu0 %v4938
    %5537 = vmatprep.subr.bf16.mxu0 %v4943
    %5538 = vmatpush1.bf16.msra.mxu0 %v4942
    %5539 = vmatprep.subr.bf16.mxu0 %v4947
    %5540 = vmatpush1.bf16.msra.mxu0 %v4946
    %5541 = vmatprep.subr.bf16.mxu0 %v4951
    %5542 = vmatpush1.bf16.msra.mxu0 %v4950
    %5543 = vmatprep.subr.bf16.mxu0 %v4955
    %5544 = vmatpush1.bf16.msra.mxu0 %v4954
    %5545 = vmatprep.mubr.bf16.mxu0 %v3653
    %5546 = vmatmul.mubr.bf16.gmra.mrb[0].mxu0 %v3652
    %v5547 = vpop.f32.mrb[0].mxu0
    %v5548 = vadd.f32 %v5505, %v5547
    %v5549 = vpop.f32.mrb[0].mxu0
    %v5550 = vadd.f32 %v5507, %v5549
    %v5551 = vpop.f32.mrb[0].mxu0
    %v5552 = vadd.f32 %v5509, %v5551
    %v5553 = vpop.f32.mrb[0].mxu0
    %v5554 = vadd.f32 %v5511, %v5553
    %5555 = vdwg.mxu0
    %vm5556 = vcmp.gt.f32.partialorder %v5376, 0.0
    %vm5557 = vcmp.gt.f32.partialorder %v5378, 0.0
    %vm5558 = vcmp.gt.f32.partialorder %v5548, 0.0
    %vm5559 = vcmp.gt.f32.partialorder %v5550, 0.0
    %vm5560 = vcmp.gt.f32.partialorder %v5380, 0.0
    %vm5561 = vcmp.gt.f32.partialorder %v5382, 0.0
    %vm5562 = vcmp.gt.f32.partialorder %v5552, 0.0
    %vm5563 = vcmp.gt.f32.partialorder %v5554, 0.0
    %v5564 = vmul.f32 %v5376, 0.2
    %v5565 = vmul.f32 %v5378, 0.2
    %v5566 = vmul.f32 %v5548, 0.2
    %v5567 = vmul.f32 %v5550, 0.2
    %v5568 = vmul.f32 %v5380, 0.2
    %v5569 = vmul.f32 %v5382, 0.2
    %v5570 = vmul.f32 %v5552, 0.2
    %v5571 = vmul.f32 %v5554, 0.2
    %v5572 = vsel %vm5556, %v5376, %v5564
    %v5573 = vsel %vm5557, %v5378, %v5565
    %v5574 = vsel %vm5558, %v5548, %v5566
    %v5575 = vsel %vm5559, %v5550, %v5567
    %v5576 = vsel %vm5560, %v5380, %v5568
    %v5577 = vsel %vm5561, %v5382, %v5569
    %v5578 = vsel %vm5562, %v5552, %v5570
    %v5579 = vsel %vm5563, %v5554, %v5571
    %v5580 = vpack.c.bf16 %v5576, %v5572
    %v5581 = vpack.c.bf16 %v5577, %v5573
    %v5582 = vpack.c.bf16 %v5578, %v5574
    %v5583 = vpack.c.bf16 %v5579, %v5575
    %v5584 = vld [vmem:[#allocation12] sm:$0xff]
    %v5585 = vld [vmem:[#allocation12 + $0x8] sm:$0xff]
    %v5586 = vld [vmem:[#allocation12 + $0x10] sm:$0xff]
    %v5587 = vld [vmem:[#allocation12 + $0x18] sm:$0xff]
    %v5588 = vld [vmem:[#allocation12 + $0x20] sm:$0xff]
    %v5589 = vld [vmem:[#allocation12 + $0x28] sm:$0xff]
    %v5590 = vld [vmem:[#allocation12 + $0x30] sm:$0xff]
    %v5591 = vld [vmem:[#allocation12 + $0x38] sm:$0xff]
    %v5592 = vld [vmem:[#allocation12 + $0x40] sm:$0xff]
    %v5593 = vld [vmem:[#allocation12 + $0x48] sm:$0xff]
    %v5594 = vld [vmem:[#allocation12 + $0x50] sm:$0xff]
    %v5595 = vld [vmem:[#allocation12 + $0x58] sm:$0xff]
    %v5596 = vld [vmem:[#allocation12 + $0x60] sm:$0xff]
    %v5597 = vld [vmem:[#allocation12 + $0x68] sm:$0xff]
    %v5598 = vld [vmem:[#allocation12 + $0x70] sm:$0xff]
    %v5599 = vld [vmem:[#allocation12 + $0x78] sm:$0xff]
    %v5600 = vld [vmem:[#allocation12 + $0x80] sm:$0xff]
    %v5601 = vld [vmem:[#allocation12 + $0x88] sm:$0xff]
    %v5602 = vld [vmem:[#allocation12 + $0x90] sm:$0xff]
    %v5603 = vld [vmem:[#allocation12 + $0x98] sm:$0xff]
    %v5604 = vld [vmem:[#allocation12 + $0xa0] sm:$0xff]
    %v5605 = vld [vmem:[#allocation12 + $0xa8] sm:$0xff]
    %v5606 = vld [vmem:[#allocation12 + $0xb0] sm:$0xff]
    %v5607 = vld [vmem:[#allocation12 + $0xb8] sm:$0xff]
    %v5608 = vld [vmem:[#allocation12 + $0xc0] sm:$0xff]
    %v5609 = vld [vmem:[#allocation12 + $0xc8] sm:$0xff]
    %v5610 = vld [vmem:[#allocation12 + $0xd0] sm:$0xff]
    %v5611 = vld [vmem:[#allocation12 + $0xd8] sm:$0xff]
    %v5612 = vld [vmem:[#allocation12 + $0xe0] sm:$0xff]
    %v5613 = vld [vmem:[#allocation12 + $0xe8] sm:$0xff]
    %v5614 = vld [vmem:[#allocation12 + $0xf0] sm:$0xff]
    %v5615 = vld [vmem:[#allocation12 + $0xf8] sm:$0xff]
    %v5616 = vld [vmem:[#allocation12 + $0x100] sm:$0xff]
    %v5617 = vld [vmem:[#allocation12 + $0x108] sm:$0xff]
    %v5618 = vld [vmem:[#allocation12 + $0x110] sm:$0xff]
    %v5619 = vld [vmem:[#allocation12 + $0x118] sm:$0xff]
    %v5620 = vld [vmem:[#allocation12 + $0x120] sm:$0xff]
    %v5621 = vld [vmem:[#allocation12 + $0x128] sm:$0xff]
    %v5622 = vld [vmem:[#allocation12 + $0x130] sm:$0xff]
    %v5623 = vld [vmem:[#allocation12 + $0x138] sm:$0xff]
    %v5624 = vld [vmem:[#allocation12 + $0x140] sm:$0xff]
    %v5625 = vld [vmem:[#allocation12 + $0x148] sm:$0xff]
    %v5626 = vld [vmem:[#allocation12 + $0x150] sm:$0xff]
    %v5627 = vld [vmem:[#allocation12 + $0x158] sm:$0xff]
    %v5628 = vld [vmem:[#allocation12 + $0x160] sm:$0xff]
    %v5629 = vld [vmem:[#allocation12 + $0x168] sm:$0xff]
    %v5630 = vld [vmem:[#allocation12 + $0x170] sm:$0xff]
    %v5631 = vld [vmem:[#allocation12 + $0x178] sm:$0xff]
    %v5632 = vld [vmem:[#allocation12 + $0x180] sm:$0xff]
    %v5633 = vld [vmem:[#allocation12 + $0x188] sm:$0xff]
    %v5634 = vld [vmem:[#allocation12 + $0x190] sm:$0xff]
    %v5635 = vld [vmem:[#allocation12 + $0x198] sm:$0xff]
    %v5636 = vld [vmem:[#allocation12 + $0x1a0] sm:$0xff]
    %v5637 = vld [vmem:[#allocation12 + $0x1a8] sm:$0xff]
    %v5638 = vld [vmem:[#allocation12 + $0x1b0] sm:$0xff]
    %v5639 = vld [vmem:[#allocation12 + $0x1b8] sm:$0xff]
    %v5640 = vld [vmem:[#allocation12 + $0x1c0] sm:$0xff]
    %v5641 = vld [vmem:[#allocation12 + $0x1c8] sm:$0xff]
    %v5642 = vld [vmem:[#allocation12 + $0x1d0] sm:$0xff]
    %v5643 = vld [vmem:[#allocation12 + $0x1d8] sm:$0xff]
    %v5644 = vld [vmem:[#allocation12 + $0x1e0] sm:$0xff]
    %v5645 = vld [vmem:[#allocation12 + $0x1e8] sm:$0xff]
    %v5646 = vld [vmem:[#allocation12 + $0x1f0] sm:$0xff]
    %v5647 = vld [vmem:[#allocation12 + $0x1f8] sm:$0xff]
    %v5648 = vld [vmem:[#allocation14] sm:$0x3]
    %v5650 = vlaneseq
    %v5651 = vshrl.u32 %v5650, 7
    %v5652 = vsub.s32 0, %v5651
    %v5653 = vrot.slane %v5648, %v5652
    %v5654 = vlaneseq
    %v5655 = vshrl.u32 %v5654, 7
    %v5656 = vsub.s32 1, %v5655
    %v5657 = vrot.slane %v5648, %v5656
    %v5724 = vunpack.c.l.b16 %v5584
    %v5725 = vunpack.c.h.b16 %v5584
    %v5726 = vunpack.c.l.b16 %v5585
    %v5727 = vunpack.c.h.b16 %v5585
    %v5728 = vunpack.c.l.b16 %v5586
    %v5729 = vunpack.c.h.b16 %v5586
    %v5730 = vunpack.c.l.b16 %v5587
    %v5731 = vunpack.c.h.b16 %v5587
    %v5732 = vunpack.c.l.b16 %v5588
    %v5733 = vunpack.c.h.b16 %v5588
    %v5734 = vunpack.c.l.b16 %v5589
    %v5735 = vunpack.c.h.b16 %v5589
    %v5736 = vunpack.c.l.b16 %v5590
    %v5737 = vunpack.c.h.b16 %v5590
    %v5738 = vunpack.c.l.b16 %v5591
    %v5739 = vunpack.c.h.b16 %v5591
    %v5740 = vunpack.c.l.b16 %v5592
    %v5741 = vunpack.c.h.b16 %v5592
    %v5742 = vunpack.c.l.b16 %v5593
    %v5743 = vunpack.c.h.b16 %v5593
    %v5744 = vunpack.c.l.b16 %v5594
    %v5745 = vunpack.c.h.b16 %v5594
    %v5746 = vunpack.c.l.b16 %v5595
    %v5747 = vunpack.c.h.b16 %v5595
    %v5748 = vunpack.c.l.b16 %v5596
    %v5749 = vunpack.c.h.b16 %v5596
    %v5750 = vunpack.c.l.b16 %v5597
    %v5751 = vunpack.c.h.b16 %v5597
    %v5752 = vunpack.c.l.b16 %v5598
    %v5753 = vunpack.c.h.b16 %v5598
    %v5754 = vunpack.c.l.b16 %v5599
    %v5755 = vunpack.c.h.b16 %v5599
    %v5756 = vunpack.c.l.b16 %v5600
    %v5757 = vunpack.c.h.b16 %v5600
    %v5758 = vunpack.c.l.b16 %v5601
    %v5759 = vunpack.c.h.b16 %v5601
    %v5760 = vunpack.c.l.b16 %v5602
    %v5761 = vunpack.c.h.b16 %v5602
    %v5762 = vunpack.c.l.b16 %v5603
    %v5763 = vunpack.c.h.b16 %v5603
    %v5764 = vunpack.c.l.b16 %v5604
    %v5765 = vunpack.c.h.b16 %v5604
    %v5766 = vunpack.c.l.b16 %v5605
    %v5767 = vunpack.c.h.b16 %v5605
    %v5768 = vunpack.c.l.b16 %v5606
    %v5769 = vunpack.c.h.b16 %v5606
    %v5770 = vunpack.c.l.b16 %v5607
    %v5771 = vunpack.c.h.b16 %v5607
    %v5772 = vunpack.c.l.b16 %v5608
    %v5773 = vunpack.c.h.b16 %v5608
    %v5774 = vunpack.c.l.b16 %v5609
    %v5775 = vunpack.c.h.b16 %v5609
    %v5776 = vunpack.c.l.b16 %v5610
    %v5777 = vunpack.c.h.b16 %v5610
    %v5778 = vunpack.c.l.b16 %v5611
    %v5779 = vunpack.c.h.b16 %v5611
    %v5780 = vunpack.c.l.b16 %v5612
    %v5781 = vunpack.c.h.b16 %v5612
    %v5782 = vunpack.c.l.b16 %v5613
    %v5783 = vunpack.c.h.b16 %v5613
    %v5784 = vunpack.c.l.b16 %v5614
    %v5785 = vunpack.c.h.b16 %v5614
    %v5786 = vunpack.c.l.b16 %v5615
    %v5787 = vunpack.c.h.b16 %v5615
    %v5788 = vunpack.c.l.b16 %v5616
    %v5789 = vunpack.c.h.b16 %v5616
    %v5790 = vunpack.c.l.b16 %v5617
    %v5791 = vunpack.c.h.b16 %v5617
    %v5792 = vunpack.c.l.b16 %v5618
    %v5793 = vunpack.c.h.b16 %v5618
    %v5794 = vunpack.c.l.b16 %v5619
    %v5795 = vunpack.c.h.b16 %v5619
    %v5796 = vunpack.c.l.b16 %v5620
    %v5797 = vunpack.c.h.b16 %v5620
    %v5798 = vunpack.c.l.b16 %v5621
    %v5799 = vunpack.c.h.b16 %v5621
    %v5800 = vunpack.c.l.b16 %v5622
    %v5801 = vunpack.c.h.b16 %v5622
    %v5802 = vunpack.c.l.b16 %v5623
    %v5803 = vunpack.c.h.b16 %v5623
    %v5804 = vunpack.c.l.b16 %v5624
    %v5805 = vunpack.c.h.b16 %v5624
    %v5806 = vunpack.c.l.b16 %v5625
    %v5807 = vunpack.c.h.b16 %v5625
    %v5808 = vunpack.c.l.b16 %v5626
    %v5809 = vunpack.c.h.b16 %v5626
    %v5810 = vunpack.c.l.b16 %v5627
    %v5811 = vunpack.c.h.b16 %v5627
    %v5812 = vunpack.c.l.b16 %v5628
    %v5813 = vunpack.c.h.b16 %v5628
    %v5814 = vunpack.c.l.b16 %v5629
    %v5815 = vunpack.c.h.b16 %v5629
    %v5816 = vunpack.c.l.b16 %v5630
    %v5817 = vunpack.c.h.b16 %v5630
    %v5818 = vunpack.c.l.b16 %v5631
    %v5819 = vunpack.c.h.b16 %v5631
    %v5820 = vunpack.c.l.b16 %v5632
    %v5821 = vunpack.c.h.b16 %v5632
    %v5822 = vunpack.c.l.b16 %v5633
    %v5823 = vunpack.c.h.b16 %v5633
    %v5824 = vunpack.c.l.b16 %v5634
    %v5825 = vunpack.c.h.b16 %v5634
    %v5826 = vunpack.c.l.b16 %v5635
    %v5827 = vunpack.c.h.b16 %v5635
    %v5828 = vunpack.c.l.b16 %v5636
    %v5829 = vunpack.c.h.b16 %v5636
    %v5830 = vunpack.c.l.b16 %v5637
    %v5831 = vunpack.c.h.b16 %v5637
    %v5832 = vunpack.c.l.b16 %v5638
    %v5833 = vunpack.c.h.b16 %v5638
    %v5834 = vunpack.c.l.b16 %v5639
    %v5835 = vunpack.c.h.b16 %v5639
    %v5836 = vunpack.c.l.b16 %v5640
    %v5837 = vunpack.c.h.b16 %v5640
    %v5838 = vunpack.c.l.b16 %v5641
    %v5839 = vunpack.c.h.b16 %v5641
    %v5840 = vunpack.c.l.b16 %v5642
    %v5841 = vunpack.c.h.b16 %v5642
    %v5842 = vunpack.c.l.b16 %v5643
    %v5843 = vunpack.c.h.b16 %v5643
    %v5844 = vunpack.c.l.b16 %v5644
    %v5845 = vunpack.c.h.b16 %v5644
    %v5846 = vunpack.c.l.b16 %v5645
    %v5847 = vunpack.c.h.b16 %v5645
    %v5848 = vunpack.c.l.b16 %v5646
    %v5849 = vunpack.c.h.b16 %v5646
    %v5850 = vunpack.c.l.b16 %v5647
    %v5851 = vunpack.c.h.b16 %v5647
    %v5852 = vpack.c.b16 %v5726, %v5724
    %v5853 = vpack.c.b16 %v5727, %v5725
    %v5854 = vpack.c.b16 %v5730, %v5728
    %v5855 = vpack.c.b16 %v5731, %v5729
    %v5856 = vpack.c.b16 %v5734, %v5732
    %v5857 = vpack.c.b16 %v5735, %v5733
    %v5858 = vpack.c.b16 %v5738, %v5736
    %v5859 = vpack.c.b16 %v5739, %v5737
    %v5860 = vpack.c.b16 %v5742, %v5740
    %v5861 = vpack.c.b16 %v5743, %v5741
    %v5862 = vpack.c.b16 %v5746, %v5744
    %v5863 = vpack.c.b16 %v5747, %v5745
    %v5864 = vpack.c.b16 %v5750, %v5748
    %v5865 = vpack.c.b16 %v5751, %v5749
    %v5866 = vpack.c.b16 %v5754, %v5752
    %v5867 = vpack.c.b16 %v5755, %v5753
    %v5868 = vpack.c.b16 %v5758, %v5756
    %v5869 = vpack.c.b16 %v5759, %v5757
    %v5870 = vpack.c.b16 %v5762, %v5760
    %v5871 = vpack.c.b16 %v5763, %v5761
    %v5872 = vpack.c.b16 %v5766, %v5764
    %v5873 = vpack.c.b16 %v5767, %v5765
    %v5874 = vpack.c.b16 %v5770, %v5768
    %v5875 = vpack.c.b16 %v5771, %v5769
    %v5876 = vpack.c.b16 %v5774, %v5772
    %v5877 = vpack.c.b16 %v5775, %v5773
    %v5878 = vpack.c.b16 %v5778, %v5776
    %v5879 = vpack.c.b16 %v5779, %v5777
    %v5880 = vpack.c.b16 %v5782, %v5780
    %v5881 = vpack.c.b16 %v5783, %v5781
    %v5882 = vpack.c.b16 %v5786, %v5784
    %v5883 = vpack.c.b16 %v5787, %v5785
    %v5884 = vpack.c.b16 %v5790, %v5788
    %v5885 = vpack.c.b16 %v5791, %v5789
    %v5886 = vpack.c.b16 %v5794, %v5792
    %v5887 = vpack.c.b16 %v5795, %v5793
    %v5888 = vpack.c.b16 %v5798, %v5796
    %v5889 = vpack.c.b16 %v5799, %v5797
    %v5890 = vpack.c.b16 %v5802, %v5800
    %v5891 = vpack.c.b16 %v5803, %v5801
    %v5892 = vpack.c.b16 %v5806, %v5804
    %v5893 = vpack.c.b16 %v5807, %v5805
    %v5894 = vpack.c.b16 %v5810, %v5808
    %v5895 = vpack.c.b16 %v5811, %v5809
    %v5896 = vpack.c.b16 %v5814, %v5812
    %v5897 = vpack.c.b16 %v5815, %v5813
    %v5898 = vpack.c.b16 %v5818, %v5816
    %v5899 = vpack.c.b16 %v5819, %v5817
    %v5900 = vpack.c.b16 %v5822, %v5820
    %v5901 = vpack.c.b16 %v5823, %v5821
    %v5902 = vpack.c.b16 %v5826, %v5824
    %v5903 = vpack.c.b16 %v5827, %v5825
    %v5904 = vpack.c.b16 %v5830, %v5828
    %v5905 = vpack.c.b16 %v5831, %v5829
    %v5906 = vpack.c.b16 %v5834, %v5832
    %v5907 = vpack.c.b16 %v5835, %v5833
    %v5908 = vpack.c.b16 %v5838, %v5836
    %v5909 = vpack.c.b16 %v5839, %v5837
    %v5910 = vpack.c.b16 %v5842, %v5840
    %v5911 = vpack.c.b16 %v5843, %v5841
    %v5912 = vpack.c.b16 %v5846, %v5844
    %v5913 = vpack.c.b16 %v5847, %v5845
    %v5914 = vpack.c.b16 %v5850, %v5848
    %v5915 = vpack.c.b16 %v5851, %v5849
    %5980 = vmatprep.subr.bf16.mxu0 %v5853
    %5981 = vmatpush1.bf16.msra.mxu0 %v5852
    %5982 = vmatprep.subr.bf16.mxu0 %v5855
    %5983 = vmatpush1.bf16.msra.mxu0 %v5854
    %5984 = vmatprep.subr.bf16.mxu0 %v5857
    %5985 = vmatpush1.bf16.msra.mxu0 %v5856
    %5986 = vmatprep.subr.bf16.mxu0 %v5859
    %5987 = vmatpush1.bf16.msra.mxu0 %v5858
    %5988 = vmatprep.subr.bf16.mxu0 %v5861
    %5989 = vmatpush1.bf16.msra.mxu0 %v5860
    %5990 = vmatprep.subr.bf16.mxu0 %v5863
    %5991 = vmatpush1.bf16.msra.mxu0 %v5862
    %5992 = vmatprep.subr.bf16.mxu0 %v5865
    %5993 = vmatpush1.bf16.msra.mxu0 %v5864
    %5994 = vmatprep.subr.bf16.mxu0 %v5867
    %5995 = vmatpush1.bf16.msra.mxu0 %v5866
    %5996 = vmatprep.subr.bf16.mxu0 %v5869
    %5997 = vmatpush1.bf16.msra.mxu0 %v5868
    %5998 = vmatprep.subr.bf16.mxu0 %v5871
    %5999 = vmatpush1.bf16.msra.mxu0 %v5870
    %6000 = vmatprep.subr.bf16.mxu0 %v5873
    %6001 = vmatpush1.bf16.msra.mxu0 %v5872
    %6002 = vmatprep.subr.bf16.mxu0 %v5875
    %6003 = vmatpush1.bf16.msra.mxu0 %v5874
    %6004 = vmatprep.subr.bf16.mxu0 %v5877
    %6005 = vmatpush1.bf16.msra.mxu0 %v5876
    %6006 = vmatprep.subr.bf16.mxu0 %v5879
    %6007 = vmatpush1.bf16.msra.mxu0 %v5878
    %6008 = vmatprep.subr.bf16.mxu0 %v5881
    %6009 = vmatpush1.bf16.msra.mxu0 %v5880
    %6010 = vmatprep.subr.bf16.mxu0 %v5883
    %6011 = vmatpush1.bf16.msra.mxu0 %v5882
    %6012 = vmatprep.mubr.bf16.mxu0 %v5581
    %6013 = vmatmul.mubr.bf16.gmra.mrb[0].mxu0 %v5580
    %v6014 = vpop.f32.mrb[0].mxu0
    %v6015 = vadd.f32 %v5653, %v6014
    %v6016 = vpop.f32.mrb[0].mxu0
    %v6017 = vadd.f32 %v5657, %v6016
    %v6018 = vpop.f32.mrb[0].mxu0
    %v6019 = vadd.f32 %v5653, %v6018
    %v6020 = vpop.f32.mrb[0].mxu0
    %v6021 = vadd.f32 %v5657, %v6020
    %6022 = vdwg.mxu0
    %6023 = vmatprep.subr.bf16.mxu0 %v5885
    %6024 = vmatpush1.bf16.msra.mxu0 %v5884
    %6025 = vmatprep.subr.bf16.mxu0 %v5887
    %6026 = vmatpush1.bf16.msra.mxu0 %v5886
    %6027 = vmatprep.subr.bf16.mxu0 %v5889
    %6028 = vmatpush1.bf16.msra.mxu0 %v5888
    %6029 = vmatprep.subr.bf16.mxu0 %v5891
    %6030 = vmatpush1.bf16.msra.mxu0 %v5890
    %6031 = vmatprep.subr.bf16.mxu0 %v5893
    %6032 = vmatpush1.bf16.msra.mxu0 %v5892
    %6033 = vmatprep.subr.bf16.mxu0 %v5895
    %6034 = vmatpush1.bf16.msra.mxu0 %v5894
    %6035 = vmatprep.subr.bf16.mxu0 %v5897
    %6036 = vmatpush1.bf16.msra.mxu0 %v5896
    %6037 = vmatprep.subr.bf16.mxu0 %v5899
    %6038 = vmatpush1.bf16.msra.mxu0 %v5898
    %6039 = vmatprep.subr.bf16.mxu0 %v5901
    %6040 = vmatpush1.bf16.msra.mxu0 %v5900
    %6041 = vmatprep.subr.bf16.mxu0 %v5903
    %6042 = vmatpush1.bf16.msra.mxu0 %v5902
    %6043 = vmatprep.subr.bf16.mxu0 %v5905
    %6044 = vmatpush1.bf16.msra.mxu0 %v5904
    %6045 = vmatprep.subr.bf16.mxu0 %v5907
    %6046 = vmatpush1.bf16.msra.mxu0 %v5906
    %6047 = vmatprep.subr.bf16.mxu0 %v5909
    %6048 = vmatpush1.bf16.msra.mxu0 %v5908
    %6049 = vmatprep.subr.bf16.mxu0 %v5911
    %6050 = vmatpush1.bf16.msra.mxu0 %v5910
    %6051 = vmatprep.subr.bf16.mxu0 %v5913
    %6052 = vmatpush1.bf16.msra.mxu0 %v5912
    %6053 = vmatprep.subr.bf16.mxu0 %v5915
    %6054 = vmatpush1.bf16.msra.mxu0 %v5914
    %6055 = vmatprep.mubr.bf16.mxu0 %v5583
    %6056 = vmatmul.mubr.bf16.gmra.mrb[0].mxu0 %v5582
    %v6057 = vpop.f32.mrb[0].mxu0
    %v6058 = vadd.f32 %v6015, %v6057
    %v6059 = vpop.f32.mrb[0].mxu0
    %v6060 = vadd.f32 %v6017, %v6059
    %v6061 = vpop.f32.mrb[0].mxu0
    %v6062 = vadd.f32 %v6019, %v6061
    %v6063 = vpop.f32.mrb[0].mxu0
    %v6064 = vadd.f32 %v6021, %v6063
    %6065 = vdwg.mxu0
    %vm6066 = vcmp.gt.f32.partialorder %v6058, 0.0
    %vm6067 = vcmp.gt.f32.partialorder %v6060, 0.0
    %vm6068 = vcmp.gt.f32.partialorder %v6062, 0.0
    %vm6069 = vcmp.gt.f32.partialorder %v6064, 0.0
    %v6070 = vmul.f32 %v6058, 0.2
    %v6071 = vmul.f32 %v6060, 0.2
    %v6072 = vmul.f32 %v6062, 0.2
    %v6073 = vmul.f32 %v6064, 0.2
    %v6074 = vsel %vm6066, %v6058, %v6070
    %v6075 = vsel %vm6067, %v6060, %v6071
    %v6076 = vsel %vm6068, %v6062, %v6072
    %v6077 = vsel %vm6069, %v6064, %v6073
    %v6078 = vpack.c.bf16 %v6076, %v6074
    %v6079 = vpack.c.bf16 %v6077, %v6075
    %v6080 = vld [vmem:[#allocation15] sm:$0x3]
    %s6081 = sld [smem:[#allocation2]]
    %v6082 = vstv %s6081
    %v6085 = vunpack.c.l.s4 1966171168
    %v6086 = vunpack.c.0.s8 %v6085
    %v6087 = vlaneseq
    %v6088 = vshrl.u32 %v6087, 7
    %v6089 = vsub.s32 %v6086, %v6088
    %v6090 = vrot.slane %v6080, %v6089
    %v6091 = vcombine.high %v6090, %v6090
    %v6093 = vunpack.c.l.s4 1966171168
    %v6094 = vunpack.c.0.s8 %v6093
    %v6095 = vlaneseq
    %v6096 = vshrl.u32 %v6095, 7
    %v6097 = vsub.s32 %v6094, %v6096
    %v6098 = vrot.slane %v6090, %v6097
    %v6100 = vunpack.c.l.s4 1966171168
    %v6101 = vunpack.c.0.s8 %v6100
    %v6102 = vlaneseq
    %v6103 = vshrl.u32 %v6102, 7
    %v6104 = vsub.s32 %v6101, %v6103
    %v6105 = vrot.slane %v6091, %v6104
    %6108 = vmatprep.subr.bf16.mxu0 %v6079
    %6109 = vmatpush1.bf16.xpose.msra.mxu0 %v6078
    %6110 = vmatprep.subr.bf16.mxu0 0
    %6111 = vmatpush1.bf16.xpose.msra.mxu0 0
    %6112 = vmatprep.subr.bf16.mxu0 0
    %6113 = vmatpush1.bf16.xpose.msra.mxu0 0
    %6114 = vmatprep.subr.bf16.mxu0 0
    %6115 = vmatpush1.bf16.xpose.msra.mxu0 0
    %6116 = vmatprep.subr.bf16.mxu0 0
    %6117 = vmatpush1.bf16.xpose.msra.mxu0 0
    %6118 = vmatprep.subr.bf16.mxu0 0
    %6119 = vmatpush1.bf16.xpose.msra.mxu0 0
    %6120 = vmatprep.subr.bf16.mxu0 0
    %6121 = vmatpush1.bf16.xpose.msra.mxu0 0
    %6122 = vmatprep.subr.bf16.mxu0 0
    %6123 = vmatpush1.bf16.xpose.msra.mxu0 0
    %6124 = vmatprep.subr.bf16.mxu0 0
    %6125 = vmatpush1.bf16.xpose.msra.mxu0 0
    %6126 = vmatprep.subr.bf16.mxu0 0
    %6127 = vmatpush1.bf16.xpose.msra.mxu0 0
    %6128 = vmatprep.subr.bf16.mxu0 0
    %6129 = vmatpush1.bf16.xpose.msra.mxu0 0
    %6130 = vmatprep.subr.bf16.mxu0 0
    %6131 = vmatpush1.bf16.xpose.msra.mxu0 0
    %6132 = vmatprep.subr.bf16.mxu0 0
    %6133 = vmatpush1.bf16.xpose.msra.mxu0 0
    %6134 = vmatprep.subr.bf16.mxu0 0
    %6135 = vmatpush1.bf16.xpose.msra.mxu0 0
    %6136 = vmatprep.subr.bf16.mxu0 0
    %6137 = vmatpush1.bf16.xpose.msra.mxu0 0
    %6138 = vmatprep.subr.bf16.mxu0 0
    %6139 = vmatpush1.bf16.xpose.msra.mxu0 0
    %6140 = vmatprep.mubr.bf16.mxu0 %v6105
    %6141 = vmatmul.mubr.bf16.gmra.mrb[0].mxu0 %v6098
    %v6142 = vpop.f32.mrb[0].mxu0
    %v6143 = vadd.f32 %v6082, %v6142
    %v6144 = vpop.f32.mrb[0].mxu0
    %v6145 = vpop.f32.mrb[0].mxu0
    %v6146 = vpop.f32.mrb[0].mxu0
    %6147 = vdwg.mxu0
    %v6148 = vxor.u32 %v6143, 2147483648
    %v6149 = vmul.f32 %v6148, 1.442695
    %v6150 = vpow.pop %v6149
    %v6151 = vadd.f32 %v6150, 1.0
    %v6152 = vrcp.pop %v6151
    %v6153 = vmul.f32 1.0, %v6152
    %vm6154 = vcmask 122880
    %6155 = vst.msk [vmem:[#allocation17] sm:$0x1] %vm6154, %v6153
    // Predicated region
    $region70: #{tpu_custom_call.1} parent=1 // pred_check
      _
    $region71: #{tpu_custom_call.1} parent=1 // pred_check_branch
      %6157 = sbr.rel (0) target = $region73
    $region72: #{tpu_custom_call.1} parent=1 // pred_region
      %s6159 = ssub.s32 16, 16
      %6160 = vsyncadd [#allocation5], %s6159
      %s6162 = sshll.u32 [#allocation17], 4
      %s6163 = int_to_ptr.vmem [resolvable:$true] %s6162
      %6165 = dma.vmem_to_hbm [thread:$0]  %s6163, 16, %s9, [#allocation5]
    $region73: #{tpu_custom_call.1} parent=1 // pred_fallthru
      _
    // Predicated region
    $region74: #{tpu_custom_call.1} parent=1 // pred_check
      _
    $region75: #{tpu_custom_call.1} parent=1 // pred_check_branch
      %6167 = sbr.rel (0) target = $region77
    $region76: #{tpu_custom_call.1} parent=1 // pred_region
      %6168 = dma.done [#allocation5], 16
    $region77: #{tpu_custom_call.1} parent=1 // pred_fallthru
      _
    %6169 = vsyncpa [#allocation4], 1
    %6170 = vsyncpa [#allocation7], 1
    %6171 = vsyncpa [#allocation10], 1
    %6172 = vsyncpa [#allocation13], 1
    %6173 = vsyncpa [#allocation16], 1
    %6174 = vsyncpa [#allocation5], 1

</llo_original>
